<compile_context>
chip_gen: v7x
topology: tpu7x:2x2x1
jax: 0.10.0
libtpu: 0.0.40
codegen_flags: <defaults>
</compile_context>

<pallas_src>
import jax
import jax.numpy as jnp
from jax import lax
from jax.experimental import pallas as pl
from jax.experimental.pallas import tpu as pltpu

# ----------------------------- config ---------------------------------------
B = 2          # batch (sentences)
S = 8          # padded sequence length
H = 32         # hidden size
V = 64         # vocab size
D = 3          # number of domains (len(DOMAINS))
NH = 4         # attention heads
HD = H // NH   # head dim
FF = 4 * H     # FFN inner size
L = 2          # encoder layers
N = B * S      # total tokens
LN_EPS = 1e-12  # matches BERT config (below f32 resolution; documented, harmless)


def _layernorm(x, gamma, beta):
    mu = jnp.mean(x, axis=-1, keepdims=True)
    var = jnp.mean((x - mu) ** 2, axis=-1, keepdims=True)
    return (x - mu) * lax.rsqrt(var + LN_EPS) * gamma + beta


# -------------------- fused embedding + encoder kernel -----------------------
def fused_kernel(wid_ref, did_ref,                                 # SMEM (scalar prefetch)
                 bias_ref, wtab_ref, dtab_ref, pos_ref, embg_ref, embb_ref,
                 wqkv_ref, bqkv_ref, wo_ref, bo_ref, ln1g_ref, ln1b_ref,
                 w1_ref, b1_ref, w2_ref, b2_ref, ln2g_ref, ln2b_ref,
                 out_ref, emb_scr):
    b = pl.program_id(0)                                           # batch element

    # ---- inputs_embeds: word row-gather + dataset row + position, LayerNorm -
    for i in range(S):                                             # static unroll
        tok = wid_ref[b * S + i]                                   # SMEM scalar
        emb_scr[pl.ds(i, 1), :] = wtab_ref[pl.ds(tok, 1), :]       # (1, H) row gather
    drow = dtab_ref[pl.ds(did_ref[b], 1), :]                       # (1, H) dataset emb
    x = _layernorm(emb_scr[...] + drow + pos_ref[...],
                   embg_ref[...], embb_ref[...])                   # (S, H)

    bias = bias_ref[0]                                             # (1, S) pre-negated mask

    # ---------------------------- encoder stack ------------------------------
    for l in range(L):                                             # static layer loop
        # Fused QKV projection (scale already folded into the Q columns).
        qkv = jnp.dot(x, wqkv_ref[l],
                      preferred_element_type=jnp.float32) + bqkv_ref[l]   # (S, 3H)

        # Head-batched attention: stack per-head tiles on a LEADING axis and
        # contract with a single-batch-dim einsum (one softmax for all heads).
        qs = jnp.stack([qkv[:, h * HD:(h + 1) * HD] for h in range(NH)], axis=0)
        ks = jnp.stack([qkv[:, H + h * HD:H + (h + 1) * HD] for h in range(NH)], axis=0)
        vs = jnp.stack([qkv[:, 2 * H + h * HD:2 * H + (h + 1) * HD] for h in range(NH)],
                       axis=0)                                     # (NH, S, HD)

        s = jnp.einsum('hqd,hkd->hqk', qs, ks,
                       preferred_element_type=jnp.float32) + bias  # (NH, S, S)
        s = s - jnp.max(s, axis=-1, keepdims=True)
        p = jnp.exp(s)
        p = p * pl.reciprocal(jnp.sum(p, axis=-1, keepdims=True), approx=True)
        ctx = jnp.einsum('hqk,hkd->hqd', p, vs,
                         preferred_element_type=jnp.float32)       # (NH, S, HD)

        # Output projection accumulated per head (no lane-axis concatenate).
        attn = bo_ref[l]                                           # (1, H) bias
        for h in range(NH):
            attn = attn + jnp.dot(ctx[h], wo_ref[l, h],
                                  preferred_element_type=jnp.float32)

        h1 = _layernorm(x + attn, ln1g_ref[l], ln1b_ref[l])

        ff = jnp.dot(h1, w1_ref[l], preferred_element_type=jnp.float32) + b1_ref[l]
        ff = jax.nn.gelu(ff)
        ff = jnp.dot(ff, w2_ref[l], preferred_element_type=jnp.float32) + b2_ref[l]

        x = _layernorm(h1 + ff, ln2g_ref[l], ln2b_ref[l])

    out_ref[0] = x                                                 # (S, H) writeback


# ----------------------- parameter construction ------------------------------
def xavier(key, shape):
    fan_in, fan_out = shape[-2], shape[-1]
    limit = (6.0 / (fan_in + fan_out)) ** 0.5
    return jax.random.uniform(key, shape, jnp.float32, -limit, limit)


def make_params(key):
    ks = iter(jax.random.split(key, 64))
    word_tab = 0.02 * jax.random.normal(next(ks), (V, H), jnp.float32)
    # nn.Embedding(len(DOMAINS), hidden, padding_idx=pad_token_id, _weight=xavier)
    data_tab = xavier(next(ks), (D, H))
    data_tab = data_tab.at[0].set(0.0)                 # padding_idx row zeroed
    pos_tab = 0.02 * jax.random.normal(next(ks), (S, H), jnp.float32)
    emb_g = jnp.ones((1, H), jnp.float32)
    emb_b = jnp.zeros((1, H), jnp.float32)

    def layer():
        wq = xavier(next(ks), (H, H))
        wk = xavier(next(ks), (H, H))
        wv = xavier(next(ks), (H, H))
        wqkv = jnp.concatenate([wq, wk, wv], axis=1)    # (H, 3H)
        bqkv = jnp.zeros((1, 3 * H), jnp.float32)
        wo = xavier(next(ks), (H, H)).reshape(NH, HD, H)  # pre-split per head
        bo = jnp.zeros((1, H), jnp.float32)
        ln1g = jnp.ones((1, H), jnp.float32)
        ln1b = jnp.zeros((1, H), jnp.float32)
        w1 = xavier(next(ks), (H, FF))
        b1 = jnp.zeros((1, FF), jnp.float32)
        w2 = xavier(next(ks), (FF, H))
        b2 = jnp.zeros((1, H), jnp.float32)
        ln2g = jnp.ones((1, H), jnp.float32)
        ln2b = jnp.zeros((1, H), jnp.float32)
        return (wqkv, bqkv, wo, bo, ln1g, ln1b, w1, b1, w2, b2, ln2g, ln2b)

    layers = [layer() for _ in range(L)]
    stacked = tuple(jnp.stack(t) for t in zip(*layers))   # leading L axis
    return (word_tab, data_tab, pos_tab, emb_g, emb_b, stacked)


# ----------------------------- forward ---------------------------------------
def transformer_embeddings_forward(input_ids, attention_mask, domain_ids, params):
    """Mirrors TransformerEmbeddings.forward (dataset_embeddings branch).

    Returns (emb_pieces, attention_mask) — the last hidden state plus the mask
    (the tokenizer `encodings` object has no array equivalent).
    """
    word_tab, data_tab, pos_tab, emb_g, emb_b, stacked = params
    (wqkv, bqkv, wo, bo, ln1g, ln1b, w1, b1, w2, b2, ln2g, ln2b) = stacked

    # Hoisted grid-invariant work: fold 1/sqrt(HD) into the Q projection and
    # pre-negate the attention mask once.
    scale = 1.0 / (HD ** 0.5)
    wqkv = wqkv.at[:, :, :H].multiply(scale)
    bqkv = bqkv.at[:, :, :H].multiply(scale)
    neg_bias = (1.0 - attention_mask.astype(jnp.float32)).reshape(B, 1, S) * -1e9

    wid = input_ids.reshape(-1).astype(jnp.int32)          # (N,)  -> SMEM
    did = domain_ids.astype(jnp.int32)                     # (B,)  -> SMEM

    def const(shape):                      # whole array, same block every step
        nd = len(shape)
        return pl.BlockSpec(shape, lambda b, *_: (0,) * nd)

    def per_b(shape):                      # one block per batch element
        nd = len(shape)
        return pl.BlockSpec(shape, lambda b, *_: (b,) + (0,) * (nd - 1))

    in_specs = [
        per_b((1, 1, S)),                  # pre-negated attention-mask bias
        const((V, H)),                     # word embedding table
        const((D, H)),                     # dataset embedding table
        const((S, H)),                     # position embedding table
        const((1, H)), const((1, H)),      # embedding LayerNorm gamma/beta
        const((L, H, 3 * H)), const((L, 1, 3 * H)),        # wqkv, bqkv
        const((L, NH, HD, H)), const((L, 1, H)),           # wo (per head), bo
        const((L, 1, H)), const((L, 1, H)),                # ln1 gamma/beta
        const((L, H, FF)), const((L, 1, FF)),              # w1, b1
        const((L, FF, H)), const((L, 1, H)),               # w2, b2
        const((L, 1, H)), const((L, 1, H)),                # ln2 gamma/beta
    ]

    out = pl.pallas_call(
        fused_kernel,
        out_shape=jax.ShapeDtypeStruct((B, S, H), jnp.float32),
        grid_spec=pltpu.PrefetchScalarGridSpec(
            num_scalar_prefetch=2,                          # wid, did in SMEM
            grid=(B,),
            in_specs=in_specs,
            out_specs=per_b((1, S, H)),
            scratch_shapes=[pltpu.VMEM((S, H), jnp.float32)]),   # gather staging
        compiler_params=pltpu.CompilerParams(
            dimension_semantics=("parallel",)),             # 2 TCs on v7x
    )(wid, did, neg_bias, word_tab, data_tab, pos_tab, emb_g, emb_b,
      wqkv, bqkv, wo, bo, ln1g, ln1b, w1, b1, w2, b2, ln2g, ln2b)

    return out, attention_mask


if __name__ == "__main__":
    root = jax.random.PRNGKey(0)
    k_ids, k_params = jax.random.split(root)

    params = make_params(k_params)

    input_ids = jax.random.randint(k_ids, (B, S), 0, V, dtype=jnp.int32)
    attention_mask = jnp.ones((B, S), jnp.int32).at[1, 6:].set(0)   # pad tail
    domain_ids = jnp.array([0, 2], dtype=jnp.int32)

    emb_pieces, mask_out = transformer_embeddings_forward(
        input_ids, attention_mask, domain_ids, params)
    emb_pieces = jax.block_until_ready(emb_pieces)

    assert emb_pieces.shape == (B, S, H), emb_pieces.shape
    assert bool(jnp.all(jnp.isfinite(emb_pieces)))
    print("KERNEL_OK")
</pallas_src>

<mosaic_0001>
module attributes {stable_mosaic.version = 11 : i64} {
  func.func @fused_kernel(%arg0: i32, %arg1: memref<16xi32, #tpu.memory_space<smem>>, %arg2: memref<2xi32, #tpu.memory_space<smem>>, %arg3: memref<1x1x8xf32, #tpu.memory_space<vmem>>, %arg4: memref<64x32xf32, #tpu.memory_space<vmem>>, %arg5: memref<3x32xf32, #tpu.memory_space<vmem>>, %arg6: memref<8x32xf32, #tpu.memory_space<vmem>>, %arg7: memref<1x32xf32, #tpu.memory_space<vmem>>, %arg8: memref<1x32xf32, #tpu.memory_space<vmem>>, %arg9: memref<2x32x96xf32, #tpu.memory_space<vmem>>, %arg10: memref<2x1x96xf32, #tpu.memory_space<vmem>>, %arg11: memref<2x4x8x32xf32, #tpu.memory_space<vmem>>, %arg12: memref<2x1x32xf32, #tpu.memory_space<vmem>>, %arg13: memref<2x1x32xf32, #tpu.memory_space<vmem>>, %arg14: memref<2x1x32xf32, #tpu.memory_space<vmem>>, %arg15: memref<2x32x128xf32, #tpu.memory_space<vmem>>, %arg16: memref<2x1x128xf32, #tpu.memory_space<vmem>>, %arg17: memref<2x128x32xf32, #tpu.memory_space<vmem>>, %arg18: memref<2x1x32xf32, #tpu.memory_space<vmem>>, %arg19: memref<2x1x32xf32, #tpu.memory_space<vmem>>, %arg20: memref<2x1x32xf32, #tpu.memory_space<vmem>>, %arg21: memref<1x8x32xf32, #tpu.memory_space<vmem>>, %arg22: memref<8x32xf32, #tpu.memory_space<vmem>>) attributes {dimension_semantics = [#tpu.dimension_semantics<parallel>], iteration_bounds = array<i64: 2>, scalar_prefetch = 2 : i64, scratch_operands = 1 : i64, tpu.core_type = #tpu.core_type<tc>, window_params = [{transform_indices = @transform_0, window_bounds = array<i64: 1, 1, 8>}, {pipeline_mode = #tpu.pipeline_mode<synchronous>, transform_indices = @transform_1, window_bounds = array<i64: 64, 32>}, {pipeline_mode = #tpu.pipeline_mode<synchronous>, transform_indices = @transform_2, window_bounds = array<i64: 3, 32>}, {pipeline_mode = #tpu.pipeline_mode<synchronous>, transform_indices = @transform_3, window_bounds = array<i64: 8, 32>}, {pipeline_mode = #tpu.pipeline_mode<synchronous>, transform_indices = @transform_4, window_bounds = array<i64: 1, 32>}, {pipeline_mode = #tpu.pipeline_mode<synchronous>, transform_indices = @transform_5, window_bounds = array<i64: 1, 32>}, {pipeline_mode = #tpu.pipeline_mode<synchronous>, transform_indices = @transform_6, window_bounds = array<i64: 2, 32, 96>}, {pipeline_mode = #tpu.pipeline_mode<synchronous>, transform_indices = @transform_7, window_bounds = array<i64: 2, 1, 96>}, {pipeline_mode = #tpu.pipeline_mode<synchronous>, transform_indices = @transform_8, window_bounds = array<i64: 2, 4, 8, 32>}, {pipeline_mode = #tpu.pipeline_mode<synchronous>, transform_indices = @transform_9, window_bounds = array<i64: 2, 1, 32>}, {pipeline_mode = #tpu.pipeline_mode<synchronous>, transform_indices = @transform_10, window_bounds = array<i64: 2, 1, 32>}, {pipeline_mode = #tpu.pipeline_mode<synchronous>, transform_indices = @transform_11, window_bounds = array<i64: 2, 1, 32>}, {pipeline_mode = #tpu.pipeline_mode<synchronous>, transform_indices = @transform_12, window_bounds = array<i64: 2, 32, 128>}, {pipeline_mode = #tpu.pipeline_mode<synchronous>, transform_indices = @transform_13, window_bounds = array<i64: 2, 1, 128>}, {pipeline_mode = #tpu.pipeline_mode<synchronous>, transform_indices = @transform_14, window_bounds = array<i64: 2, 128, 32>}, {pipeline_mode = #tpu.pipeline_mode<synchronous>, transform_indices = @transform_15, window_bounds = array<i64: 2, 1, 32>}, {pipeline_mode = #tpu.pipeline_mode<synchronous>, transform_indices = @transform_16, window_bounds = array<i64: 2, 1, 32>}, {pipeline_mode = #tpu.pipeline_mode<synchronous>, transform_indices = @transform_17, window_bounds = array<i64: 2, 1, 32>}, {transform_indices = @transform_18, window_bounds = array<i64: 1, 8, 32>}]} {
    %c8_i32 = arith.constant 8 : i32
    %0 = arith.muli %arg0, %c8_i32 : i32
    %c0_i32 = arith.constant 0 : i32
    %1 = arith.addi %0, %c0_i32 : i32
    %2 = arith.index_cast %1 : i32 to index
    %3 = memref.load %arg1[%2] : memref<16xi32, #tpu.memory_space<smem>>
    %4 = arith.index_cast %3 : i32 to index
    %c0 = arith.constant 0 : index
    %5 = vector.load %arg4[%4, %c0] : memref<64x32xf32, #tpu.memory_space<vmem>>, vector<1x32xf32>
    %c0_0 = arith.constant 0 : index
    %c0_1 = arith.constant 0 : index
    %6 = vector.load %arg22[%c0_0, %c0_1] : memref<8x32xf32, #tpu.memory_space<vmem>>, vector<1x32xf32>
    tpu.vector_store %arg22[%c0_0, %c0_1], %5 {strides = array<i32>} : memref<8x32xf32, #tpu.memory_space<vmem>>, vector<1x32xf32>,
    %c8_i32_2 = arith.constant 8 : i32
    %7 = arith.muli %arg0, %c8_i32_2 : i32
    %c1_i32 = arith.constant 1 : i32
    %8 = arith.addi %7, %c1_i32 : i32
    %9 = arith.index_cast %8 : i32 to index
    %10 = memref.load %arg1[%9] : memref<16xi32, #tpu.memory_space<smem>>
    %11 = arith.index_cast %10 : i32 to index
    %c0_3 = arith.constant 0 : index
    %12 = vector.load %arg4[%11, %c0_3] : memref<64x32xf32, #tpu.memory_space<vmem>>, vector<1x32xf32>
    %c1 = arith.constant 1 : index
    %c0_4 = arith.constant 0 : index
    %13 = vector.load %arg22[%c1, %c0_4] : memref<8x32xf32, #tpu.memory_space<vmem>>, vector<1x32xf32>
    tpu.vector_store %arg22[%c1, %c0_4], %12 {strides = array<i32>} : memref<8x32xf32, #tpu.memory_space<vmem>>, vector<1x32xf32>,
    %c8_i32_5 = arith.constant 8 : i32
    %14 = arith.muli %arg0, %c8_i32_5 : i32
    %c2_i32 = arith.constant 2 : i32
    %15 = arith.addi %14, %c2_i32 : i32
    %16 = arith.index_cast %15 : i32 to index
    %17 = memref.load %arg1[%16] : memref<16xi32, #tpu.memory_space<smem>>
    %18 = arith.index_cast %17 : i32 to index
    %c0_6 = arith.constant 0 : index
    %19 = vector.load %arg4[%18, %c0_6] : memref<64x32xf32, #tpu.memory_space<vmem>>, vector<1x32xf32>
    %c2 = arith.constant 2 : index
    %c0_7 = arith.constant 0 : index
    %20 = vector.load %arg22[%c2, %c0_7] : memref<8x32xf32, #tpu.memory_space<vmem>>, vector<1x32xf32>
    tpu.vector_store %arg22[%c2, %c0_7], %19 {strides = array<i32>} : memref<8x32xf32, #tpu.memory_space<vmem>>, vector<1x32xf32>,
    %c8_i32_8 = arith.constant 8 : i32
    %21 = arith.muli %arg0, %c8_i32_8 : i32
    %c3_i32 = arith.constant 3 : i32
    %22 = arith.addi %21, %c3_i32 : i32
    %23 = arith.index_cast %22 : i32 to index
    %24 = memref.load %arg1[%23] : memref<16xi32, #tpu.memory_space<smem>>
    %25 = arith.index_cast %24 : i32 to index
    %c0_9 = arith.constant 0 : index
    %26 = vector.load %arg4[%25, %c0_9] : memref<64x32xf32, #tpu.memory_space<vmem>>, vector<1x32xf32>
    %c3 = arith.constant 3 : index
    %c0_10 = arith.constant 0 : index
    %27 = vector.load %arg22[%c3, %c0_10] : memref<8x32xf32, #tpu.memory_space<vmem>>, vector<1x32xf32>
    tpu.vector_store %arg22[%c3, %c0_10], %26 {strides = array<i32>} : memref<8x32xf32, #tpu.memory_space<vmem>>, vector<1x32xf32>,
    %c8_i32_11 = arith.constant 8 : i32
    %28 = arith.muli %arg0, %c8_i32_11 : i32
    %c4_i32 = arith.constant 4 : i32
    %29 = arith.addi %28, %c4_i32 : i32
    %30 = arith.index_cast %29 : i32 to index
    %31 = memref.load %arg1[%30] : memref<16xi32, #tpu.memory_space<smem>>
    %32 = arith.index_cast %31 : i32 to index
    %c0_12 = arith.constant 0 : index
    %33 = vector.load %arg4[%32, %c0_12] : memref<64x32xf32, #tpu.memory_space<vmem>>, vector<1x32xf32>
    %c4 = arith.constant 4 : index
    %c0_13 = arith.constant 0 : index
    %34 = vector.load %arg22[%c4, %c0_13] : memref<8x32xf32, #tpu.memory_space<vmem>>, vector<1x32xf32>
    tpu.vector_store %arg22[%c4, %c0_13], %33 {strides = array<i32>} : memref<8x32xf32, #tpu.memory_space<vmem>>, vector<1x32xf32>,
    %c8_i32_14 = arith.constant 8 : i32
    %35 = arith.muli %arg0, %c8_i32_14 : i32
    %c5_i32 = arith.constant 5 : i32
    %36 = arith.addi %35, %c5_i32 : i32
    %37 = arith.index_cast %36 : i32 to index
    %38 = memref.load %arg1[%37] : memref<16xi32, #tpu.memory_space<smem>>
    %39 = arith.index_cast %38 : i32 to index
    %c0_15 = arith.constant 0 : index
    %40 = vector.load %arg4[%39, %c0_15] : memref<64x32xf32, #tpu.memory_space<vmem>>, vector<1x32xf32>
    %c5 = arith.constant 5 : index
    %c0_16 = arith.constant 0 : index
    %41 = vector.load %arg22[%c5, %c0_16] : memref<8x32xf32, #tpu.memory_space<vmem>>, vector<1x32xf32>
    tpu.vector_store %arg22[%c5, %c0_16], %40 {strides = array<i32>} : memref<8x32xf32, #tpu.memory_space<vmem>>, vector<1x32xf32>,
    %c8_i32_17 = arith.constant 8 : i32
    %42 = arith.muli %arg0, %c8_i32_17 : i32
    %c6_i32 = arith.constant 6 : i32
    %43 = arith.addi %42, %c6_i32 : i32
    %44 = arith.index_cast %43 : i32 to index
    %45 = memref.load %arg1[%44] : memref<16xi32, #tpu.memory_space<smem>>
    %46 = arith.index_cast %45 : i32 to index
    %c0_18 = arith.constant 0 : index
    %47 = vector.load %arg4[%46, %c0_18] : memref<64x32xf32, #tpu.memory_space<vmem>>, vector<1x32xf32>
    %c6 = arith.constant 6 : index
    %c0_19 = arith.constant 0 : index
    %48 = vector.load %arg22[%c6, %c0_19] : memref<8x32xf32, #tpu.memory_space<vmem>>, vector<1x32xf32>
    tpu.vector_store %arg22[%c6, %c0_19], %47 {strides = array<i32>} : memref<8x32xf32, #tpu.memory_space<vmem>>, vector<1x32xf32>,
    %c8_i32_20 = arith.constant 8 : i32
    %49 = arith.muli %arg0, %c8_i32_20 : i32
    %c7_i32 = arith.constant 7 : i32
    %50 = arith.addi %49, %c7_i32 : i32
    %51 = arith.index_cast %50 : i32 to index
    %52 = memref.load %arg1[%51] : memref<16xi32, #tpu.memory_space<smem>>
    %53 = arith.index_cast %52 : i32 to index
    %c0_21 = arith.constant 0 : index
    %54 = vector.load %arg4[%53, %c0_21] : memref<64x32xf32, #tpu.memory_space<vmem>>, vector<1x32xf32>
    %c7 = arith.constant 7 : index
    %c0_22 = arith.constant 0 : index
    %55 = vector.load %arg22[%c7, %c0_22] : memref<8x32xf32, #tpu.memory_space<vmem>>, vector<1x32xf32>
    tpu.vector_store %arg22[%c7, %c0_22], %54 {strides = array<i32>} : memref<8x32xf32, #tpu.memory_space<vmem>>, vector<1x32xf32>,
    %56 = arith.index_cast %arg0 : i32 to index
    %57 = memref.load %arg2[%56] : memref<2xi32, #tpu.memory_space<smem>>
    %58 = arith.index_cast %57 : i32 to index
    %c0_23 = arith.constant 0 : index
    %59 = vector.load %arg5[%58, %c0_23] : memref<3x32xf32, #tpu.memory_space<vmem>>, vector<1x32xf32>
    %c0_24 = arith.constant 0 : index
    %c0_25 = arith.constant 0 : index
    %60 = vector.load %arg22[%c0_24, %c0_25] : memref<8x32xf32, #tpu.memory_space<vmem>>, vector<8x32xf32>
    %61 = vector.broadcast %59 : vector<1x32xf32> to vector<8x32xf32>
    %62 = arith.addf %60, %61 : vector<8x32xf32>
    %c0_26 = arith.constant 0 : index
    %c0_27 = arith.constant 0 : index
    %63 = vector.load %arg6[%c0_26, %c0_27] : memref<8x32xf32, #tpu.memory_space<vmem>>, vector<8x32xf32>
    %64 = arith.addf %62, %63 : vector<8x32xf32>
    %c0_28 = arith.constant 0 : index
    %c0_29 = arith.constant 0 : index
    %65 = vector.load %arg7[%c0_28, %c0_29] : memref<1x32xf32, #tpu.memory_space<vmem>>, vector<1x32xf32>
    %c0_30 = arith.constant 0 : index
    %c0_31 = arith.constant 0 : index
    %66 = vector.load %arg8[%c0_30, %c0_31] : memref<1x32xf32, #tpu.memory_space<vmem>>, vector<1x32xf32>
    %cst = arith.constant dense<0.000000e+00> : vector<8xf32>
    %67 = vector.multi_reduction <add>, %64, %cst [1] : vector<8x32xf32> to vector<8xf32>
    %68 = vector.shape_cast %67 : vector<8xf32> to vector<8x1xf32>
    %cst_32 = arith.constant 3.200000e+01 : f32
    %69 = vector.broadcast %cst_32 : f32 to vector<8x1xf32>
    %70 = arith.divf %68, %69 : vector<8x1xf32>
    %71 = vector.broadcast %70 : vector<8x1xf32> to vector<8x32xf32>
    %72 = arith.subf %64, %71 : vector<8x32xf32>
    %73 = arith.mulf %72, %72 : vector<8x32xf32>
    %cst_33 = arith.constant dense<0.000000e+00> : vector<8xf32>
    %74 = vector.multi_reduction <add>, %73, %cst_33 [1] : vector<8x32xf32> to vector<8xf32>
    %75 = vector.shape_cast %74 : vector<8xf32> to vector<8x1xf32>
    %cst_34 = arith.constant 3.200000e+01 : f32
    %76 = vector.broadcast %cst_34 : f32 to vector<8x1xf32>
    %77 = arith.divf %75, %76 : vector<8x1xf32>
    %78 = vector.broadcast %70 : vector<8x1xf32> to vector<8x32xf32>
    %79 = arith.subf %64, %78 : vector<8x32xf32>
    %cst_35 = arith.constant 9.99999996E-13 : f32
    %80 = vector.broadcast %cst_35 : f32 to vector<8x1xf32>
    %81 = arith.addf %77, %80 : vector<8x1xf32>
    %82 = math.rsqrt %81 : vector<8x1xf32>
    %83 = vector.broadcast %82 : vector<8x1xf32> to vector<8x32xf32>
    %84 = arith.mulf %79, %83 : vector<8x32xf32>
    %85 = vector.broadcast %65 : vector<1x32xf32> to vector<8x32xf32>
    %86 = arith.mulf %84, %85 : vector<8x32xf32>
    %87 = vector.broadcast %66 : vector<1x32xf32> to vector<8x32xf32>
    %88 = arith.addf %86, %87 : vector<8x32xf32>
    %c0_36 = arith.constant 0 : index
    %c0_37 = arith.constant 0 : index
    %c0_38 = arith.constant 0 : index
    %89 = vector.load %arg3[%c0_36, %c0_37, %c0_38] : memref<1x1x8xf32, #tpu.memory_space<vmem>>, vector<1x1x8xf32>
    %90 = vector.shape_cast %89 : vector<1x1x8xf32> to vector<1x8xf32>
    %c0_39 = arith.constant 0 : index
    %c0_40 = arith.constant 0 : index
    %c0_41 = arith.constant 0 : index
    %91 = vector.load %arg9[%c0_39, %c0_40, %c0_41] : memref<2x32x96xf32, #tpu.memory_space<vmem>>, vector<1x32x96xf32>
    %92 = vector.shape_cast %91 : vector<1x32x96xf32> to vector<32x96xf32>
    %cst_42 = arith.constant dense<0.000000e+00> : vector<8x96xf32>
    %93 = tpu.matmul %88, %92, %cst_42 {dimension_numbers = #tpu.dot_dimension_numbers<[1], [0], [0], [1], [0, 0, 1, 1], [], []>} : vector<8x32xf32>, vector<32x96xf32>, vector<8x96xf32> -> vector<8x96xf32>
    %c0_43 = arith.constant 0 : index
    %c0_44 = arith.constant 0 : index
    %c0_45 = arith.constant 0 : index
    %94 = vector.load %arg10[%c0_43, %c0_44, %c0_45] : memref<2x1x96xf32, #tpu.memory_space<vmem>>, vector<1x1x96xf32>
    %95 = vector.shape_cast %94 : vector<1x1x96xf32> to vector<1x96xf32>
    %96 = vector.broadcast %95 : vector<1x96xf32> to vector<8x96xf32>
    %97 = arith.addf %93, %96 : vector<8x96xf32>
    %98 = vector.extract_strided_slice %97 {offsets = [0, 0], sizes = [8, 8], strides = [1, 1]} : vector<8x96xf32> to vector<8x8xf32>
    %99 = vector.extract_strided_slice %97 {offsets = [0, 8], sizes = [8, 8], strides = [1, 1]} : vector<8x96xf32> to vector<8x8xf32>
    %100 = vector.extract_strided_slice %97 {offsets = [0, 16], sizes = [8, 8], strides = [1, 1]} : vector<8x96xf32> to vector<8x8xf32>
    %101 = vector.extract_strided_slice %97 {offsets = [0, 24], sizes = [8, 8], strides = [1, 1]} : vector<8x96xf32> to vector<8x8xf32>
    %102 = vector.shape_cast %98 : vector<8x8xf32> to vector<1x8x8xf32>
    %103 = vector.shape_cast %99 : vector<8x8xf32> to vector<1x8x8xf32>
    %104 = vector.shape_cast %100 : vector<8x8xf32> to vector<1x8x8xf32>
    %105 = vector.shape_cast %101 : vector<8x8xf32> to vector<1x8x8xf32>
    %106 = tpu.concatenate %102, %103, %104, %105 in 0 : vector<1x8x8xf32>, vector<1x8x8xf32>, vector<1x8x8xf32>, vector<1x8x8xf32> -> vector<4x8x8xf32>
    %107 = vector.extract_strided_slice %97 {offsets = [0, 32], sizes = [8, 8], strides = [1, 1]} : vector<8x96xf32> to vector<8x8xf32>
    %108 = vector.extract_strided_slice %97 {offsets = [0, 40], sizes = [8, 8], strides = [1, 1]} : vector<8x96xf32> to vector<8x8xf32>
    %109 = vector.extract_strided_slice %97 {offsets = [0, 48], sizes = [8, 8], strides = [1, 1]} : vector<8x96xf32> to vector<8x8xf32>
    %110 = vector.extract_strided_slice %97 {offsets = [0, 56], sizes = [8, 8], strides = [1, 1]} : vector<8x96xf32> to vector<8x8xf32>
    %111 = vector.shape_cast %107 : vector<8x8xf32> to vector<1x8x8xf32>
    %112 = vector.shape_cast %108 : vector<8x8xf32> to vector<1x8x8xf32>
    %113 = vector.shape_cast %109 : vector<8x8xf32> to vector<1x8x8xf32>
    %114 = vector.shape_cast %110 : vector<8x8xf32> to vector<1x8x8xf32>
    %115 = tpu.concatenate %111, %112, %113, %114 in 0 : vector<1x8x8xf32>, vector<1x8x8xf32>, vector<1x8x8xf32>, vector<1x8x8xf32> -> vector<4x8x8xf32>
    %116 = vector.extract_strided_slice %97 {offsets = [0, 64], sizes = [8, 8], strides = [1, 1]} : vector<8x96xf32> to vector<8x8xf32>
    %117 = vector.extract_strided_slice %97 {offsets = [0, 72], sizes = [8, 8], strides = [1, 1]} : vector<8x96xf32> to vector<8x8xf32>
    %118 = vector.extract_strided_slice %97 {offsets = [0, 80], sizes = [8, 8], strides = [1, 1]} : vector<8x96xf32> to vector<8x8xf32>
    %119 = vector.extract_strided_slice %97 {offsets = [0, 88], sizes = [8, 8], strides = [1, 1]} : vector<8x96xf32> to vector<8x8xf32>
    %120 = vector.shape_cast %116 : vector<8x8xf32> to vector<1x8x8xf32>
    %121 = vector.shape_cast %117 : vector<8x8xf32> to vector<1x8x8xf32>
    %122 = vector.shape_cast %118 : vector<8x8xf32> to vector<1x8x8xf32>
    %123 = vector.shape_cast %119 : vector<8x8xf32> to vector<1x8x8xf32>
    %124 = tpu.concatenate %120, %121, %122, %123 in 0 : vector<1x8x8xf32>, vector<1x8x8xf32>, vector<1x8x8xf32>, vector<1x8x8xf32> -> vector<4x8x8xf32>
    "tpu.trace_start"() <{level = 10 : i32, message = "hqd,hkd->hqk"}> : () -> ()
    %cst_46 = arith.constant dense<0.000000e+00> : vector<4x8x8xf32>
    %125 = tpu.matmul %106, %115, %cst_46 {dimension_numbers = #tpu.dot_dimension_numbers<[2], [2], [1], [1], [0, 0, 0, 1, 1, 1], [0], [0]>} : vector<4x8x8xf32>, vector<4x8x8xf32>, vector<4x8x8xf32> -> vector<4x8x8xf32>
    "tpu.trace_stop"() : () -> ()
    %126 = vector.shape_cast %90 : vector<1x8xf32> to vector<1x1x8xf32>
    %127 = vector.broadcast %126 : vector<1x1x8xf32> to vector<4x8x8xf32>
    %128 = arith.addf %125, %127 : vector<4x8x8xf32>
    %cst_47 = arith.constant dense<0xFF800000> : vector<4x8xf32>
    %129 = vector.multi_reduction <maximumf>, %128, %cst_47 [2] : vector<4x8x8xf32> to vector<4x8xf32>
    %130 = vector.shape_cast %129 : vector<4x8xf32> to vector<4x8x1xf32>
    %131 = vector.broadcast %130 : vector<4x8x1xf32> to vector<4x8x8xf32>
    %132 = arith.subf %128, %131 : vector<4x8x8xf32>
    %133 = math.exp %132 : vector<4x8x8xf32>
    %cst_48 = arith.constant dense<0.000000e+00> : vector<4x8xf32>
    %134 = vector.multi_reduction <add>, %133, %cst_48 [2] : vector<4x8x8xf32> to vector<4x8xf32>
    %135 = vector.shape_cast %134 : vector<4x8xf32> to vector<4x8x1xf32>
    %136 = tpu.reciprocal %135 {approx = true} : vector<4x8x1xf32> -> vector<4x8x1xf32>
    %137 = vector.broadcast %136 : vector<4x8x1xf32> to vector<4x8x8xf32>
    %138 = arith.mulf %133, %137 : vector<4x8x8xf32>
    "tpu.trace_start"() <{level = 10 : i32, message = "hqk,hkd->hqd"}> : () -> ()
    %cst_49 = arith.constant dense<0.000000e+00> : vector<4x8x8xf32>
    %139 = tpu.matmul %138, %124, %cst_49 {dimension_numbers = #tpu.dot_dimension_numbers<[2], [1], [1], [2], [0, 0, 0, 1, 1, 2], [0], [0]>} : vector<4x8x8xf32>, vector<4x8x8xf32>, vector<4x8x8xf32> -> vector<4x8x8xf32>
    "tpu.trace_stop"() : () -> ()
    %c0_50 = arith.constant 0 : index
    %c0_51 = arith.constant 0 : index
    %c0_52 = arith.constant 0 : index
    %140 = vector.load %arg12[%c0_50, %c0_51, %c0_52] : memref<2x1x32xf32, #tpu.memory_space<vmem>>, vector<1x1x32xf32>
    %141 = vector.shape_cast %140 : vector<1x1x32xf32> to vector<1x32xf32>
    %142 = vector.extract_strided_slice %139 {offsets = [0, 0, 0], sizes = [1, 8, 8], strides = [1, 1, 1]} : vector<4x8x8xf32> to vector<1x8x8xf32>
    %143 = vector.shape_cast %142 : vector<1x8x8xf32> to vector<8x8xf32>
    %c0_53 = arith.constant 0 : index
    %c0_54 = arith.constant 0 : index
    %c0_55 = arith.constant 0 : index
    %c0_56 = arith.constant 0 : index
    %144 = vector.load %arg11[%c0_53, %c0_54, %c0_55, %c0_56] : memref<2x4x8x32xf32, #tpu.memory_space<vmem>>, vector<1x1x8x32xf32>
    %145 = vector.shape_cast %144 : vector<1x1x8x32xf32> to vector<8x32xf32>
    %cst_57 = arith.constant dense<0.000000e+00> : vector<8x32xf32>
    %146 = tpu.matmul %143, %145, %cst_57 {dimension_numbers = #tpu.dot_dimension_numbers<[1], [0], [0], [1], [0, 0, 1, 1], [], []>} : vector<8x8xf32>, vector<8x32xf32>, vector<8x32xf32> -> vector<8x32xf32>
    %147 = vector.broadcast %141 : vector<1x32xf32> to vector<8x32xf32>
    %148 = arith.addf %147, %146 : vector<8x32xf32>
    %149 = vector.extract_strided_slice %139 {offsets = [1, 0, 0], sizes = [1, 8, 8], strides = [1, 1, 1]} : vector<4x8x8xf32> to vector<1x8x8xf32>
    %150 = vector.shape_cast %149 : vector<1x8x8xf32> to vector<8x8xf32>
    %c0_58 = arith.constant 0 : index
    %c1_59 = arith.constant 1 : index
    %c0_60 = arith.constant 0 : index
    %c0_61 = arith.constant 0 : index
    %151 = vector.load %arg11[%c0_58, %c1_59, %c0_60, %c0_61] : memref<2x4x8x32xf32, #tpu.memory_space<vmem>>, vector<1x1x8x32xf32>
    %152 = vector.shape_cast %151 : vector<1x1x8x32xf32> to vector<8x32xf32>
    %cst_62 = arith.constant dense<0.000000e+00> : vector<8x32xf32>
    %153 = tpu.matmul %150, %152, %cst_62 {dimension_numbers = #tpu.dot_dimension_numbers<[1], [0], [0], [1], [0, 0, 1, 1], [], []>} : vector<8x8xf32>, vector<8x32xf32>, vector<8x32xf32> -> vector<8x32xf32>
    %154 = arith.addf %148, %153 : vector<8x32xf32>
    %155 = vector.extract_strided_slice %139 {offsets = [2, 0, 0], sizes = [1, 8, 8], strides = [1, 1, 1]} : vector<4x8x8xf32> to vector<1x8x8xf32>
    %156 = vector.shape_cast %155 : vector<1x8x8xf32> to vector<8x8xf32>
    %c0_63 = arith.constant 0 : index
    %c2_64 = arith.constant 2 : index
    %c0_65 = arith.constant 0 : index
    %c0_66 = arith.constant 0 : index
    %157 = vector.load %arg11[%c0_63, %c2_64, %c0_65, %c0_66] : memref<2x4x8x32xf32, #tpu.memory_space<vmem>>, vector<1x1x8x32xf32>
    %158 = vector.shape_cast %157 : vector<1x1x8x32xf32> to vector<8x32xf32>
    %cst_67 = arith.constant dense<0.000000e+00> : vector<8x32xf32>
    %159 = tpu.matmul %156, %158, %cst_67 {dimension_numbers = #tpu.dot_dimension_numbers<[1], [0], [0], [1], [0, 0, 1, 1], [], []>} : vector<8x8xf32>, vector<8x32xf32>, vector<8x32xf32> -> vector<8x32xf32>
    %160 = arith.addf %154, %159 : vector<8x32xf32>
    %161 = vector.extract_strided_slice %139 {offsets = [3, 0, 0], sizes = [1, 8, 8], strides = [1, 1, 1]} : vector<4x8x8xf32> to vector<1x8x8xf32>
    %162 = vector.shape_cast %161 : vector<1x8x8xf32> to vector<8x8xf32>
    %c0_68 = arith.constant 0 : index
    %c3_69 = arith.constant 3 : index
    %c0_70 = arith.constant 0 : index
    %c0_71 = arith.constant 0 : index
    %163 = vector.load %arg11[%c0_68, %c3_69, %c0_70, %c0_71] : memref<2x4x8x32xf32, #tpu.memory_space<vmem>>, vector<1x1x8x32xf32>
    %164 = vector.shape_cast %163 : vector<1x1x8x32xf32> to vector<8x32xf32>
    %cst_72 = arith.constant dense<0.000000e+00> : vector<8x32xf32>
    %165 = tpu.matmul %162, %164, %cst_72 {dimension_numbers = #tpu.dot_dimension_numbers<[1], [0], [0], [1], [0, 0, 1, 1], [], []>} : vector<8x8xf32>, vector<8x32xf32>, vector<8x32xf32> -> vector<8x32xf32>
    %166 = arith.addf %160, %165 : vector<8x32xf32>
    %167 = arith.addf %88, %166 : vector<8x32xf32>
    %c0_73 = arith.constant 0 : index
    %c0_74 = arith.constant 0 : index
    %c0_75 = arith.constant 0 : index
    %168 = vector.load %arg13[%c0_73, %c0_74, %c0_75] : memref<2x1x32xf32, #tpu.memory_space<vmem>>, vector<1x1x32xf32>
    %169 = vector.shape_cast %168 : vector<1x1x32xf32> to vector<1x32xf32>
    %c0_76 = arith.constant 0 : index
    %c0_77 = arith.constant 0 : index
    %c0_78 = arith.constant 0 : index
    %170 = vector.load %arg14[%c0_76, %c0_77, %c0_78] : memref<2x1x32xf32, #tpu.memory_space<vmem>>, vector<1x1x32xf32>
    %171 = vector.shape_cast %170 : vector<1x1x32xf32> to vector<1x32xf32>
    %cst_79 = arith.constant dense<0.000000e+00> : vector<8xf32>
    %172 = vector.multi_reduction <add>, %167, %cst_79 [1] : vector<8x32xf32> to vector<8xf32>
    %173 = vector.shape_cast %172 : vector<8xf32> to vector<8x1xf32>
    %cst_80 = arith.constant 3.200000e+01 : f32
    %174 = vector.broadcast %cst_80 : f32 to vector<8x1xf32>
    %175 = arith.divf %173, %174 : vector<8x1xf32>
    %176 = vector.broadcast %175 : vector<8x1xf32> to vector<8x32xf32>
    %177 = arith.subf %167, %176 : vector<8x32xf32>
    %178 = arith.mulf %177, %177 : vector<8x32xf32>
    %cst_81 = arith.constant dense<0.000000e+00> : vector<8xf32>
    %179 = vector.multi_reduction <add>, %178, %cst_81 [1] : vector<8x32xf32> to vector<8xf32>
    %180 = vector.shape_cast %179 : vector<8xf32> to vector<8x1xf32>
    %cst_82 = arith.constant 3.200000e+01 : f32
    %181 = vector.broadcast %cst_82 : f32 to vector<8x1xf32>
    %182 = arith.divf %180, %181 : vector<8x1xf32>
    %183 = vector.broadcast %175 : vector<8x1xf32> to vector<8x32xf32>
    %184 = arith.subf %167, %183 : vector<8x32xf32>
    %cst_83 = arith.constant 9.99999996E-13 : f32
    %185 = vector.broadcast %cst_83 : f32 to vector<8x1xf32>
    %186 = arith.addf %182, %185 : vector<8x1xf32>
    %187 = math.rsqrt %186 : vector<8x1xf32>
    %188 = vector.broadcast %187 : vector<8x1xf32> to vector<8x32xf32>
    %189 = arith.mulf %184, %188 : vector<8x32xf32>
    %190 = vector.broadcast %169 : vector<1x32xf32> to vector<8x32xf32>
    %191 = arith.mulf %189, %190 : vector<8x32xf32>
    %192 = vector.broadcast %171 : vector<1x32xf32> to vector<8x32xf32>
    %193 = arith.addf %191, %192 : vector<8x32xf32>
    %c0_84 = arith.constant 0 : index
    %c0_85 = arith.constant 0 : index
    %c0_86 = arith.constant 0 : index
    %194 = vector.load %arg15[%c0_84, %c0_85, %c0_86] : memref<2x32x128xf32, #tpu.memory_space<vmem>>, vector<1x32x128xf32>
    %195 = vector.shape_cast %194 : vector<1x32x128xf32> to vector<32x128xf32>
    %cst_87 = arith.constant dense<0.000000e+00> : vector<8x128xf32>
    %196 = tpu.matmul %193, %195, %cst_87 {dimension_numbers = #tpu.dot_dimension_numbers<[1], [0], [0], [1], [0, 0, 1, 1], [], []>} : vector<8x32xf32>, vector<32x128xf32>, vector<8x128xf32> -> vector<8x128xf32>
    %c0_88 = arith.constant 0 : index
    %c0_89 = arith.constant 0 : index
    %c0_90 = arith.constant 0 : index
    %197 = vector.load %arg16[%c0_88, %c0_89, %c0_90] : memref<2x1x128xf32, #tpu.memory_space<vmem>>, vector<1x1x128xf32>
    %198 = vector.shape_cast %197 : vector<1x1x128xf32> to vector<1x128xf32>
    %199 = vector.broadcast %198 : vector<1x128xf32> to vector<8x128xf32>
    %200 = arith.addf %196, %199 : vector<8x128xf32>
    %201 = arith.mulf %200, %200 : vector<8x128xf32>
    %202 = arith.mulf %200, %201 : vector<8x128xf32>
    %cst_91 = arith.constant 4.471500e-02 : f32
    %203 = vector.broadcast %cst_91 : f32 to vector<8x128xf32>
    %204 = arith.mulf %203, %202 : vector<8x128xf32>
    %205 = arith.addf %200, %204 : vector<8x128xf32>
    %cst_92 = arith.constant 0.797884583 : f32
    %206 = vector.broadcast %cst_92 : f32 to vector<8x128xf32>
    %207 = arith.mulf %206, %205 : vector<8x128xf32>
    %208 = math.tanh %207 : vector<8x128xf32>
    %cst_93 = arith.constant 1.000000e+00 : f32
    %209 = vector.broadcast %cst_93 : f32 to vector<8x128xf32>
    %210 = arith.addf %209, %208 : vector<8x128xf32>
    %cst_94 = arith.constant 5.000000e-01 : f32
    %211 = vector.broadcast %cst_94 : f32 to vector<8x128xf32>
    %212 = arith.mulf %211, %210 : vector<8x128xf32>
    %213 = arith.mulf %200, %212 : vector<8x128xf32>
    %c0_95 = arith.constant 0 : index
    %c0_96 = arith.constant 0 : index
    %c0_97 = arith.constant 0 : index
    %214 = vector.load %arg17[%c0_95, %c0_96, %c0_97] : memref<2x128x32xf32, #tpu.memory_space<vmem>>, vector<1x128x32xf32>
    %215 = vector.shape_cast %214 : vector<1x128x32xf32> to vector<128x32xf32>
    %cst_98 = arith.constant dense<0.000000e+00> : vector<8x32xf32>
    %216 = tpu.matmul %213, %215, %cst_98 {dimension_numbers = #tpu.dot_dimension_numbers<[1], [0], [0], [1], [0, 0, 1, 1], [], []>} : vector<8x128xf32>, vector<128x32xf32>, vector<8x32xf32> -> vector<8x32xf32>
    %c0_99 = arith.constant 0 : index
    %c0_100 = arith.constant 0 : index
    %c0_101 = arith.constant 0 : index
    %217 = vector.load %arg18[%c0_99, %c0_100, %c0_101] : memref<2x1x32xf32, #tpu.memory_space<vmem>>, vector<1x1x32xf32>
    %218 = vector.shape_cast %217 : vector<1x1x32xf32> to vector<1x32xf32>
    %219 = vector.broadcast %218 : vector<1x32xf32> to vector<8x32xf32>
    %220 = arith.addf %216, %219 : vector<8x32xf32>
    %221 = arith.addf %193, %220 : vector<8x32xf32>
    %c0_102 = arith.constant 0 : index
    %c0_103 = arith.constant 0 : index
    %c0_104 = arith.constant 0 : index
    %222 = vector.load %arg19[%c0_102, %c0_103, %c0_104] : memref<2x1x32xf32, #tpu.memory_space<vmem>>, vector<1x1x32xf32>
    %223 = vector.shape_cast %222 : vector<1x1x32xf32> to vector<1x32xf32>
    %c0_105 = arith.constant 0 : index
    %c0_106 = arith.constant 0 : index
    %c0_107 = arith.constant 0 : index
    %224 = vector.load %arg20[%c0_105, %c0_106, %c0_107] : memref<2x1x32xf32, #tpu.memory_space<vmem>>, vector<1x1x32xf32>
    %225 = vector.shape_cast %224 : vector<1x1x32xf32> to vector<1x32xf32>
    %cst_108 = arith.constant dense<0.000000e+00> : vector<8xf32>
    %226 = vector.multi_reduction <add>, %221, %cst_108 [1] : vector<8x32xf32> to vector<8xf32>
    %227 = vector.shape_cast %226 : vector<8xf32> to vector<8x1xf32>
    %cst_109 = arith.constant 3.200000e+01 : f32
    %228 = vector.broadcast %cst_109 : f32 to vector<8x1xf32>
    %229 = arith.divf %227, %228 : vector<8x1xf32>
    %230 = vector.broadcast %229 : vector<8x1xf32> to vector<8x32xf32>
    %231 = arith.subf %221, %230 : vector<8x32xf32>
    %232 = arith.mulf %231, %231 : vector<8x32xf32>
    %cst_110 = arith.constant dense<0.000000e+00> : vector<8xf32>
    %233 = vector.multi_reduction <add>, %232, %cst_110 [1] : vector<8x32xf32> to vector<8xf32>
    %234 = vector.shape_cast %233 : vector<8xf32> to vector<8x1xf32>
    %cst_111 = arith.constant 3.200000e+01 : f32
    %235 = vector.broadcast %cst_111 : f32 to vector<8x1xf32>
    %236 = arith.divf %234, %235 : vector<8x1xf32>
    %237 = vector.broadcast %229 : vector<8x1xf32> to vector<8x32xf32>
    %238 = arith.subf %221, %237 : vector<8x32xf32>
    %cst_112 = arith.constant 9.99999996E-13 : f32
    %239 = vector.broadcast %cst_112 : f32 to vector<8x1xf32>
    %240 = arith.addf %236, %239 : vector<8x1xf32>
    %241 = math.rsqrt %240 : vector<8x1xf32>
    %242 = vector.broadcast %241 : vector<8x1xf32> to vector<8x32xf32>
    %243 = arith.mulf %238, %242 : vector<8x32xf32>
    %244 = vector.broadcast %223 : vector<1x32xf32> to vector<8x32xf32>
    %245 = arith.mulf %243, %244 : vector<8x32xf32>
    %246 = vector.broadcast %225 : vector<1x32xf32> to vector<8x32xf32>
    %247 = arith.addf %245, %246 : vector<8x32xf32>
    %c1_113 = arith.constant 1 : index
    %c0_114 = arith.constant 0 : index
    %c0_115 = arith.constant 0 : index
    %248 = vector.load %arg9[%c1_113, %c0_114, %c0_115] : memref<2x32x96xf32, #tpu.memory_space<vmem>>, vector<1x32x96xf32>
    %249 = vector.shape_cast %248 : vector<1x32x96xf32> to vector<32x96xf32>
    %cst_116 = arith.constant dense<0.000000e+00> : vector<8x96xf32>
    %250 = tpu.matmul %247, %249, %cst_116 {dimension_numbers = #tpu.dot_dimension_numbers<[1], [0], [0], [1], [0, 0, 1, 1], [], []>} : vector<8x32xf32>, vector<32x96xf32>, vector<8x96xf32> -> vector<8x96xf32>
    %c1_117 = arith.constant 1 : index
    %c0_118 = arith.constant 0 : index
    %c0_119 = arith.constant 0 : index
    %251 = vector.load %arg10[%c1_117, %c0_118, %c0_119] : memref<2x1x96xf32, #tpu.memory_space<vmem>>, vector<1x1x96xf32>
    %252 = vector.shape_cast %251 : vector<1x1x96xf32> to vector<1x96xf32>
    %253 = vector.broadcast %252 : vector<1x96xf32> to vector<8x96xf32>
    %254 = arith.addf %250, %253 : vector<8x96xf32>
    %255 = vector.extract_strided_slice %254 {offsets = [0, 0], sizes = [8, 8], strides = [1, 1]} : vector<8x96xf32> to vector<8x8xf32>
    %256 = vector.extract_strided_slice %254 {offsets = [0, 8], sizes = [8, 8], strides = [1, 1]} : vector<8x96xf32> to vector<8x8xf32>
    %257 = vector.extract_strided_slice %254 {offsets = [0, 16], sizes = [8, 8], strides = [1, 1]} : vector<8x96xf32> to vector<8x8xf32>
    %258 = vector.extract_strided_slice %254 {offsets = [0, 24], sizes = [8, 8], strides = [1, 1]} : vector<8x96xf32> to vector<8x8xf32>
    %259 = vector.shape_cast %255 : vector<8x8xf32> to vector<1x8x8xf32>
    %260 = vector.shape_cast %256 : vector<8x8xf32> to vector<1x8x8xf32>
    %261 = vector.shape_cast %257 : vector<8x8xf32> to vector<1x8x8xf32>
    %262 = vector.shape_cast %258 : vector<8x8xf32> to vector<1x8x8xf32>
    %263 = tpu.concatenate %259, %260, %261, %262 in 0 : vector<1x8x8xf32>, vector<1x8x8xf32>, vector<1x8x8xf32>, vector<1x8x8xf32> -> vector<4x8x8xf32>
    %264 = vector.extract_strided_slice %254 {offsets = [0, 32], sizes = [8, 8], strides = [1, 1]} : vector<8x96xf32> to vector<8x8xf32>
    %265 = vector.extract_strided_slice %254 {offsets = [0, 40], sizes = [8, 8], strides = [1, 1]} : vector<8x96xf32> to vector<8x8xf32>
    %266 = vector.extract_strided_slice %254 {offsets = [0, 48], sizes = [8, 8], strides = [1, 1]} : vector<8x96xf32> to vector<8x8xf32>
    %267 = vector.extract_strided_slice %254 {offsets = [0, 56], sizes = [8, 8], strides = [1, 1]} : vector<8x96xf32> to vector<8x8xf32>
    %268 = vector.shape_cast %264 : vector<8x8xf32> to vector<1x8x8xf32>
    %269 = vector.shape_cast %265 : vector<8x8xf32> to vector<1x8x8xf32>
    %270 = vector.shape_cast %266 : vector<8x8xf32> to vector<1x8x8xf32>
    %271 = vector.shape_cast %267 : vector<8x8xf32> to vector<1x8x8xf32>
    %272 = tpu.concatenate %268, %269, %270, %271 in 0 : vector<1x8x8xf32>, vector<1x8x8xf32>, vector<1x8x8xf32>, vector<1x8x8xf32> -> vector<4x8x8xf32>
    %273 = vector.extract_strided_slice %254 {offsets = [0, 64], sizes = [8, 8], strides = [1, 1]} : vector<8x96xf32> to vector<8x8xf32>
    %274 = vector.extract_strided_slice %254 {offsets = [0, 72], sizes = [8, 8], strides = [1, 1]} : vector<8x96xf32> to vector<8x8xf32>
    %275 = vector.extract_strided_slice %254 {offsets = [0, 80], sizes = [8, 8], strides = [1, 1]} : vector<8x96xf32> to vector<8x8xf32>
    %276 = vector.extract_strided_slice %254 {offsets = [0, 88], sizes = [8, 8], strides = [1, 1]} : vector<8x96xf32> to vector<8x8xf32>
    %277 = vector.shape_cast %273 : vector<8x8xf32> to vector<1x8x8xf32>
    %278 = vector.shape_cast %274 : vector<8x8xf32> to vector<1x8x8xf32>
    %279 = vector.shape_cast %275 : vector<8x8xf32> to vector<1x8x8xf32>
    %280 = vector.shape_cast %276 : vector<8x8xf32> to vector<1x8x8xf32>
    %281 = tpu.concatenate %277, %278, %279, %280 in 0 : vector<1x8x8xf32>, vector<1x8x8xf32>, vector<1x8x8xf32>, vector<1x8x8xf32> -> vector<4x8x8xf32>
    "tpu.trace_start"() <{level = 10 : i32, message = "hqd,hkd->hqk"}> : () -> ()
    %cst_120 = arith.constant dense<0.000000e+00> : vector<4x8x8xf32>
    %282 = tpu.matmul %263, %272, %cst_120 {dimension_numbers = #tpu.dot_dimension_numbers<[2], [2], [1], [1], [0, 0, 0, 1, 1, 1], [0], [0]>} : vector<4x8x8xf32>, vector<4x8x8xf32>, vector<4x8x8xf32> -> vector<4x8x8xf32>
    "tpu.trace_stop"() : () -> ()
    %283 = vector.shape_cast %90 : vector<1x8xf32> to vector<1x1x8xf32>
    %284 = vector.broadcast %283 : vector<1x1x8xf32> to vector<4x8x8xf32>
    %285 = arith.addf %282, %284 : vector<4x8x8xf32>
    %cst_121 = arith.constant dense<0xFF800000> : vector<4x8xf32>
    %286 = vector.multi_reduction <maximumf>, %285, %cst_121 [2] : vector<4x8x8xf32> to vector<4x8xf32>
    %287 = vector.shape_cast %286 : vector<4x8xf32> to vector<4x8x1xf32>
    %288 = vector.broadcast %287 : vector<4x8x1xf32> to vector<4x8x8xf32>
    %289 = arith.subf %285, %288 : vector<4x8x8xf32>
    %290 = math.exp %289 : vector<4x8x8xf32>
    %cst_122 = arith.constant dense<0.000000e+00> : vector<4x8xf32>
    %291 = vector.multi_reduction <add>, %290, %cst_122 [2] : vector<4x8x8xf32> to vector<4x8xf32>
    %292 = vector.shape_cast %291 : vector<4x8xf32> to vector<4x8x1xf32>
    %293 = tpu.reciprocal %292 {approx = true} : vector<4x8x1xf32> -> vector<4x8x1xf32>
    %294 = vector.broadcast %293 : vector<4x8x1xf32> to vector<4x8x8xf32>
    %295 = arith.mulf %290, %294 : vector<4x8x8xf32>
    "tpu.trace_start"() <{level = 10 : i32, message = "hqk,hkd->hqd"}> : () -> ()
    %cst_123 = arith.constant dense<0.000000e+00> : vector<4x8x8xf32>
    %296 = tpu.matmul %295, %281, %cst_123 {dimension_numbers = #tpu.dot_dimension_numbers<[2], [1], [1], [2], [0, 0, 0, 1, 1, 2], [0], [0]>} : vector<4x8x8xf32>, vector<4x8x8xf32>, vector<4x8x8xf32> -> vector<4x8x8xf32>
    "tpu.trace_stop"() : () -> ()
    %c1_124 = arith.constant 1 : index
    %c0_125 = arith.constant 0 : index
    %c0_126 = arith.constant 0 : index
    %297 = vector.load %arg12[%c1_124, %c0_125, %c0_126] : memref<2x1x32xf32, #tpu.memory_space<vmem>>, vector<1x1x32xf32>
    %298 = vector.shape_cast %297 : vector<1x1x32xf32> to vector<1x32xf32>
    %299 = vector.extract_strided_slice %296 {offsets = [0, 0, 0], sizes = [1, 8, 8], strides = [1, 1, 1]} : vector<4x8x8xf32> to vector<1x8x8xf32>
    %300 = vector.shape_cast %299 : vector<1x8x8xf32> to vector<8x8xf32>
    %c1_127 = arith.constant 1 : index
    %c0_128 = arith.constant 0 : index
    %c0_129 = arith.constant 0 : index
    %c0_130 = arith.constant 0 : index
    %301 = vector.load %arg11[%c1_127, %c0_128, %c0_129, %c0_130] : memref<2x4x8x32xf32, #tpu.memory_space<vmem>>, vector<1x1x8x32xf32>
    %302 = vector.shape_cast %301 : vector<1x1x8x32xf32> to vector<8x32xf32>
    %cst_131 = arith.constant dense<0.000000e+00> : vector<8x32xf32>
    %303 = tpu.matmul %300, %302, %cst_131 {dimension_numbers = #tpu.dot_dimension_numbers<[1], [0], [0], [1], [0, 0, 1, 1], [], []>} : vector<8x8xf32>, vector<8x32xf32>, vector<8x32xf32> -> vector<8x32xf32>
    %304 = vector.broadcast %298 : vector<1x32xf32> to vector<8x32xf32>
    %305 = arith.addf %304, %303 : vector<8x32xf32>
    %306 = vector.extract_strided_slice %296 {offsets = [1, 0, 0], sizes = [1, 8, 8], strides = [1, 1, 1]} : vector<4x8x8xf32> to vector<1x8x8xf32>
    %307 = vector.shape_cast %306 : vector<1x8x8xf32> to vector<8x8xf32>
    %c1_132 = arith.constant 1 : index
    %c1_133 = arith.constant 1 : index
    %c0_134 = arith.constant 0 : index
    %c0_135 = arith.constant 0 : index
    %308 = vector.load %arg11[%c1_132, %c1_133, %c0_134, %c0_135] : memref<2x4x8x32xf32, #tpu.memory_space<vmem>>, vector<1x1x8x32xf32>
    %309 = vector.shape_cast %308 : vector<1x1x8x32xf32> to vector<8x32xf32>
    %cst_136 = arith.constant dense<0.000000e+00> : vector<8x32xf32>
    %310 = tpu.matmul %307, %309, %cst_136 {dimension_numbers = #tpu.dot_dimension_numbers<[1], [0], [0], [1], [0, 0, 1, 1], [], []>} : vector<8x8xf32>, vector<8x32xf32>, vector<8x32xf32> -> vector<8x32xf32>
    %311 = arith.addf %305, %310 : vector<8x32xf32>
    %312 = vector.extract_strided_slice %296 {offsets = [2, 0, 0], sizes = [1, 8, 8], strides = [1, 1, 1]} : vector<4x8x8xf32> to vector<1x8x8xf32>
    %313 = vector.shape_cast %312 : vector<1x8x8xf32> to vector<8x8xf32>
    %c1_137 = arith.constant 1 : index
    %c2_138 = arith.constant 2 : index
    %c0_139 = arith.constant 0 : index
    %c0_140 = arith.constant 0 : index
    %314 = vector.load %arg11[%c1_137, %c2_138, %c0_139, %c0_140] : memref<2x4x8x32xf32, #tpu.memory_space<vmem>>, vector<1x1x8x32xf32>
    %315 = vector.shape_cast %314 : vector<1x1x8x32xf32> to vector<8x32xf32>
    %cst_141 = arith.constant dense<0.000000e+00> : vector<8x32xf32>
    %316 = tpu.matmul %313, %315, %cst_141 {dimension_numbers = #tpu.dot_dimension_numbers<[1], [0], [0], [1], [0, 0, 1, 1], [], []>} : vector<8x8xf32>, vector<8x32xf32>, vector<8x32xf32> -> vector<8x32xf32>
    %317 = arith.addf %311, %316 : vector<8x32xf32>
    %318 = vector.extract_strided_slice %296 {offsets = [3, 0, 0], sizes = [1, 8, 8], strides = [1, 1, 1]} : vector<4x8x8xf32> to vector<1x8x8xf32>
    %319 = vector.shape_cast %318 : vector<1x8x8xf32> to vector<8x8xf32>
    %c1_142 = arith.constant 1 : index
    %c3_143 = arith.constant 3 : index
    %c0_144 = arith.constant 0 : index
    %c0_145 = arith.constant 0 : index
    %320 = vector.load %arg11[%c1_142, %c3_143, %c0_144, %c0_145] : memref<2x4x8x32xf32, #tpu.memory_space<vmem>>, vector<1x1x8x32xf32>
    %321 = vector.shape_cast %320 : vector<1x1x8x32xf32> to vector<8x32xf32>
    %cst_146 = arith.constant dense<0.000000e+00> : vector<8x32xf32>
    %322 = tpu.matmul %319, %321, %cst_146 {dimension_numbers = #tpu.dot_dimension_numbers<[1], [0], [0], [1], [0, 0, 1, 1], [], []>} : vector<8x8xf32>, vector<8x32xf32>, vector<8x32xf32> -> vector<8x32xf32>
    %323 = arith.addf %317, %322 : vector<8x32xf32>
    %324 = arith.addf %247, %323 : vector<8x32xf32>
    %c1_147 = arith.constant 1 : index
    %c0_148 = arith.constant 0 : index
    %c0_149 = arith.constant 0 : index
    %325 = vector.load %arg13[%c1_147, %c0_148, %c0_149] : memref<2x1x32xf32, #tpu.memory_space<vmem>>, vector<1x1x32xf32>
    %326 = vector.shape_cast %325 : vector<1x1x32xf32> to vector<1x32xf32>
    %c1_150 = arith.constant 1 : index
    %c0_151 = arith.constant 0 : index
    %c0_152 = arith.constant 0 : index
    %327 = vector.load %arg14[%c1_150, %c0_151, %c0_152] : memref<2x1x32xf32, #tpu.memory_space<vmem>>, vector<1x1x32xf32>
    %328 = vector.shape_cast %327 : vector<1x1x32xf32> to vector<1x32xf32>
    %cst_153 = arith.constant dense<0.000000e+00> : vector<8xf32>
    %329 = vector.multi_reduction <add>, %324, %cst_153 [1] : vector<8x32xf32> to vector<8xf32>
    %330 = vector.shape_cast %329 : vector<8xf32> to vector<8x1xf32>
    %cst_154 = arith.constant 3.200000e+01 : f32
    %331 = vector.broadcast %cst_154 : f32 to vector<8x1xf32>
    %332 = arith.divf %330, %331 : vector<8x1xf32>
    %333 = vector.broadcast %332 : vector<8x1xf32> to vector<8x32xf32>
    %334 = arith.subf %324, %333 : vector<8x32xf32>
    %335 = arith.mulf %334, %334 : vector<8x32xf32>
    %cst_155 = arith.constant dense<0.000000e+00> : vector<8xf32>
    %336 = vector.multi_reduction <add>, %335, %cst_155 [1] : vector<8x32xf32> to vector<8xf32>
    %337 = vector.shape_cast %336 : vector<8xf32> to vector<8x1xf32>
    %cst_156 = arith.constant 3.200000e+01 : f32
    %338 = vector.broadcast %cst_156 : f32 to vector<8x1xf32>
    %339 = arith.divf %337, %338 : vector<8x1xf32>
    %340 = vector.broadcast %332 : vector<8x1xf32> to vector<8x32xf32>
    %341 = arith.subf %324, %340 : vector<8x32xf32>
    %cst_157 = arith.constant 9.99999996E-13 : f32
    %342 = vector.broadcast %cst_157 : f32 to vector<8x1xf32>
    %343 = arith.addf %339, %342 : vector<8x1xf32>
    %344 = math.rsqrt %343 : vector<8x1xf32>
    %345 = vector.broadcast %344 : vector<8x1xf32> to vector<8x32xf32>
    %346 = arith.mulf %341, %345 : vector<8x32xf32>
    %347 = vector.broadcast %326 : vector<1x32xf32> to vector<8x32xf32>
    %348 = arith.mulf %346, %347 : vector<8x32xf32>
    %349 = vector.broadcast %328 : vector<1x32xf32> to vector<8x32xf32>
    %350 = arith.addf %348, %349 : vector<8x32xf32>
    %c1_158 = arith.constant 1 : index
    %c0_159 = arith.constant 0 : index
    %c0_160 = arith.constant 0 : index
    %351 = vector.load %arg15[%c1_158, %c0_159, %c0_160] : memref<2x32x128xf32, #tpu.memory_space<vmem>>, vector<1x32x128xf32>
    %352 = vector.shape_cast %351 : vector<1x32x128xf32> to vector<32x128xf32>
    %cst_161 = arith.constant dense<0.000000e+00> : vector<8x128xf32>
    %353 = tpu.matmul %350, %352, %cst_161 {dimension_numbers = #tpu.dot_dimension_numbers<[1], [0], [0], [1], [0, 0, 1, 1], [], []>} : vector<8x32xf32>, vector<32x128xf32>, vector<8x128xf32> -> vector<8x128xf32>
    %c1_162 = arith.constant 1 : index
    %c0_163 = arith.constant 0 : index
    %c0_164 = arith.constant 0 : index
    %354 = vector.load %arg16[%c1_162, %c0_163, %c0_164] : memref<2x1x128xf32, #tpu.memory_space<vmem>>, vector<1x1x128xf32>
    %355 = vector.shape_cast %354 : vector<1x1x128xf32> to vector<1x128xf32>
    %356 = vector.broadcast %355 : vector<1x128xf32> to vector<8x128xf32>
    %357 = arith.addf %353, %356 : vector<8x128xf32>
    %358 = arith.mulf %357, %357 : vector<8x128xf32>
    %359 = arith.mulf %357, %358 : vector<8x128xf32>
    %cst_165 = arith.constant 4.471500e-02 : f32
    %360 = vector.broadcast %cst_165 : f32 to vector<8x128xf32>
    %361 = arith.mulf %360, %359 : vector<8x128xf32>
    %362 = arith.addf %357, %361 : vector<8x128xf32>
    %cst_166 = arith.constant 0.797884583 : f32
    %363 = vector.broadcast %cst_166 : f32 to vector<8x128xf32>
    %364 = arith.mulf %363, %362 : vector<8x128xf32>
    %365 = math.tanh %364 : vector<8x128xf32>
    %cst_167 = arith.constant 1.000000e+00 : f32
    %366 = vector.broadcast %cst_167 : f32 to vector<8x128xf32>
    %367 = arith.addf %366, %365 : vector<8x128xf32>
    %cst_168 = arith.constant 5.000000e-01 : f32
    %368 = vector.broadcast %cst_168 : f32 to vector<8x128xf32>
    %369 = arith.mulf %368, %367 : vector<8x128xf32>
    %370 = arith.mulf %357, %369 : vector<8x128xf32>
    %c1_169 = arith.constant 1 : index
    %c0_170 = arith.constant 0 : index
    %c0_171 = arith.constant 0 : index
    %371 = vector.load %arg17[%c1_169, %c0_170, %c0_171] : memref<2x128x32xf32, #tpu.memory_space<vmem>>, vector<1x128x32xf32>
    %372 = vector.shape_cast %371 : vector<1x128x32xf32> to vector<128x32xf32>
    %cst_172 = arith.constant dense<0.000000e+00> : vector<8x32xf32>
    %373 = tpu.matmul %370, %372, %cst_172 {dimension_numbers = #tpu.dot_dimension_numbers<[1], [0], [0], [1], [0, 0, 1, 1], [], []>} : vector<8x128xf32>, vector<128x32xf32>, vector<8x32xf32> -> vector<8x32xf32>
    %c1_173 = arith.constant 1 : index
    %c0_174 = arith.constant 0 : index
    %c0_175 = arith.constant 0 : index
    %374 = vector.load %arg18[%c1_173, %c0_174, %c0_175] : memref<2x1x32xf32, #tpu.memory_space<vmem>>, vector<1x1x32xf32>
    %375 = vector.shape_cast %374 : vector<1x1x32xf32> to vector<1x32xf32>
    %376 = vector.broadcast %375 : vector<1x32xf32> to vector<8x32xf32>
    %377 = arith.addf %373, %376 : vector<8x32xf32>
    %378 = arith.addf %350, %377 : vector<8x32xf32>
    %c1_176 = arith.constant 1 : index
    %c0_177 = arith.constant 0 : index
    %c0_178 = arith.constant 0 : index
    %379 = vector.load %arg19[%c1_176, %c0_177, %c0_178] : memref<2x1x32xf32, #tpu.memory_space<vmem>>, vector<1x1x32xf32>
    %380 = vector.shape_cast %379 : vector<1x1x32xf32> to vector<1x32xf32>
    %c1_179 = arith.constant 1 : index
    %c0_180 = arith.constant 0 : index
    %c0_181 = arith.constant 0 : index
    %381 = vector.load %arg20[%c1_179, %c0_180, %c0_181] : memref<2x1x32xf32, #tpu.memory_space<vmem>>, vector<1x1x32xf32>
    %382 = vector.shape_cast %381 : vector<1x1x32xf32> to vector<1x32xf32>
    %cst_182 = arith.constant dense<0.000000e+00> : vector<8xf32>
    %383 = vector.multi_reduction <add>, %378, %cst_182 [1] : vector<8x32xf32> to vector<8xf32>
    %384 = vector.shape_cast %383 : vector<8xf32> to vector<8x1xf32>
    %cst_183 = arith.constant 3.200000e+01 : f32
    %385 = vector.broadcast %cst_183 : f32 to vector<8x1xf32>
    %386 = arith.divf %384, %385 : vector<8x1xf32>
    %387 = vector.broadcast %386 : vector<8x1xf32> to vector<8x32xf32>
    %388 = arith.subf %378, %387 : vector<8x32xf32>
    %389 = arith.mulf %388, %388 : vector<8x32xf32>
    %cst_184 = arith.constant dense<0.000000e+00> : vector<8xf32>
    %390 = vector.multi_reduction <add>, %389, %cst_184 [1] : vector<8x32xf32> to vector<8xf32>
    %391 = vector.shape_cast %390 : vector<8xf32> to vector<8x1xf32>
    %cst_185 = arith.constant 3.200000e+01 : f32
    %392 = vector.broadcast %cst_185 : f32 to vector<8x1xf32>
    %393 = arith.divf %391, %392 : vector<8x1xf32>
    %394 = vector.broadcast %386 : vector<8x1xf32> to vector<8x32xf32>
    %395 = arith.subf %378, %394 : vector<8x32xf32>
    %cst_186 = arith.constant 9.99999996E-13 : f32
    %396 = vector.broadcast %cst_186 : f32 to vector<8x1xf32>
    %397 = arith.addf %393, %396 : vector<8x1xf32>
    %398 = math.rsqrt %397 : vector<8x1xf32>
    %399 = vector.broadcast %398 : vector<8x1xf32> to vector<8x32xf32>
    %400 = arith.mulf %395, %399 : vector<8x32xf32>
    %401 = vector.broadcast %380 : vector<1x32xf32> to vector<8x32xf32>
    %402 = arith.mulf %400, %401 : vector<8x32xf32>
    %403 = vector.broadcast %382 : vector<1x32xf32> to vector<8x32xf32>
    %404 = arith.addf %402, %403 : vector<8x32xf32>
    %c0_187 = arith.constant 0 : index
    %c0_188 = arith.constant 0 : index
    %c0_189 = arith.constant 0 : index
    %405 = vector.load %arg21[%c0_187, %c0_188, %c0_189] : memref<1x8x32xf32, #tpu.memory_space<vmem>>, vector<1x8x32xf32>
    %406 = vector.shape_cast %405 : vector<1x8x32xf32> to vector<8x32xf32>
    %407 = vector.shape_cast %404 : vector<8x32xf32> to vector<1x8x32xf32>
    tpu.vector_store %arg21[%c0_187, %c0_188, %c0_189], %407 {strides = array<i32>} : memref<1x8x32xf32, #tpu.memory_space<vmem>>, vector<1x8x32xf32>,
    return
  }
  func.func @transform_0(%arg0: i32, %arg1: memref<16xi32, #tpu.memory_space<smem>>, %arg2: memref<2xi32, #tpu.memory_space<smem>>) -> (i32, i32, i32) {
    %c0_i32 = arith.constant 0 : i32
    %c0_i32_0 = arith.constant 0 : i32
    %c0_i32_1 = arith.constant 0 : i32
    return %arg0, %c0_i32, %c0_i32_0 : i32, i32, i32
  }
  func.func @transform_1(%arg0: i32, %arg1: memref<16xi32, #tpu.memory_space<smem>>, %arg2: memref<2xi32, #tpu.memory_space<smem>>) -> (i32, i32) {
    %c0_i32 = arith.constant 0 : i32
    %c0_i32_0 = arith.constant 0 : i32
    %c0_i32_1 = arith.constant 0 : i32
    return %c0_i32, %c0_i32_0 : i32, i32
  }
  func.func @transform_2(%arg0: i32, %arg1: memref<16xi32, #tpu.memory_space<smem>>, %arg2: memref<2xi32, #tpu.memory_space<smem>>) -> (i32, i32) {
    %c0_i32 = arith.constant 0 : i32
    %c0_i32_0 = arith.constant 0 : i32
    %c0_i32_1 = arith.constant 0 : i32
    return %c0_i32, %c0_i32_0 : i32, i32
  }
  func.func @transform_3(%arg0: i32, %arg1: memref<16xi32, #tpu.memory_space<smem>>, %arg2: memref<2xi32, #tpu.memory_space<smem>>) -> (i32, i32) {
    %c0_i32 = arith.constant 0 : i32
    %c0_i32_0 = arith.constant 0 : i32
    %c0_i32_1 = arith.constant 0 : i32
    return %c0_i32, %c0_i32_0 : i32, i32
  }
  func.func @transform_4(%arg0: i32, %arg1: memref<16xi32, #tpu.memory_space<smem>>, %arg2: memref<2xi32, #tpu.memory_space<smem>>) -> (i32, i32) {
    %c0_i32 = arith.constant 0 : i32
    %c0_i32_0 = arith.constant 0 : i32
    %c0_i32_1 = arith.constant 0 : i32
    return %c0_i32, %c0_i32_0 : i32, i32
  }
  func.func @transform_5(%arg0: i32, %arg1: memref<16xi32, #tpu.memory_space<smem>>, %arg2: memref<2xi32, #tpu.memory_space<smem>>) -> (i32, i32) {
    %c0_i32 = arith.constant 0 : i32
    %c0_i32_0 = arith.constant 0 : i32
    %c0_i32_1 = arith.constant 0 : i32
    return %c0_i32, %c0_i32_0 : i32, i32
  }
  func.func @transform_6(%arg0: i32, %arg1: memref<16xi32, #tpu.memory_space<smem>>, %arg2: memref<2xi32, #tpu.memory_space<smem>>) -> (i32, i32, i32) {
    %c0_i32 = arith.constant 0 : i32
    %c0_i32_0 = arith.constant 0 : i32
    %c0_i32_1 = arith.constant 0 : i32
    %c0_i32_2 = arith.constant 0 : i32
    return %c0_i32, %c0_i32_0, %c0_i32_1 : i32, i32, i32
  }
  func.func @transform_7(%arg0: i32, %arg1: memref<16xi32, #tpu.memory_space<smem>>, %arg2: memref<2xi32, #tpu.memory_space<smem>>) -> (i32, i32, i32) {
    %c0_i32 = arith.constant 0 : i32
    %c0_i32_0 = arith.constant 0 : i32
    %c0_i32_1 = arith.constant 0 : i32
    %c0_i32_2 = arith.constant 0 : i32
    return %c0_i32, %c0_i32_0, %c0_i32_1 : i32, i32, i32
  }
  func.func @transform_8(%arg0: i32, %arg1: memref<16xi32, #tpu.memory_space<smem>>, %arg2: memref<2xi32, #tpu.memory_space<smem>>) -> (i32, i32, i32, i32) {
    %c0_i32 = arith.constant 0 : i32
    %c0_i32_0 = arith.constant 0 : i32
    %c0_i32_1 = arith.constant 0 : i32
    %c0_i32_2 = arith.constant 0 : i32
    %c0_i32_3 = arith.constant 0 : i32
    return %c0_i32, %c0_i32_0, %c0_i32_1, %c0_i32_2 : i32, i32, i32, i32
  }
  func.func @transform_9(%arg0: i32, %arg1: memref<16xi32, #tpu.memory_space<smem>>, %arg2: memref<2xi32, #tpu.memory_space<smem>>) -> (i32, i32, i32) {
    %c0_i32 = arith.constant 0 : i32
    %c0_i32_0 = arith.constant 0 : i32
    %c0_i32_1 = arith.constant 0 : i32
    %c0_i32_2 = arith.constant 0 : i32
    return %c0_i32, %c0_i32_0, %c0_i32_1 : i32, i32, i32
  }
  func.func @transform_10(%arg0: i32, %arg1: memref<16xi32, #tpu.memory_space<smem>>, %arg2: memref<2xi32, #tpu.memory_space<smem>>) -> (i32, i32, i32) {
    %c0_i32 = arith.constant 0 : i32
    %c0_i32_0 = arith.constant 0 : i32
    %c0_i32_1 = arith.constant 0 : i32
    %c0_i32_2 = arith.constant 0 : i32
    return %c0_i32, %c0_i32_0, %c0_i32_1 : i32, i32, i32
  }
  func.func @transform_11(%arg0: i32, %arg1: memref<16xi32, #tpu.memory_space<smem>>, %arg2: memref<2xi32, #tpu.memory_space<smem>>) -> (i32, i32, i32) {
    %c0_i32 = arith.constant 0 : i32
    %c0_i32_0 = arith.constant 0 : i32
    %c0_i32_1 = arith.constant 0 : i32
    %c0_i32_2 = arith.constant 0 : i32
    return %c0_i32, %c0_i32_0, %c0_i32_1 : i32, i32, i32
  }
  func.func @transform_12(%arg0: i32, %arg1: memref<16xi32, #tpu.memory_space<smem>>, %arg2: memref<2xi32, #tpu.memory_space<smem>>) -> (i32, i32, i32) {
    %c0_i32 = arith.constant 0 : i32
    %c0_i32_0 = arith.constant 0 : i32
    %c0_i32_1 = arith.constant 0 : i32
    %c0_i32_2 = arith.constant 0 : i32
    return %c0_i32, %c0_i32_0, %c0_i32_1 : i32, i32, i32
  }
  func.func @transform_13(%arg0: i32, %arg1: memref<16xi32, #tpu.memory_space<smem>>, %arg2: memref<2xi32, #tpu.memory_space<smem>>) -> (i32, i32, i32) {
    %c0_i32 = arith.constant 0 : i32
    %c0_i32_0 = arith.constant 0 : i32
    %c0_i32_1 = arith.constant 0 : i32
    %c0_i32_2 = arith.constant 0 : i32
    return %c0_i32, %c0_i32_0, %c0_i32_1 : i32, i32, i32
  }
  func.func @transform_14(%arg0: i32, %arg1: memref<16xi32, #tpu.memory_space<smem>>, %arg2: memref<2xi32, #tpu.memory_space<smem>>) -> (i32, i32, i32) {
    %c0_i32 = arith.constant 0 : i32
    %c0_i32_0 = arith.constant 0 : i32
    %c0_i32_1 = arith.constant 0 : i32
    %c0_i32_2 = arith.constant 0 : i32
    return %c0_i32, %c0_i32_0, %c0_i32_1 : i32, i32, i32
  }
  func.func @transform_15(%arg0: i32, %arg1: memref<16xi32, #tpu.memory_space<smem>>, %arg2: memref<2xi32, #tpu.memory_space<smem>>) -> (i32, i32, i32) {
    %c0_i32 = arith.constant 0 : i32
    %c0_i32_0 = arith.constant 0 : i32
    %c0_i32_1 = arith.constant 0 : i32
    %c0_i32_2 = arith.constant 0 : i32
    return %c0_i32, %c0_i32_0, %c0_i32_1 : i32, i32, i32
  }
  func.func @transform_16(%arg0: i32, %arg1: memref<16xi32, #tpu.memory_space<smem>>, %arg2: memref<2xi32, #tpu.memory_space<smem>>) -> (i32, i32, i32) {
    %c0_i32 = arith.constant 0 : i32
    %c0_i32_0 = arith.constant 0 : i32
    %c0_i32_1 = arith.constant 0 : i32
    %c0_i32_2 = arith.constant 0 : i32
    return %c0_i32, %c0_i32_0, %c0_i32_1 : i32, i32, i32
  }
  func.func @transform_17(%arg0: i32, %arg1: memref<16xi32, #tpu.memory_space<smem>>, %arg2: memref<2xi32, #tpu.memory_space<smem>>) -> (i32, i32, i32) {
    %c0_i32 = arith.constant 0 : i32
    %c0_i32_0 = arith.constant 0 : i32
    %c0_i32_1 = arith.constant 0 : i32
    %c0_i32_2 = arith.constant 0 : i32
    return %c0_i32, %c0_i32_0, %c0_i32_1 : i32, i32, i32
  }
  func.func @transform_18(%arg0: i32, %arg1: memref<16xi32, #tpu.memory_space<smem>>, %arg2: memref<2xi32, #tpu.memory_space<smem>>) -> (i32, i32, i32) {
    %c0_i32 = arith.constant 0 : i32
    %c0_i32_0 = arith.constant 0 : i32
    %c0_i32_1 = arith.constant 0 : i32
    return %arg0, %c0_i32, %c0_i32_0 : i32, i32, i32
  }
}

</mosaic_0001>

<llo_original>
// kernel: tpu_custom_call.1
$region0: #{tpu_custom_call.1}
  #allocation0 [shape = 'u32[]', space=smem, size = 0x4, offset = 0x4, fixed_abs, tag = 'smem constant byte address 0x4 - core index']
  #allocation1 [shape = 'u32[144,128]{1,0:T(1,128)}', space=vmem, size = 0x12000, scoped, tag = 'internal scratch']
  #allocation2 [shape = 'f32[8,32]{1,0:T(8,128)}', space=vmem, size = 0x1000, scoped, tag = 'scratch operand']
  #allocation3 [shape = 's32[1]{0}', space=sflag, size = 0x4, scoped, tag = 'scoped memory for tpu_custom_call.1']
  #allocation4 [shape = 'u8[512]{0}', space=smem, size = 0x200, scoped, tag = 'prefetched SMEM operand 0']
  #allocation5 [shape = 'u8[512]{0}', space=smem, size = 0x200, scoped, tag = 'prefetched SMEM operand 1']
  %s0 = inlined_call_operand.vmem [shape: s32[16], index: 0, kind: input, shape index: {}]
  %s1 = inlined_call_operand.vmem [shape: s32[2], index: 1, kind: input, shape index: {}]
  %s2 = inlined_call_operand.vmem [shape: f32[2,1,8], index: 2, kind: input, shape index: {}]
  %s3 = inlined_call_operand.vmem [shape: f32[64,32], index: 3, kind: input, shape index: {}]
  %s4 = inlined_call_operand.vmem [shape: f32[3,32], index: 4, kind: input, shape index: {}]
  %s5 = inlined_call_operand.vmem [shape: f32[8,32], index: 5, kind: input, shape index: {}]
  %s6 = inlined_call_operand.vmem [shape: f32[1,32], index: 6, kind: input, shape index: {}]
  %s7 = inlined_call_operand.vmem [shape: f32[1,32], index: 7, kind: input, shape index: {}]
  %s8 = inlined_call_operand.vmem [shape: f32[2,32,96], index: 8, kind: input, shape index: {}]
  %s9 = inlined_call_operand.vmem [shape: f32[2,1,96], index: 9, kind: input, shape index: {}]
  %s10 = inlined_call_operand.vmem [shape: f32[2,4,8,32], index: 10, kind: input, shape index: {}]
  %s11 = inlined_call_operand.vmem [shape: f32[2,1,32], index: 11, kind: input, shape index: {}]
  %s12 = inlined_call_operand.vmem [shape: f32[2,1,32], index: 12, kind: input, shape index: {}]
  %s13 = inlined_call_operand.vmem [shape: f32[2,1,32], index: 13, kind: input, shape index: {}]
  %s14 = inlined_call_operand.vmem [shape: f32[2,32,128], index: 14, kind: input, shape index: {}]
  %s15 = inlined_call_operand.vmem [shape: f32[2,1,128], index: 15, kind: input, shape index: {}]
  %s16 = inlined_call_operand.vmem [shape: f32[2,128,32], index: 16, kind: input, shape index: {}]
  %s17 = inlined_call_operand.vmem [shape: f32[2,1,32], index: 17, kind: input, shape index: {}]
  %s18 = inlined_call_operand.vmem [shape: f32[2,1,32], index: 18, kind: input, shape index: {}]
  %s19 = inlined_call_operand.vmem [shape: f32[2,1,32], index: 19, kind: input, shape index: {}]
  %s20 = inlined_call_operand.hbm [shape: f32[2,8,32], index: 20, kind: output, shape index: {}]
  %s21 = sld [smem:[#allocation0]]
  $region105: #{tpu_custom_call.1} parent=0
    _
  %s23 = ssub.s32 1, %s21
  %s24 = scalar_select 0, %s23, %s21
  %s25 = sshll.u32 %s0, 4
  %s26 = int_to_ptr.vmem [resolvable:$true] %s25
  %28 = dma.vmem_to_smem %s26, 16, [#allocation4], [#allocation3]
  %s29 = sshll.u32 %s1, 4
  %s30 = int_to_ptr.vmem [resolvable:$true] %s29
  %32 = dma.vmem_to_smem %s30, 16, [#allocation5], [#allocation3]
  %33 = dma.done [#allocation3], 32
  %34 = sfence
  $region1: #{tpu_custom_call.1} parent=0
    #allocation6 [shape = 'u8[8192]{0}', space=vmem, size = 0x2000, scoped, tag = 'output window, operand 0']
    #allocation7 [shape = 's32[2]{0}', space=sflag, size = 0x8, scoped, tag = 'scoped memory for tpu_custom_call.1']
    %35 = vsyncpa [#allocation7], 0
    %s36 = scalar_lea.sflag [#allocation7], 1
    %37 = vsyncpa %s36, 0
    loop: start=0, step=1, limit=4
    $region2: #{tpu_custom_call.1} parent=1 // loop_pre_header
      _
    $region3: #{tpu_custom_call.1} parent=1 // loop_header
      %s39 = sphi 0, %s43
      %p40 = scmp.ge.s32.totalorder %s39, 4
      %s49 = sphi 0, %s51
      %s52 = sphi 0, %s49
      %s53 = sphi 0, %s52
      %s69 = sphi 0, %s53
      %s73 = sphi 0, %s73
      %s75 = sphi 0, %s73
      %s76 = sphi 0, %s75
      %s90 = sphi 0, %s76
      %s94 = sphi 0, %s94
      %s96 = sphi 0, %s94
      %s97 = sphi 0, %s96
      %s111 = sphi 0, %s97
      %s115 = sphi 0, %s115
      %s117 = sphi 0, %s115
      %s118 = sphi 0, %s117
      %s132 = sphi 0, %s118
      %s136 = sphi 0, %s136
      %s138 = sphi 0, %s136
      %s139 = sphi 0, %s138
      %s153 = sphi 0, %s139
      %s157 = sphi 0, %s157
      %s159 = sphi 0, %s157
      %s160 = sphi 0, %s159
      %s174 = sphi 0, %s160
      %s178 = sphi 0, %s178
      %s180 = sphi 0, %s178
      %s181 = sphi 0, %s180
      %s195 = sphi 0, %s181
      %s199 = sphi 0, %s199
      %s201 = sphi 0, %s199
      %s202 = sphi 0, %s201
      %s216 = sphi 0, %s202
      %s220 = sphi 0, %s220
      %s222 = sphi 0, %s220
      %s223 = sphi 0, %s222
      %s237 = sphi 0, %s223
      %s241 = sphi 0, %s241
      %s243 = sphi 0, %s241
      %s244 = sphi 0, %s243
      %s258 = sphi 0, %s244
      %s262 = sphi 0, %s262
      %s264 = sphi 0, %s262
      %s265 = sphi 0, %s264
      %s279 = sphi 0, %s265
      %s283 = sphi 0, %s283
      %s285 = sphi 0, %s283
      %s286 = sphi 0, %s285
      %s300 = sphi 0, %s286
      %s304 = sphi 0, %s304
      %s306 = sphi 0, %s304
      %s307 = sphi 0, %s306
      %s321 = sphi 0, %s307
      %s325 = sphi 0, %s325
      %s327 = sphi 0, %s325
      %s328 = sphi 0, %s327
      %s342 = sphi 0, %s328
      %s346 = sphi 0, %s346
      %s348 = sphi 0, %s346
      %s349 = sphi 0, %s348
      %s363 = sphi 0, %s349
      %s367 = sphi 0, %s367
      %s369 = sphi 0, %s367
      %s370 = sphi 0, %s369
      %s384 = sphi 0, %s370
      %s388 = sphi 0, %s388
      %s390 = sphi 0, %s388
      %s391 = sphi 0, %s390
      %s405 = sphi 0, %s391
      %s409 = sphi 0, %s409
      %s411 = sphi 0, %s409
      %s412 = sphi 0, %s411
      %s426 = sphi 0, %s412
      %s432 = sphi 0, %s434
      %s435 = sphi 0, %s432
      %s436 = sphi 0, %s435
      %s452 = sphi 0, %s436
    $region4: #{tpu_custom_call.1} parent=1 // loop_header_branch
      %42 = sbr.rel (%p40) target = $region8
    $region5: #{tpu_custom_call.1} parent=1 // loop_body
      %s44 = ssub.s32 %s39, 1
      %s45 = ssub.s32 %s39, 2
      %s46 = sadd.s32 %s39, 1
      %s47 = ssub.s32 %s39, %s46
      %p48 = scmp.eq.s32.totalorder %s47, 0
      %s50 = sadd.s32 %s49, 1
      %s51 = scalar_select %p48, %s49, %s50
      %p54 = pneg %p48
      %p55 = scmp.eq.s32.totalorder %s39, 1
      %p56 = por %p54, %p55
      %p57 = scmp.ne.s32.totalorder %s49, %s52
      %p58 = scmp.eq.s32.totalorder %s39, 0
      %p59 = por %p57, %p58
      %p60 = scmp.ne.s32.totalorder %s49, %s52
      %p61 = scmp.eq.s32.totalorder %s44, 1
      %p62 = por %p60, %p61
      %p63 = scmp.ne.s32.totalorder %s52, %s53
      %p64 = scmp.eq.s32.totalorder %s44, 0
      %p65 = por %p63, %p64
      %p66 = scmp.ne.s32.totalorder %s52, %s53
      %p67 = scmp.eq.s32.totalorder %s45, 1
      %p68 = por %p66, %p67
      %p70 = scmp.ne.s32.totalorder %s53, %s69
      %p71 = scmp.eq.s32.totalorder %s45, 0
      %p72 = por %p70, %p71
      %s74 = sadd.s32 %s73, 1
      %p77 = scmp.eq.s32.totalorder %s39, 1
      %p78 = scmp.ne.s32.totalorder %s73, %s75
      %p79 = scmp.eq.s32.totalorder %s39, 0
      %p80 = por %p78, %p79
      %p81 = scmp.ne.s32.totalorder %s73, %s75
      %p82 = scmp.eq.s32.totalorder %s44, 1
      %p83 = por %p81, %p82
      %p84 = scmp.ne.s32.totalorder %s75, %s76
      %p85 = scmp.eq.s32.totalorder %s44, 0
      %p86 = por %p84, %p85
      %p87 = scmp.ne.s32.totalorder %s75, %s76
      %p88 = scmp.eq.s32.totalorder %s45, 1
      %p89 = por %p87, %p88
      %p91 = scmp.ne.s32.totalorder %s76, %s90
      %p92 = scmp.eq.s32.totalorder %s45, 0
      %p93 = por %p91, %p92
      %s95 = sadd.s32 %s94, 1
      %p98 = scmp.eq.s32.totalorder %s39, 1
      %p99 = scmp.ne.s32.totalorder %s94, %s96
      %p100 = scmp.eq.s32.totalorder %s39, 0
      %p101 = por %p99, %p100
      %p102 = scmp.ne.s32.totalorder %s94, %s96
      %p103 = scmp.eq.s32.totalorder %s44, 1
      %p104 = por %p102, %p103
      %p105 = scmp.ne.s32.totalorder %s96, %s97
      %p106 = scmp.eq.s32.totalorder %s44, 0
      %p107 = por %p105, %p106
      %p108 = scmp.ne.s32.totalorder %s96, %s97
      %p109 = scmp.eq.s32.totalorder %s45, 1
      %p110 = por %p108, %p109
      %p112 = scmp.ne.s32.totalorder %s97, %s111
      %p113 = scmp.eq.s32.totalorder %s45, 0
      %p114 = por %p112, %p113
      %s116 = sadd.s32 %s115, 1
      %p119 = scmp.eq.s32.totalorder %s39, 1
      %p120 = scmp.ne.s32.totalorder %s115, %s117
      %p121 = scmp.eq.s32.totalorder %s39, 0
      %p122 = por %p120, %p121
      %p123 = scmp.ne.s32.totalorder %s115, %s117
      %p124 = scmp.eq.s32.totalorder %s44, 1
      %p125 = por %p123, %p124
      %p126 = scmp.ne.s32.totalorder %s117, %s118
      %p127 = scmp.eq.s32.totalorder %s44, 0
      %p128 = por %p126, %p127
      %p129 = scmp.ne.s32.totalorder %s117, %s118
      %p130 = scmp.eq.s32.totalorder %s45, 1
      %p131 = por %p129, %p130
      %p133 = scmp.ne.s32.totalorder %s118, %s132
      %p134 = scmp.eq.s32.totalorder %s45, 0
      %p135 = por %p133, %p134
      %s137 = sadd.s32 %s136, 1
      %p140 = scmp.eq.s32.totalorder %s39, 1
      %p141 = scmp.ne.s32.totalorder %s136, %s138
      %p142 = scmp.eq.s32.totalorder %s39, 0
      %p143 = por %p141, %p142
      %p144 = scmp.ne.s32.totalorder %s136, %s138
      %p145 = scmp.eq.s32.totalorder %s44, 1
      %p146 = por %p144, %p145
      %p147 = scmp.ne.s32.totalorder %s138, %s139
      %p148 = scmp.eq.s32.totalorder %s44, 0
      %p149 = por %p147, %p148
      %p150 = scmp.ne.s32.totalorder %s138, %s139
      %p151 = scmp.eq.s32.totalorder %s45, 1
      %p152 = por %p150, %p151
      %p154 = scmp.ne.s32.totalorder %s139, %s153
      %p155 = scmp.eq.s32.totalorder %s45, 0
      %p156 = por %p154, %p155
      %s158 = sadd.s32 %s157, 1
      %p161 = scmp.eq.s32.totalorder %s39, 1
      %p162 = scmp.ne.s32.totalorder %s157, %s159
      %p163 = scmp.eq.s32.totalorder %s39, 0
      %p164 = por %p162, %p163
      %p165 = scmp.ne.s32.totalorder %s157, %s159
      %p166 = scmp.eq.s32.totalorder %s44, 1
      %p167 = por %p165, %p166
      %p168 = scmp.ne.s32.totalorder %s159, %s160
      %p169 = scmp.eq.s32.totalorder %s44, 0
      %p170 = por %p168, %p169
      %p171 = scmp.ne.s32.totalorder %s159, %s160
      %p172 = scmp.eq.s32.totalorder %s45, 1
      %p173 = por %p171, %p172
      %p175 = scmp.ne.s32.totalorder %s160, %s174
      %p176 = scmp.eq.s32.totalorder %s45, 0
      %p177 = por %p175, %p176
      %s179 = sadd.s32 %s178, 1
      %p182 = scmp.eq.s32.totalorder %s39, 1
      %p183 = scmp.ne.s32.totalorder %s178, %s180
      %p184 = scmp.eq.s32.totalorder %s39, 0
      %p185 = por %p183, %p184
      %p186 = scmp.ne.s32.totalorder %s178, %s180
      %p187 = scmp.eq.s32.totalorder %s44, 1
      %p188 = por %p186, %p187
      %p189 = scmp.ne.s32.totalorder %s180, %s181
      %p190 = scmp.eq.s32.totalorder %s44, 0
      %p191 = por %p189, %p190
      %p192 = scmp.ne.s32.totalorder %s180, %s181
      %p193 = scmp.eq.s32.totalorder %s45, 1
      %p194 = por %p192, %p193
      %p196 = scmp.ne.s32.totalorder %s181, %s195
      %p197 = scmp.eq.s32.totalorder %s45, 0
      %p198 = por %p196, %p197
      %s200 = sadd.s32 %s199, 1
      %p203 = scmp.eq.s32.totalorder %s39, 1
      %p204 = scmp.ne.s32.totalorder %s199, %s201
      %p205 = scmp.eq.s32.totalorder %s39, 0
      %p206 = por %p204, %p205
      %p207 = scmp.ne.s32.totalorder %s199, %s201
      %p208 = scmp.eq.s32.totalorder %s44, 1
      %p209 = por %p207, %p208
      %p210 = scmp.ne.s32.totalorder %s201, %s202
      %p211 = scmp.eq.s32.totalorder %s44, 0
      %p212 = por %p210, %p211
      %p213 = scmp.ne.s32.totalorder %s201, %s202
      %p214 = scmp.eq.s32.totalorder %s45, 1
      %p215 = por %p213, %p214
      %p217 = scmp.ne.s32.totalorder %s202, %s216
      %p218 = scmp.eq.s32.totalorder %s45, 0
      %p219 = por %p217, %p218
      %s221 = sadd.s32 %s220, 1
      %p224 = scmp.eq.s32.totalorder %s39, 1
      %p225 = scmp.ne.s32.totalorder %s220, %s222
      %p226 = scmp.eq.s32.totalorder %s39, 0
      %p227 = por %p225, %p226
      %p228 = scmp.ne.s32.totalorder %s220, %s222
      %p229 = scmp.eq.s32.totalorder %s44, 1
      %p230 = por %p228, %p229
      %p231 = scmp.ne.s32.totalorder %s222, %s223
      %p232 = scmp.eq.s32.totalorder %s44, 0
      %p233 = por %p231, %p232
      %p234 = scmp.ne.s32.totalorder %s222, %s223
      %p235 = scmp.eq.s32.totalorder %s45, 1
      %p236 = por %p234, %p235
      %p238 = scmp.ne.s32.totalorder %s223, %s237
      %p239 = scmp.eq.s32.totalorder %s45, 0
      %p240 = por %p238, %p239
      %s242 = sadd.s32 %s241, 1
      %p245 = scmp.eq.s32.totalorder %s39, 1
      %p246 = scmp.ne.s32.totalorder %s241, %s243
      %p247 = scmp.eq.s32.totalorder %s39, 0
      %p248 = por %p246, %p247
      %p249 = scmp.ne.s32.totalorder %s241, %s243
      %p250 = scmp.eq.s32.totalorder %s44, 1
      %p251 = por %p249, %p250
      %p252 = scmp.ne.s32.totalorder %s243, %s244
      %p253 = scmp.eq.s32.totalorder %s44, 0
      %p254 = por %p252, %p253
      %p255 = scmp.ne.s32.totalorder %s243, %s244
      %p256 = scmp.eq.s32.totalorder %s45, 1
      %p257 = por %p255, %p256
      %p259 = scmp.ne.s32.totalorder %s244, %s258
      %p260 = scmp.eq.s32.totalorder %s45, 0
      %p261 = por %p259, %p260
      %s263 = sadd.s32 %s262, 1
      %p266 = scmp.eq.s32.totalorder %s39, 1
      %p267 = scmp.ne.s32.totalorder %s262, %s264
      %p268 = scmp.eq.s32.totalorder %s39, 0
      %p269 = por %p267, %p268
      %p270 = scmp.ne.s32.totalorder %s262, %s264
      %p271 = scmp.eq.s32.totalorder %s44, 1
      %p272 = por %p270, %p271
      %p273 = scmp.ne.s32.totalorder %s264, %s265
      %p274 = scmp.eq.s32.totalorder %s44, 0
      %p275 = por %p273, %p274
      %p276 = scmp.ne.s32.totalorder %s264, %s265
      %p277 = scmp.eq.s32.totalorder %s45, 1
      %p278 = por %p276, %p277
      %p280 = scmp.ne.s32.totalorder %s265, %s279
      %p281 = scmp.eq.s32.totalorder %s45, 0
      %p282 = por %p280, %p281
      %s284 = sadd.s32 %s283, 1
      %p287 = scmp.eq.s32.totalorder %s39, 1
      %p288 = scmp.ne.s32.totalorder %s283, %s285
      %p289 = scmp.eq.s32.totalorder %s39, 0
      %p290 = por %p288, %p289
      %p291 = scmp.ne.s32.totalorder %s283, %s285
      %p292 = scmp.eq.s32.totalorder %s44, 1
      %p293 = por %p291, %p292
      %p294 = scmp.ne.s32.totalorder %s285, %s286
      %p295 = scmp.eq.s32.totalorder %s44, 0
      %p296 = por %p294, %p295
      %p297 = scmp.ne.s32.totalorder %s285, %s286
      %p298 = scmp.eq.s32.totalorder %s45, 1
      %p299 = por %p297, %p298
      %p301 = scmp.ne.s32.totalorder %s286, %s300
      %p302 = scmp.eq.s32.totalorder %s45, 0
      %p303 = por %p301, %p302
      %s305 = sadd.s32 %s304, 1
      %p308 = scmp.eq.s32.totalorder %s39, 1
      %p309 = scmp.ne.s32.totalorder %s304, %s306
      %p310 = scmp.eq.s32.totalorder %s39, 0
      %p311 = por %p309, %p310
      %p312 = scmp.ne.s32.totalorder %s304, %s306
      %p313 = scmp.eq.s32.totalorder %s44, 1
      %p314 = por %p312, %p313
      %p315 = scmp.ne.s32.totalorder %s306, %s307
      %p316 = scmp.eq.s32.totalorder %s44, 0
      %p317 = por %p315, %p316
      %p318 = scmp.ne.s32.totalorder %s306, %s307
      %p319 = scmp.eq.s32.totalorder %s45, 1
      %p320 = por %p318, %p319
      %p322 = scmp.ne.s32.totalorder %s307, %s321
      %p323 = scmp.eq.s32.totalorder %s45, 0
      %p324 = por %p322, %p323
      %s326 = sadd.s32 %s325, 1
      %p329 = scmp.eq.s32.totalorder %s39, 1
      %p330 = scmp.ne.s32.totalorder %s325, %s327
      %p331 = scmp.eq.s32.totalorder %s39, 0
      %p332 = por %p330, %p331
      %p333 = scmp.ne.s32.totalorder %s325, %s327
      %p334 = scmp.eq.s32.totalorder %s44, 1
      %p335 = por %p333, %p334
      %p336 = scmp.ne.s32.totalorder %s327, %s328
      %p337 = scmp.eq.s32.totalorder %s44, 0
      %p338 = por %p336, %p337
      %p339 = scmp.ne.s32.totalorder %s327, %s328
      %p340 = scmp.eq.s32.totalorder %s45, 1
      %p341 = por %p339, %p340
      %p343 = scmp.ne.s32.totalorder %s328, %s342
      %p344 = scmp.eq.s32.totalorder %s45, 0
      %p345 = por %p343, %p344
      %s347 = sadd.s32 %s346, 1
      %p350 = scmp.eq.s32.totalorder %s39, 1
      %p351 = scmp.ne.s32.totalorder %s346, %s348
      %p352 = scmp.eq.s32.totalorder %s39, 0
      %p353 = por %p351, %p352
      %p354 = scmp.ne.s32.totalorder %s346, %s348
      %p355 = scmp.eq.s32.totalorder %s44, 1
      %p356 = por %p354, %p355
      %p357 = scmp.ne.s32.totalorder %s348, %s349
      %p358 = scmp.eq.s32.totalorder %s44, 0
      %p359 = por %p357, %p358
      %p360 = scmp.ne.s32.totalorder %s348, %s349
      %p361 = scmp.eq.s32.totalorder %s45, 1
      %p362 = por %p360, %p361
      %p364 = scmp.ne.s32.totalorder %s349, %s363
      %p365 = scmp.eq.s32.totalorder %s45, 0
      %p366 = por %p364, %p365
      %s368 = sadd.s32 %s367, 1
      %p371 = scmp.eq.s32.totalorder %s39, 1
      %p372 = scmp.ne.s32.totalorder %s367, %s369
      %p373 = scmp.eq.s32.totalorder %s39, 0
      %p374 = por %p372, %p373
      %p375 = scmp.ne.s32.totalorder %s367, %s369
      %p376 = scmp.eq.s32.totalorder %s44, 1
      %p377 = por %p375, %p376
      %p378 = scmp.ne.s32.totalorder %s369, %s370
      %p379 = scmp.eq.s32.totalorder %s44, 0
      %p380 = por %p378, %p379
      %p381 = scmp.ne.s32.totalorder %s369, %s370
      %p382 = scmp.eq.s32.totalorder %s45, 1
      %p383 = por %p381, %p382
      %p385 = scmp.ne.s32.totalorder %s370, %s384
      %p386 = scmp.eq.s32.totalorder %s45, 0
      %p387 = por %p385, %p386
      %s389 = sadd.s32 %s388, 1
      %p392 = scmp.eq.s32.totalorder %s39, 1
      %p393 = scmp.ne.s32.totalorder %s388, %s390
      %p394 = scmp.eq.s32.totalorder %s39, 0
      %p395 = por %p393, %p394
      %p396 = scmp.ne.s32.totalorder %s388, %s390
      %p397 = scmp.eq.s32.totalorder %s44, 1
      %p398 = por %p396, %p397
      %p399 = scmp.ne.s32.totalorder %s390, %s391
      %p400 = scmp.eq.s32.totalorder %s44, 0
      %p401 = por %p399, %p400
      %p402 = scmp.ne.s32.totalorder %s390, %s391
      %p403 = scmp.eq.s32.totalorder %s45, 1
      %p404 = por %p402, %p403
      %p406 = scmp.ne.s32.totalorder %s391, %s405
      %p407 = scmp.eq.s32.totalorder %s45, 0
      %p408 = por %p406, %p407
      %s410 = sadd.s32 %s409, 1
      %p413 = scmp.eq.s32.totalorder %s39, 1
      %p414 = scmp.ne.s32.totalorder %s409, %s411
      %p415 = scmp.eq.s32.totalorder %s39, 0
      %p416 = por %p414, %p415
      %p417 = scmp.ne.s32.totalorder %s409, %s411
      %p418 = scmp.eq.s32.totalorder %s44, 1
      %p419 = por %p417, %p418
      %p420 = scmp.ne.s32.totalorder %s411, %s412
      %p421 = scmp.eq.s32.totalorder %s44, 0
      %p422 = por %p420, %p421
      %p423 = scmp.ne.s32.totalorder %s411, %s412
      %p424 = scmp.eq.s32.totalorder %s45, 1
      %p425 = por %p423, %p424
      %p427 = scmp.ne.s32.totalorder %s412, %s426
      %p428 = scmp.eq.s32.totalorder %s45, 0
      %p429 = por %p427, %p428
      %s430 = ssub.s32 %s39, %s46
      %p431 = scmp.eq.s32.totalorder %s430, 0
      %s433 = sadd.s32 %s432, 1
      %s434 = scalar_select %p431, %s432, %s433
      %p437 = pneg %p431
      %p438 = scmp.eq.s32.totalorder %s39, 1
      %p439 = por %p437, %p438
      %p440 = scmp.ne.s32.totalorder %s432, %s435
      %p441 = scmp.eq.s32.totalorder %s39, 0
      %p442 = por %p440, %p441
      %p443 = scmp.ne.s32.totalorder %s432, %s435
      %p444 = scmp.eq.s32.totalorder %s44, 1
      %p445 = por %p443, %p444
      %p446 = scmp.ne.s32.totalorder %s435, %s436
      %p447 = scmp.eq.s32.totalorder %s44, 0
      %p448 = por %p446, %p447
      %p449 = scmp.ne.s32.totalorder %s435, %s436
      %p450 = scmp.eq.s32.totalorder %s45, 1
      %p451 = por %p449, %p450
      %p453 = scmp.ne.s32.totalorder %s436, %s452
      %p454 = scmp.eq.s32.totalorder %s45, 0
      %p455 = por %p453, %p454
      %p456 = scmp.le.s32.totalorder 1, %s39
      %p457 = scmp.lt.s32.totalorder %s39, 3
      %p458 = pnand %p456, %p457
      %p459 = pneg %p458
      // Predicated region
      $region9: #{tpu_custom_call.1} parent=5 // pred_check
        _
      $region10: #{tpu_custom_call.1} parent=5 // pred_check_branch
        %461 = sbr.rel (%p458) target = $region12
      $region11: #{tpu_custom_call.1} parent=5 // pred_region
        %s462 = ssub.s32 %s39, 1
        // Predicated region
        $region13: #{tpu_custom_call.1} parent=11 // pred_check
          %p463 = pneg %p86
        $region14: #{tpu_custom_call.1} parent=11 // pred_check_branch
          %465 = sbr.rel (%p463) target = $region16
        $region15: #{tpu_custom_call.1} parent=11 // pred_region
          _
        $region16: #{tpu_custom_call.1} parent=11 // pred_fallthru
          _
        // Predicated region
        $region17: #{tpu_custom_call.1} parent=11 // pred_check
          %p466 = pneg %p107
        $region18: #{tpu_custom_call.1} parent=11 // pred_check_branch
          %468 = sbr.rel (%p466) target = $region20
        $region19: #{tpu_custom_call.1} parent=11 // pred_region
          _
        $region20: #{tpu_custom_call.1} parent=11 // pred_fallthru
          _
        // Predicated region
        $region21: #{tpu_custom_call.1} parent=11 // pred_check
          %p469 = pneg %p128
        $region22: #{tpu_custom_call.1} parent=11 // pred_check_branch
          %471 = sbr.rel (%p469) target = $region24
        $region23: #{tpu_custom_call.1} parent=11 // pred_region
          _
        $region24: #{tpu_custom_call.1} parent=11 // pred_fallthru
          _
        // Predicated region
        $region25: #{tpu_custom_call.1} parent=11 // pred_check
          %p472 = pneg %p149
        $region26: #{tpu_custom_call.1} parent=11 // pred_check_branch
          %474 = sbr.rel (%p472) target = $region28
        $region27: #{tpu_custom_call.1} parent=11 // pred_region
          _
        $region28: #{tpu_custom_call.1} parent=11 // pred_fallthru
          _
        // Predicated region
        $region29: #{tpu_custom_call.1} parent=11 // pred_check
          %p475 = pneg %p170
        $region30: #{tpu_custom_call.1} parent=11 // pred_check_branch
          %477 = sbr.rel (%p475) target = $region32
        $region31: #{tpu_custom_call.1} parent=11 // pred_region
          _
        $region32: #{tpu_custom_call.1} parent=11 // pred_fallthru
          _
        // Predicated region
        $region33: #{tpu_custom_call.1} parent=11 // pred_check
          %p478 = pneg %p191
        $region34: #{tpu_custom_call.1} parent=11 // pred_check_branch
          %480 = sbr.rel (%p478) target = $region36
        $region35: #{tpu_custom_call.1} parent=11 // pred_region
          _
        $region36: #{tpu_custom_call.1} parent=11 // pred_fallthru
          _
        // Predicated region
        $region37: #{tpu_custom_call.1} parent=11 // pred_check
          %p481 = pneg %p212
        $region38: #{tpu_custom_call.1} parent=11 // pred_check_branch
          %483 = sbr.rel (%p481) target = $region40
        $region39: #{tpu_custom_call.1} parent=11 // pred_region
          _
        $region40: #{tpu_custom_call.1} parent=11 // pred_fallthru
          _
        // Predicated region
        $region41: #{tpu_custom_call.1} parent=11 // pred_check
          %p484 = pneg %p233
        $region42: #{tpu_custom_call.1} parent=11 // pred_check_branch
          %486 = sbr.rel (%p484) target = $region44
        $region43: #{tpu_custom_call.1} parent=11 // pred_region
          _
        $region44: #{tpu_custom_call.1} parent=11 // pred_fallthru
          _
        // Predicated region
        $region45: #{tpu_custom_call.1} parent=11 // pred_check
          %p487 = pneg %p254
        $region46: #{tpu_custom_call.1} parent=11 // pred_check_branch
          %489 = sbr.rel (%p487) target = $region48
        $region47: #{tpu_custom_call.1} parent=11 // pred_region
          _
        $region48: #{tpu_custom_call.1} parent=11 // pred_fallthru
          _
        // Predicated region
        $region49: #{tpu_custom_call.1} parent=11 // pred_check
          %p490 = pneg %p275
        $region50: #{tpu_custom_call.1} parent=11 // pred_check_branch
          %492 = sbr.rel (%p490) target = $region52
        $region51: #{tpu_custom_call.1} parent=11 // pred_region
          _
        $region52: #{tpu_custom_call.1} parent=11 // pred_fallthru
          _
        // Predicated region
        $region53: #{tpu_custom_call.1} parent=11 // pred_check
          %p493 = pneg %p296
        $region54: #{tpu_custom_call.1} parent=11 // pred_check_branch
          %495 = sbr.rel (%p493) target = $region56
        $region55: #{tpu_custom_call.1} parent=11 // pred_region
          _
        $region56: #{tpu_custom_call.1} parent=11 // pred_fallthru
          _
        // Predicated region
        $region57: #{tpu_custom_call.1} parent=11 // pred_check
          %p496 = pneg %p317
        $region58: #{tpu_custom_call.1} parent=11 // pred_check_branch
          %498 = sbr.rel (%p496) target = $region60
        $region59: #{tpu_custom_call.1} parent=11 // pred_region
          _
        $region60: #{tpu_custom_call.1} parent=11 // pred_fallthru
          _
        // Predicated region
        $region61: #{tpu_custom_call.1} parent=11 // pred_check
          %p499 = pneg %p338
        $region62: #{tpu_custom_call.1} parent=11 // pred_check_branch
          %501 = sbr.rel (%p499) target = $region64
        $region63: #{tpu_custom_call.1} parent=11 // pred_region
          _
        $region64: #{tpu_custom_call.1} parent=11 // pred_fallthru
          _
        // Predicated region
        $region65: #{tpu_custom_call.1} parent=11 // pred_check
          %p502 = pneg %p359
        $region66: #{tpu_custom_call.1} parent=11 // pred_check_branch
          %504 = sbr.rel (%p502) target = $region68
        $region67: #{tpu_custom_call.1} parent=11 // pred_region
          _
        $region68: #{tpu_custom_call.1} parent=11 // pred_fallthru
          _
        // Predicated region
        $region69: #{tpu_custom_call.1} parent=11 // pred_check
          %p505 = pneg %p380
        $region70: #{tpu_custom_call.1} parent=11 // pred_check_branch
          %507 = sbr.rel (%p505) target = $region72
        $region71: #{tpu_custom_call.1} parent=11 // pred_region
          _
        $region72: #{tpu_custom_call.1} parent=11 // pred_fallthru
          _
        // Predicated region
        $region73: #{tpu_custom_call.1} parent=11 // pred_check
          %p508 = pneg %p401
        $region74: #{tpu_custom_call.1} parent=11 // pred_check_branch
          %510 = sbr.rel (%p508) target = $region76
        $region75: #{tpu_custom_call.1} parent=11 // pred_region
          _
        $region76: #{tpu_custom_call.1} parent=11 // pred_fallthru
          _
        // Predicated region
        $region77: #{tpu_custom_call.1} parent=11 // pred_check
          %p511 = pneg %p422
        $region78: #{tpu_custom_call.1} parent=11 // pred_check_branch
          %513 = sbr.rel (%p511) target = $region80
        $region79: #{tpu_custom_call.1} parent=11 // pred_region
          _
        $region80: #{tpu_custom_call.1} parent=11 // pred_fallthru
          _
      $region12: #{tpu_custom_call.1} parent=5 // pred_fallthru
        _
      %p514 = scmp.lt.s32.totalorder %s39, 2
      // Predicated region
      $region81: #{tpu_custom_call.1} parent=5 // pred_check
        %p515 = pneg %p514
      $region82: #{tpu_custom_call.1} parent=5 // pred_check_branch
        %517 = sbr.rel (%p515) target = $region84
      $region83: #{tpu_custom_call.1} parent=5 // pred_region
        // Predicated region
        $region85: #{tpu_custom_call.1} parent=83 // pred_check
          %p518 = pneg %p59
        $region86: #{tpu_custom_call.1} parent=83 // pred_check_branch
          %520 = sbr.rel (%p518) target = $region88
        $region87: #{tpu_custom_call.1} parent=83 // pred_region
          %p521 = scmp.lt.s32.totalorder %s39, 1
          %s522 = scalar_select %p521, %s39, 1
          %s523 = scalar_lea.vmem %s2, %s522
        $region88: #{tpu_custom_call.1} parent=83 // pred_fallthru
          _
      $region84: #{tpu_custom_call.1} parent=5 // pred_fallthru
        _
      %p524 = scmp.le.s32.totalorder 1, %s39
      %p525 = scmp.lt.s32.totalorder %s39, 3
      %p526 = pnand %p524, %p525
      %p527 = pneg %p526
      // Predicated region
      $region89: #{tpu_custom_call.1} parent=5 // pred_check
        _
      $region90: #{tpu_custom_call.1} parent=5 // pred_check_branch
        %529 = sbr.rel (%p526) target = $region92
      $region91: #{tpu_custom_call.1} parent=5 // pred_region
        %s530 = ssub.s32 %s39, 1
        %p531 = scmp.lt.s32.totalorder %s44, 1
        %s532 = scalar_select %p531, %s44, 1
        %s533 = scalar_lea.vmem %s2, %s532
        %p534 = pneg %p65
        %p535 = pneg %p62
        %p536 = pneg %p86
        %p537 = pneg %p83
        %p538 = pneg %p107
        %p539 = pneg %p104
        %p540 = pneg %p128
        %p541 = pneg %p125
        %p542 = pneg %p149
        %p543 = pneg %p146
        %p544 = pneg %p170
        %p545 = pneg %p167
        %p546 = pneg %p191
        %p547 = pneg %p188
        %p548 = pneg %p212
        %p549 = pneg %p209
        %p550 = pneg %p233
        %p551 = pneg %p230
        %p552 = pneg %p254
        %p553 = pneg %p251
        %p554 = pneg %p275
        %p555 = pneg %p272
        %p556 = pneg %p296
        %p557 = pneg %p293
        %p558 = pneg %p317
        %p559 = pneg %p314
        %p560 = pneg %p338
        %p561 = pneg %p335
        %p562 = pneg %p359
        %p563 = pneg %p356
        %p564 = pneg %p380
        %p565 = pneg %p377
        %p566 = pneg %p401
        %p567 = pneg %p398
        %p568 = pneg %p422
        %p569 = pneg %p419
        %p570 = pneg %p448
        %p571 = pneg %p445
        %s572 = sand.u32 %s435, 1
        %s573 = scalar_lea.sflag [#allocation7], %s572
        %s574 = sand.u32 %s435, 1
        %s575 = smul.addr %s574, 8
        %s576 = scalar_lea.vmem [#allocation6], %s575
        %p577 = scmp.lt.s32.totalorder %s44, 1
        %s578 = scalar_select %p577, %s44, 1
        %s579 = scalar_lea.vmem %s2, %s578
        %s580 = smul.u32 %s44, 8
        %s581 = sld [smem:[#allocation4 + %s580]]
        %s582 = scalar_lea.vmem %s3, %s581
        %v583 = vld [vmem:[%s582] sm:$0x1]
        %vm584 = vcmask 253952
        %585 = vst.msk [vmem:[#allocation2] sm:$0x1] %vm584, %v583
        %s586 = sadd.s32 %s580, 1
        %s587 = sld [smem:[#allocation4 + %s586]]
        %s588 = scalar_lea.vmem %s3, %s587
        %v589 = vld [vmem:[%s588] sm:$0x1]
        %590 = vst.msk [vmem:[#allocation2 + $0x1] sm:$0x1] %vm584, %v589
        %s591 = sadd.s32 %s580, 2
        %s592 = sld [smem:[#allocation4 + %s591]]
        %s593 = scalar_lea.vmem %s3, %s592
        %v594 = vld [vmem:[%s593] sm:$0x1]
        %595 = vst.msk [vmem:[#allocation2 + $0x2] sm:$0x1] %vm584, %v594
        %s596 = sadd.s32 %s580, 3
        %s597 = sld [smem:[#allocation4 + %s596]]
        %s598 = scalar_lea.vmem %s3, %s597
        %v599 = vld [vmem:[%s598] sm:$0x1]
        %600 = vst.msk [vmem:[#allocation2 + $0x3] sm:$0x1] %vm584, %v599
        %s601 = sadd.s32 %s580, 4
        %s602 = sld [smem:[#allocation4 + %s601]]
        %s603 = scalar_lea.vmem %s3, %s602
        %v604 = vld [vmem:[%s603] sm:$0x1]
        %605 = vst.msk [vmem:[#allocation2 + $0x4] sm:$0x1] %vm584, %v604
        %s606 = sadd.s32 %s580, 5
        %s607 = sld [smem:[#allocation4 + %s606]]
        %s608 = scalar_lea.vmem %s3, %s607
        %v609 = vld [vmem:[%s608] sm:$0x1]
        %610 = vst.msk [vmem:[#allocation2 + $0x5] sm:$0x1] %vm584, %v609
        %s611 = sadd.s32 %s580, 6
        %s612 = sld [smem:[#allocation4 + %s611]]
        %s613 = scalar_lea.vmem %s3, %s612
        %v614 = vld [vmem:[%s613] sm:$0x1]
        %615 = vst.msk [vmem:[#allocation2 + $0x6] sm:$0x1] %vm584, %v614
        %s616 = sadd.s32 %s580, 7
        %s617 = sld [smem:[#allocation4 + %s616]]
        %s618 = scalar_lea.vmem %s3, %s617
        %v619 = vld [vmem:[%s618] sm:$0x1]
        %620 = vst.msk [vmem:[#allocation2 + $0x7] sm:$0x1] %vm584, %v619
        %s621 = sld [smem:[#allocation5 + %s44]]
        %s622 = scalar_lea.vmem %s4, %s621
        %v623 = vld [vmem:[%s622] sm:$0x1]
        %v624 = vld [vmem:[#allocation2] sm:$0xff]
        %v625 = vlaneseq
        %v626 = vshrl.u32 %v625, 7
        %v627 = vsub.s32 0, %v626
        %v628 = vrot.slane %v623, %v627
        %v629 = vadd.f32 %v624, %v628
        %v630 = vld [vmem:[%s5] sm:$0xff]
        %v631 = vadd.f32 %v629, %v630
        %v632 = vld [vmem:[%s6] sm:$0x1]
        %v633 = vld [vmem:[%s7] sm:$0x1]
        %vm634 = vcmask 261120
        %v635 = vsel %vm634, %v631, 0.0
        %636 = vadd.xlane.f32.xlu0 %v635
        %v637 = vpop.xlane.xlu0 %636
        %v638 = vrcp.pop 32.0
        %v639 = vmul.f32 %v637, %v638
        %v640 = vsub.f32 %v631, %v639
        %v641 = vmul.f32 %v640, %v640
        %v642 = vsel %vm634, %v641, 0.0
        %643 = vadd.xlane.f32.xlu0 %v642
        %v644 = vpop.xlane.xlu0 %643
        %v645 = vmul.f32 %v644, %v638
        %v646 = vadd.f32 %v645, 1e-12
        %v647 = vrsqrt.pop %v646
        %v648 = vmul.f32 %v640, %v647
        %v650 = vlaneseq
        %v651 = vshrl.u32 %v650, 7
        %v652 = vsub.s32 0, %v651
        %v653 = vrot.slane %v632, %v652
        %v655 = vmul.f32 %v648, %v653
        %v657 = vlaneseq
        %v658 = vshrl.u32 %v657, 7
        %v659 = vsub.s32 0, %v658
        %v660 = vrot.slane %v633, %v659
        %v662 = vadd.f32 %v655, %v660
        %v663 = vld [vmem:[%s579] sm:$0x1]
        %v664 = vld [vmem:[%s8] sm:$0xff]
        %v665 = vld [vmem:[%s8 + $0x8] sm:$0xff]
        %v666 = vld [vmem:[%s8 + $0x10] sm:$0xff]
        %v667 = vld [vmem:[%s8 + $0x18] sm:$0xff]
        %v668 = vld [vmem:[%s9] sm:$0x1]
        %v670 = vlaneseq
        %v671 = vshrl.u32 %v670, 7
        %v672 = vsub.s32 0, %v671
        %v673 = vrot.slane %v668, %v672
        %v676 = vsel %vm634, %v662, 0
        %678 = vmatprep.subr.mxu0 0.0
        %679 = vmatpush1.msra.mxu0 %v664
        %680 = vmatprep.subr.mxu0 0.0
        %681 = vmatpush1.msra.mxu0 %v665
        %682 = vmatprep.subr.mxu0 0.0
        %683 = vmatpush1.msra.mxu0 %v666
        %684 = vmatprep.subr.mxu0 0.0
        %685 = vmatpush1.msra.mxu0 %v667
        %686 = vmatprep.subr.mxu0 0.0
        %687 = vmatpush1.msra.mxu0 0.0
        %688 = vmatprep.subr.mxu0 0.0
        %689 = vmatpush1.msra.mxu0 0.0
        %690 = vmatprep.subr.mxu0 0.0
        %691 = vmatpush1.msra.mxu0 0.0
        %692 = vmatprep.subr.mxu0 0.0
        %693 = vmatpush1.msra.mxu0 0.0
        %694 = vmatprep.subr.mxu0 0.0
        %695 = vmatpush1.msra.mxu0 0.0
        %696 = vmatprep.subr.mxu0 0.0
        %697 = vmatpush1.msra.mxu0 0.0
        %698 = vmatprep.subr.mxu0 0.0
        %699 = vmatpush1.msra.mxu0 0.0
        %700 = vmatprep.subr.mxu0 0.0
        %701 = vmatpush1.msra.mxu0 0.0
        %702 = vmatprep.subr.mxu0 0.0
        %703 = vmatpush1.msra.mxu0 0.0
        %704 = vmatprep.subr.mxu0 0.0
        %705 = vmatpush1.msra.mxu0 0.0
        %706 = vmatprep.subr.mxu0 0.0
        %707 = vmatpush1.msra.mxu0 0.0
        %708 = vmatprep.subr.mxu0 0.0
        %709 = vmatpush1.msra.mxu0 0.0
        %710 = vmatprep.subr.mxu0 0.0
        %711 = vmatpush1.msra.mxu0 0.0
        %712 = vmatprep.subr.mxu0 0.0
        %713 = vmatpush1.msra.mxu0 0.0
        %714 = vmatprep.subr.mxu0 0.0
        %715 = vmatpush1.msra.mxu0 0.0
        %716 = vmatprep.subr.mxu0 0.0
        %717 = vmatpush1.msra.mxu0 0.0
        %718 = vmatprep.subr.mxu0 0.0
        %719 = vmatpush1.msra.mxu0 0.0
        %720 = vmatprep.subr.mxu0 0.0
        %721 = vmatpush1.msra.mxu0 0.0
        %722 = vmatprep.subr.mxu0 0.0
        %723 = vmatpush1.msra.mxu0 0.0
        %724 = vmatprep.subr.mxu0 0.0
        %725 = vmatpush1.msra.mxu0 0.0
        %726 = vmatprep.subr.mxu0 0.0
        %727 = vmatpush1.msra.mxu0 0.0
        %728 = vmatprep.subr.mxu0 0.0
        %729 = vmatpush1.msra.mxu0 0.0
        %730 = vmatprep.subr.mxu0 0.0
        %731 = vmatpush1.msra.mxu0 0.0
        %732 = vmatprep.subr.mxu0 0.0
        %733 = vmatpush1.msra.mxu0 0.0
        %734 = vmatprep.subr.mxu0 0.0
        %735 = vmatpush1.msra.mxu0 0.0
        %736 = vmatprep.subr.mxu0 0.0
        %737 = vmatpush1.msra.mxu0 0.0
        %738 = vmatprep.subr.mxu0 0.0
        %739 = vmatpush1.msra.mxu0 0.0
        %740 = vmatprep.subr.mxu0 0.0
        %741 = vmatpush1.msra.mxu0 0.0
        %742 = vmatprep.mubr.f32.mxu0 0.0
        %743 = vmatmul.mubr.f32.gmra.mrb[0].mxu0 %v676
        %v744 = vpop.f32.mrb[0].mxu0
        %v745 = vadd.f32 %v673, %v744
        %v746 = vpop.f32.mrb[0].mxu0
        %747 = vdwg.mxu0
        %749 = vrot.lane.b32.xlu0 %v745, 120
        %v750 = vpop.permute.xlu0 %749
        %751 = vrot.lane.b32.xlu0 %v745, 112
        %v752 = vpop.permute.xlu0 %751
        %753 = vrot.lane.b32.xlu0 %v745, 104
        %v754 = vpop.permute.xlu0 %753
        %v756 = vlaneseq
        %v757 = vshrl.u32 %v756, 7
        %v758 = vsub.s32 0, %v757
        %v759 = vrot.slane %v663, %v758
        %761 = vrot.lane.b32.xlu0 %v745, 96
        %v762 = vpop.permute.xlu0 %761
        %vm763 = vcmask 64512
        %v764 = vsel %vm763, %v745, 0
        %v766 = vsel %vm763, %v762, 0
        %768 = vmatprep.subr.mxu0 0.0
        %769 = vmatpush1.xpose.msra.mxu0 %v766
        %770 = vmatprep.subr.mxu0 0.0
        %771 = vmatpush1.xpose.msra.mxu0 0.0
        %772 = vmatprep.subr.mxu0 0.0
        %773 = vmatpush1.xpose.msra.mxu0 0.0
        %774 = vmatprep.subr.mxu0 0.0
        %775 = vmatpush1.xpose.msra.mxu0 0.0
        %776 = vmatprep.subr.mxu0 0.0
        %777 = vmatpush1.xpose.msra.mxu0 0.0
        %778 = vmatprep.subr.mxu0 0.0
        %779 = vmatpush1.xpose.msra.mxu0 0.0
        %780 = vmatprep.subr.mxu0 0.0
        %781 = vmatpush1.xpose.msra.mxu0 0.0
        %782 = vmatprep.subr.mxu0 0.0
        %783 = vmatpush1.xpose.msra.mxu0 0.0
        %784 = vmatprep.subr.mxu0 0.0
        %785 = vmatpush1.xpose.msra.mxu0 0.0
        %786 = vmatprep.subr.mxu0 0.0
        %787 = vmatpush1.xpose.msra.mxu0 0.0
        %788 = vmatprep.subr.mxu0 0.0
        %789 = vmatpush1.xpose.msra.mxu0 0.0
        %790 = vmatprep.subr.mxu0 0.0
        %791 = vmatpush1.xpose.msra.mxu0 0.0
        %792 = vmatprep.subr.mxu0 0.0
        %793 = vmatpush1.xpose.msra.mxu0 0.0
        %794 = vmatprep.subr.mxu0 0.0
        %795 = vmatpush1.xpose.msra.mxu0 0.0
        %796 = vmatprep.subr.mxu0 0.0
        %797 = vmatpush1.xpose.msra.mxu0 0.0
        %798 = vmatprep.subr.mxu0 0.0
        %799 = vmatpush1.xpose.msra.mxu0 0.0
        %800 = vmatprep.subr.mxu0 0.0
        %801 = vmatpush1.xpose.msra.mxu0 0.0
        %802 = vmatprep.subr.mxu0 0.0
        %803 = vmatpush1.xpose.msra.mxu0 0.0
        %804 = vmatprep.subr.mxu0 0.0
        %805 = vmatpush1.xpose.msra.mxu0 0.0
        %806 = vmatprep.subr.mxu0 0.0
        %807 = vmatpush1.xpose.msra.mxu0 0.0
        %808 = vmatprep.subr.mxu0 0.0
        %809 = vmatpush1.xpose.msra.mxu0 0.0
        %810 = vmatprep.subr.mxu0 0.0
        %811 = vmatpush1.xpose.msra.mxu0 0.0
        %812 = vmatprep.subr.mxu0 0.0
        %813 = vmatpush1.xpose.msra.mxu0 0.0
        %814 = vmatprep.subr.mxu0 0.0
        %815 = vmatpush1.xpose.msra.mxu0 0.0
        %816 = vmatprep.subr.mxu0 0.0
        %817 = vmatpush1.xpose.msra.mxu0 0.0
        %818 = vmatprep.subr.mxu0 0.0
        %819 = vmatpush1.xpose.msra.mxu0 0.0
        %820 = vmatprep.subr.mxu0 0.0
        %821 = vmatpush1.xpose.msra.mxu0 0.0
        %822 = vmatprep.subr.mxu0 0.0
        %823 = vmatpush1.xpose.msra.mxu0 0.0
        %824 = vmatprep.subr.mxu0 0.0
        %825 = vmatpush1.xpose.msra.mxu0 0.0
        %826 = vmatprep.subr.mxu0 0.0
        %827 = vmatpush1.xpose.msra.mxu0 0.0
        %828 = vmatprep.subr.mxu0 0.0
        %829 = vmatpush1.xpose.msra.mxu0 0.0
        %830 = vmatprep.subr.mxu0 0.0
        %831 = vmatpush1.xpose.msra.mxu0 0.0
        %832 = vmatprep.mubr.f32.mxu0 0.0
        %833 = vmatmul.mubr.f32.gmra.mrb[0].mxu0 %v764
        %v834 = vpop.f32.mrb[0].mxu0
        %v835 = vadd.f32 %v759, %v834
        %v836 = vpop.f32.mrb[0].mxu0
        %837 = vdwg.mxu0
        %838 = vrot.lane.b32.xlu0 %v750, 96
        %v839 = vpop.permute.xlu0 %838
        %v840 = vsel %vm763, %v750, 0
        %v842 = vsel %vm763, %v839, 0
        %844 = vmatprep.subr.mxu0 0.0
        %845 = vmatpush1.xpose.msra.mxu0 %v842
        %846 = vmatprep.subr.mxu0 0.0
        %847 = vmatpush1.xpose.msra.mxu0 0.0
        %848 = vmatprep.subr.mxu0 0.0
        %849 = vmatpush1.xpose.msra.mxu0 0.0
        %850 = vmatprep.subr.mxu0 0.0
        %851 = vmatpush1.xpose.msra.mxu0 0.0
        %852 = vmatprep.subr.mxu0 0.0
        %853 = vmatpush1.xpose.msra.mxu0 0.0
        %854 = vmatprep.subr.mxu0 0.0
        %855 = vmatpush1.xpose.msra.mxu0 0.0
        %856 = vmatprep.subr.mxu0 0.0
        %857 = vmatpush1.xpose.msra.mxu0 0.0
        %858 = vmatprep.subr.mxu0 0.0
        %859 = vmatpush1.xpose.msra.mxu0 0.0
        %860 = vmatprep.subr.mxu0 0.0
        %861 = vmatpush1.xpose.msra.mxu0 0.0
        %862 = vmatprep.subr.mxu0 0.0
        %863 = vmatpush1.xpose.msra.mxu0 0.0
        %864 = vmatprep.subr.mxu0 0.0
        %865 = vmatpush1.xpose.msra.mxu0 0.0
        %866 = vmatprep.subr.mxu0 0.0
        %867 = vmatpush1.xpose.msra.mxu0 0.0
        %868 = vmatprep.subr.mxu0 0.0
        %869 = vmatpush1.xpose.msra.mxu0 0.0
        %870 = vmatprep.subr.mxu0 0.0
        %871 = vmatpush1.xpose.msra.mxu0 0.0
        %872 = vmatprep.subr.mxu0 0.0
        %873 = vmatpush1.xpose.msra.mxu0 0.0
        %874 = vmatprep.subr.mxu0 0.0
        %875 = vmatpush1.xpose.msra.mxu0 0.0
        %876 = vmatprep.subr.mxu0 0.0
        %877 = vmatpush1.xpose.msra.mxu0 0.0
        %878 = vmatprep.subr.mxu0 0.0
        %879 = vmatpush1.xpose.msra.mxu0 0.0
        %880 = vmatprep.subr.mxu0 0.0
        %881 = vmatpush1.xpose.msra.mxu0 0.0
        %882 = vmatprep.subr.mxu0 0.0
        %883 = vmatpush1.xpose.msra.mxu0 0.0
        %884 = vmatprep.subr.mxu0 0.0
        %885 = vmatpush1.xpose.msra.mxu0 0.0
        %886 = vmatprep.subr.mxu0 0.0
        %887 = vmatpush1.xpose.msra.mxu0 0.0
        %888 = vmatprep.subr.mxu0 0.0
        %889 = vmatpush1.xpose.msra.mxu0 0.0
        %890 = vmatprep.subr.mxu0 0.0
        %891 = vmatpush1.xpose.msra.mxu0 0.0
        %892 = vmatprep.subr.mxu0 0.0
        %893 = vmatpush1.xpose.msra.mxu0 0.0
        %894 = vmatprep.subr.mxu0 0.0
        %895 = vmatpush1.xpose.msra.mxu0 0.0
        %896 = vmatprep.subr.mxu0 0.0
        %897 = vmatpush1.xpose.msra.mxu0 0.0
        %898 = vmatprep.subr.mxu0 0.0
        %899 = vmatpush1.xpose.msra.mxu0 0.0
        %900 = vmatprep.subr.mxu0 0.0
        %901 = vmatpush1.xpose.msra.mxu0 0.0
        %902 = vmatprep.subr.mxu0 0.0
        %903 = vmatpush1.xpose.msra.mxu0 0.0
        %904 = vmatprep.subr.mxu0 0.0
        %905 = vmatpush1.xpose.msra.mxu0 0.0
        %906 = vmatprep.subr.mxu0 0.0
        %907 = vmatpush1.xpose.msra.mxu0 0.0
        %908 = vmatprep.mubr.f32.mxu0 0.0
        %909 = vmatmul.mubr.f32.gmra.mrb[0].mxu0 %v840
        %v910 = vpop.f32.mrb[0].mxu0
        %v911 = vadd.f32 %v759, %v910
        %v912 = vpop.f32.mrb[0].mxu0
        %913 = vdwg.mxu0
        %914 = vrot.lane.b32.xlu0 %v752, 96
        %v915 = vpop.permute.xlu0 %914
        %v916 = vsel %vm763, %v752, 0
        %v918 = vsel %vm763, %v915, 0
        %920 = vmatprep.subr.mxu0 0.0
        %921 = vmatpush1.xpose.msra.mxu0 %v918
        %922 = vmatprep.subr.mxu0 0.0
        %923 = vmatpush1.xpose.msra.mxu0 0.0
        %924 = vmatprep.subr.mxu0 0.0
        %925 = vmatpush1.xpose.msra.mxu0 0.0
        %926 = vmatprep.subr.mxu0 0.0
        %927 = vmatpush1.xpose.msra.mxu0 0.0
        %928 = vmatprep.subr.mxu0 0.0
        %929 = vmatpush1.xpose.msra.mxu0 0.0
        %930 = vmatprep.subr.mxu0 0.0
        %931 = vmatpush1.xpose.msra.mxu0 0.0
        %932 = vmatprep.subr.mxu0 0.0
        %933 = vmatpush1.xpose.msra.mxu0 0.0
        %934 = vmatprep.subr.mxu0 0.0
        %935 = vmatpush1.xpose.msra.mxu0 0.0
        %936 = vmatprep.subr.mxu0 0.0
        %937 = vmatpush1.xpose.msra.mxu0 0.0
        %938 = vmatprep.subr.mxu0 0.0
        %939 = vmatpush1.xpose.msra.mxu0 0.0
        %940 = vmatprep.subr.mxu0 0.0
        %941 = vmatpush1.xpose.msra.mxu0 0.0
        %942 = vmatprep.subr.mxu0 0.0
        %943 = vmatpush1.xpose.msra.mxu0 0.0
        %944 = vmatprep.subr.mxu0 0.0
        %945 = vmatpush1.xpose.msra.mxu0 0.0
        %946 = vmatprep.subr.mxu0 0.0
        %947 = vmatpush1.xpose.msra.mxu0 0.0
        %948 = vmatprep.subr.mxu0 0.0
        %949 = vmatpush1.xpose.msra.mxu0 0.0
        %950 = vmatprep.subr.mxu0 0.0
        %951 = vmatpush1.xpose.msra.mxu0 0.0
        %952 = vmatprep.subr.mxu0 0.0
        %953 = vmatpush1.xpose.msra.mxu0 0.0
        %954 = vmatprep.subr.mxu0 0.0
        %955 = vmatpush1.xpose.msra.mxu0 0.0
        %956 = vmatprep.subr.mxu0 0.0
        %957 = vmatpush1.xpose.msra.mxu0 0.0
        %958 = vmatprep.subr.mxu0 0.0
        %959 = vmatpush1.xpose.msra.mxu0 0.0
        %960 = vmatprep.subr.mxu0 0.0
        %961 = vmatpush1.xpose.msra.mxu0 0.0
        %962 = vmatprep.subr.mxu0 0.0
        %963 = vmatpush1.xpose.msra.mxu0 0.0
        %964 = vmatprep.subr.mxu0 0.0
        %965 = vmatpush1.xpose.msra.mxu0 0.0
        %966 = vmatprep.subr.mxu0 0.0
        %967 = vmatpush1.xpose.msra.mxu0 0.0
        %968 = vmatprep.subr.mxu0 0.0
        %969 = vmatpush1.xpose.msra.mxu0 0.0
        %970 = vmatprep.subr.mxu0 0.0
        %971 = vmatpush1.xpose.msra.mxu0 0.0
        %972 = vmatprep.subr.mxu0 0.0
        %973 = vmatpush1.xpose.msra.mxu0 0.0
        %974 = vmatprep.subr.mxu0 0.0
        %975 = vmatpush1.xpose.msra.mxu0 0.0
        %976 = vmatprep.subr.mxu0 0.0
        %977 = vmatpush1.xpose.msra.mxu0 0.0
        %978 = vmatprep.subr.mxu0 0.0
        %979 = vmatpush1.xpose.msra.mxu0 0.0
        %980 = vmatprep.subr.mxu0 0.0
        %981 = vmatpush1.xpose.msra.mxu0 0.0
        %982 = vmatprep.subr.mxu0 0.0
        %983 = vmatpush1.xpose.msra.mxu0 0.0
        %984 = vmatprep.mubr.f32.mxu0 0.0
        %985 = vmatmul.mubr.f32.gmra.mrb[0].mxu0 %v916
        %v986 = vpop.f32.mrb[0].mxu0
        %v987 = vadd.f32 %v759, %v986
        %v988 = vpop.f32.mrb[0].mxu0
        %989 = vdwg.mxu0
        %990 = vrot.lane.b32.xlu0 %v754, 96
        %v991 = vpop.permute.xlu0 %990
        %v992 = vsel %vm763, %v754, 0
        %v994 = vsel %vm763, %v991, 0
        %996 = vmatprep.subr.mxu0 0.0
        %997 = vmatpush1.xpose.msra.mxu0 %v994
        %998 = vmatprep.subr.mxu0 0.0
        %999 = vmatpush1.xpose.msra.mxu0 0.0
        %1000 = vmatprep.subr.mxu0 0.0
        %1001 = vmatpush1.xpose.msra.mxu0 0.0
        %1002 = vmatprep.subr.mxu0 0.0
        %1003 = vmatpush1.xpose.msra.mxu0 0.0
        %1004 = vmatprep.subr.mxu0 0.0
        %1005 = vmatpush1.xpose.msra.mxu0 0.0
        %1006 = vmatprep.subr.mxu0 0.0
        %1007 = vmatpush1.xpose.msra.mxu0 0.0
        %1008 = vmatprep.subr.mxu0 0.0
        %1009 = vmatpush1.xpose.msra.mxu0 0.0
        %1010 = vmatprep.subr.mxu0 0.0
        %1011 = vmatpush1.xpose.msra.mxu0 0.0
        %1012 = vmatprep.subr.mxu0 0.0
        %1013 = vmatpush1.xpose.msra.mxu0 0.0
        %1014 = vmatprep.subr.mxu0 0.0
        %1015 = vmatpush1.xpose.msra.mxu0 0.0
        %1016 = vmatprep.subr.mxu0 0.0
        %1017 = vmatpush1.xpose.msra.mxu0 0.0
        %1018 = vmatprep.subr.mxu0 0.0
        %1019 = vmatpush1.xpose.msra.mxu0 0.0
        %1020 = vmatprep.subr.mxu0 0.0
        %1021 = vmatpush1.xpose.msra.mxu0 0.0
        %1022 = vmatprep.subr.mxu0 0.0
        %1023 = vmatpush1.xpose.msra.mxu0 0.0
        %1024 = vmatprep.subr.mxu0 0.0
        %1025 = vmatpush1.xpose.msra.mxu0 0.0
        %1026 = vmatprep.subr.mxu0 0.0
        %1027 = vmatpush1.xpose.msra.mxu0 0.0
        %1028 = vmatprep.subr.mxu0 0.0
        %1029 = vmatpush1.xpose.msra.mxu0 0.0
        %1030 = vmatprep.subr.mxu0 0.0
        %1031 = vmatpush1.xpose.msra.mxu0 0.0
        %1032 = vmatprep.subr.mxu0 0.0
        %1033 = vmatpush1.xpose.msra.mxu0 0.0
        %1034 = vmatprep.subr.mxu0 0.0
        %1035 = vmatpush1.xpose.msra.mxu0 0.0
        %1036 = vmatprep.subr.mxu0 0.0
        %1037 = vmatpush1.xpose.msra.mxu0 0.0
        %1038 = vmatprep.subr.mxu0 0.0
        %1039 = vmatpush1.xpose.msra.mxu0 0.0
        %1040 = vmatprep.subr.mxu0 0.0
        %1041 = vmatpush1.xpose.msra.mxu0 0.0
        %1042 = vmatprep.subr.mxu0 0.0
        %1043 = vmatpush1.xpose.msra.mxu0 0.0
        %1044 = vmatprep.subr.mxu0 0.0
        %1045 = vmatpush1.xpose.msra.mxu0 0.0
        %1046 = vmatprep.subr.mxu0 0.0
        %1047 = vmatpush1.xpose.msra.mxu0 0.0
        %1048 = vmatprep.subr.mxu0 0.0
        %1049 = vmatpush1.xpose.msra.mxu0 0.0
        %1050 = vmatprep.subr.mxu0 0.0
        %1051 = vmatpush1.xpose.msra.mxu0 0.0
        %1052 = vmatprep.subr.mxu0 0.0
        %1053 = vmatpush1.xpose.msra.mxu0 0.0
        %1054 = vmatprep.subr.mxu0 0.0
        %1055 = vmatpush1.xpose.msra.mxu0 0.0
        %1056 = vmatprep.subr.mxu0 0.0
        %1057 = vmatpush1.xpose.msra.mxu0 0.0
        %1058 = vmatprep.subr.mxu0 0.0
        %1059 = vmatpush1.xpose.msra.mxu0 0.0
        %1060 = vmatprep.mubr.f32.mxu0 0.0
        %1061 = vmatmul.mubr.f32.gmra.mrb[0].mxu0 %v992
        %v1062 = vpop.f32.mrb[0].mxu0
        %v1063 = vadd.f32 %v759, %v1062
        %v1064 = vpop.f32.mrb[0].mxu0
        %1065 = vdwg.mxu0
        %v1066 = vsel %vm763, %v835, -inf
        %1067 = vmax.xlane.f32.xlu0 %v1066
        %v1068 = vpop.xlane.xlu0 %1067
        %v1069 = vsel %vm763, %v911, -inf
        %1070 = vmax.xlane.f32.xlu0 %v1069
        %v1071 = vpop.xlane.xlu0 %1070
        %v1072 = vsel %vm763, %v987, -inf
        %1073 = vmax.xlane.f32.xlu0 %v1072
        %v1074 = vpop.xlane.xlu0 %1073
        %v1075 = vsel %vm763, %v1063, -inf
        %1076 = vmax.xlane.f32.xlu0 %v1075
        %v1077 = vpop.xlane.xlu0 %1076
        %v1078 = vsub.f32 %v835, %v1068
        %v1079 = vsub.f32 %v911, %v1071
        %v1080 = vsub.f32 %v987, %v1074
        %v1081 = vsub.f32 %v1063, %v1077
        %v1082 = vmul.f32 %v1078, 1.442695
        %v1083 = vpow.pop %v1082
        %v1084 = vmul.f32 %v1079, 1.442695
        %v1085 = vpow.pop %v1084
        %v1086 = vmul.f32 %v1080, 1.442695
        %v1087 = vpow.pop %v1086
        %v1088 = vmul.f32 %v1081, 1.442695
        %v1089 = vpow.pop %v1088
        %v1090 = vsel %vm763, %v1083, 0.0
        %1091 = vadd.xlane.f32.xlu0 %v1090
        %v1092 = vpop.xlane.xlu0 %1091
        %v1093 = vsel %vm763, %v1085, 0.0
        %1094 = vadd.xlane.f32.xlu0 %v1093
        %v1095 = vpop.xlane.xlu0 %1094
        %v1096 = vsel %vm763, %v1087, 0.0
        %1097 = vadd.xlane.f32.xlu0 %v1096
        %v1098 = vpop.xlane.xlu0 %1097
        %v1099 = vsel %vm763, %v1089, 0.0
        %1100 = vadd.xlane.f32.xlu0 %v1099
        %v1101 = vpop.xlane.xlu0 %1100
        %v1102 = vrcp.pop %v1092
        %v1103 = vrcp.pop %v1095
        %v1104 = vrcp.pop %v1098
        %v1105 = vrcp.pop %v1101
        %v1106 = vmul.f32 %v1083, %v1102
        %v1107 = vmul.f32 %v1085, %v1103
        %v1108 = vmul.f32 %v1087, %v1104
        %v1109 = vmul.f32 %v1089, %v1105
        %1110 = vrot.lane.b32.xlu0 %v745, 64
        %v1111 = vpop.permute.xlu0 %1110
        %v1114 = vsel %vm763, %v1106, 0
        %1116 = vmatprep.subr.mxu0 0.0
        %1117 = vmatpush1.msra.mxu0 %v1111
        %1118 = vmatprep.subr.mxu0 0.0
        %1119 = vmatpush1.msra.mxu0 0.0
        %1120 = vmatprep.subr.mxu0 0.0
        %1121 = vmatpush1.msra.mxu0 0.0
        %1122 = vmatprep.subr.mxu0 0.0
        %1123 = vmatpush1.msra.mxu0 0.0
        %1124 = vmatprep.subr.mxu0 0.0
        %1125 = vmatpush1.msra.mxu0 0.0
        %1126 = vmatprep.subr.mxu0 0.0
        %1127 = vmatpush1.msra.mxu0 0.0
        %1128 = vmatprep.subr.mxu0 0.0
        %1129 = vmatpush1.msra.mxu0 0.0
        %1130 = vmatprep.subr.mxu0 0.0
        %1131 = vmatpush1.msra.mxu0 0.0
        %1132 = vmatprep.subr.mxu0 0.0
        %1133 = vmatpush1.msra.mxu0 0.0
        %1134 = vmatprep.subr.mxu0 0.0
        %1135 = vmatpush1.msra.mxu0 0.0
        %1136 = vmatprep.subr.mxu0 0.0
        %1137 = vmatpush1.msra.mxu0 0.0
        %1138 = vmatprep.subr.mxu0 0.0
        %1139 = vmatpush1.msra.mxu0 0.0
        %1140 = vmatprep.subr.mxu0 0.0
        %1141 = vmatpush1.msra.mxu0 0.0
        %1142 = vmatprep.subr.mxu0 0.0
        %1143 = vmatpush1.msra.mxu0 0.0
        %1144 = vmatprep.subr.mxu0 0.0
        %1145 = vmatpush1.msra.mxu0 0.0
        %1146 = vmatprep.subr.mxu0 0.0
        %1147 = vmatpush1.msra.mxu0 0.0
        %1148 = vmatprep.subr.mxu0 0.0
        %1149 = vmatpush1.msra.mxu0 0.0
        %1150 = vmatprep.subr.mxu0 0.0
        %1151 = vmatpush1.msra.mxu0 0.0
        %1152 = vmatprep.subr.mxu0 0.0
        %1153 = vmatpush1.msra.mxu0 0.0
        %1154 = vmatprep.subr.mxu0 0.0
        %1155 = vmatpush1.msra.mxu0 0.0
        %1156 = vmatprep.subr.mxu0 0.0
        %1157 = vmatpush1.msra.mxu0 0.0
        %1158 = vmatprep.subr.mxu0 0.0
        %1159 = vmatpush1.msra.mxu0 0.0
        %1160 = vmatprep.subr.mxu0 0.0
        %1161 = vmatpush1.msra.mxu0 0.0
        %1162 = vmatprep.subr.mxu0 0.0
        %1163 = vmatpush1.msra.mxu0 0.0
        %1164 = vmatprep.subr.mxu0 0.0
        %1165 = vmatpush1.msra.mxu0 0.0
        %1166 = vmatprep.subr.mxu0 0.0
        %1167 = vmatpush1.msra.mxu0 0.0
        %1168 = vmatprep.subr.mxu0 0.0
        %1169 = vmatpush1.msra.mxu0 0.0
        %1170 = vmatprep.subr.mxu0 0.0
        %1171 = vmatpush1.msra.mxu0 0.0
        %1172 = vmatprep.subr.mxu0 0.0
        %1173 = vmatpush1.msra.mxu0 0.0
        %1174 = vmatprep.subr.mxu0 0.0
        %1175 = vmatpush1.msra.mxu0 0.0
        %1176 = vmatprep.subr.mxu0 0.0
        %1177 = vmatpush1.msra.mxu0 0.0
        %1178 = vmatprep.subr.mxu0 0.0
        %1179 = vmatpush1.msra.mxu0 0.0
        %1180 = vmatprep.mubr.f32.mxu0 0.0
        %1181 = vmatmul.mubr.f32.gmra.mrb[0].mxu0 %v1114
        %v1182 = vpop.f32.mrb[0].mxu0
        %v1183 = vadd.f32 0.0, %v1182
        %v1184 = vpop.f32.mrb[0].mxu0
        %1185 = vdwg.mxu0
        %1186 = vrot.lane.b32.xlu0 %v750, 64
        %v1187 = vpop.permute.xlu0 %1186
        %v1190 = vsel %vm763, %v1107, 0
        %1192 = vmatprep.subr.mxu0 0.0
        %1193 = vmatpush1.msra.mxu0 %v1187
        %1194 = vmatprep.subr.mxu0 0.0
        %1195 = vmatpush1.msra.mxu0 0.0
        %1196 = vmatprep.subr.mxu0 0.0
        %1197 = vmatpush1.msra.mxu0 0.0
        %1198 = vmatprep.subr.mxu0 0.0
        %1199 = vmatpush1.msra.mxu0 0.0
        %1200 = vmatprep.subr.mxu0 0.0
        %1201 = vmatpush1.msra.mxu0 0.0
        %1202 = vmatprep.subr.mxu0 0.0
        %1203 = vmatpush1.msra.mxu0 0.0
        %1204 = vmatprep.subr.mxu0 0.0
        %1205 = vmatpush1.msra.mxu0 0.0
        %1206 = vmatprep.subr.mxu0 0.0
        %1207 = vmatpush1.msra.mxu0 0.0
        %1208 = vmatprep.subr.mxu0 0.0
        %1209 = vmatpush1.msra.mxu0 0.0
        %1210 = vmatprep.subr.mxu0 0.0
        %1211 = vmatpush1.msra.mxu0 0.0
        %1212 = vmatprep.subr.mxu0 0.0
        %1213 = vmatpush1.msra.mxu0 0.0
        %1214 = vmatprep.subr.mxu0 0.0
        %1215 = vmatpush1.msra.mxu0 0.0
        %1216 = vmatprep.subr.mxu0 0.0
        %1217 = vmatpush1.msra.mxu0 0.0
        %1218 = vmatprep.subr.mxu0 0.0
        %1219 = vmatpush1.msra.mxu0 0.0
        %1220 = vmatprep.subr.mxu0 0.0
        %1221 = vmatpush1.msra.mxu0 0.0
        %1222 = vmatprep.subr.mxu0 0.0
        %1223 = vmatpush1.msra.mxu0 0.0
        %1224 = vmatprep.subr.mxu0 0.0
        %1225 = vmatpush1.msra.mxu0 0.0
        %1226 = vmatprep.subr.mxu0 0.0
        %1227 = vmatpush1.msra.mxu0 0.0
        %1228 = vmatprep.subr.mxu0 0.0
        %1229 = vmatpush1.msra.mxu0 0.0
        %1230 = vmatprep.subr.mxu0 0.0
        %1231 = vmatpush1.msra.mxu0 0.0
        %1232 = vmatprep.subr.mxu0 0.0
        %1233 = vmatpush1.msra.mxu0 0.0
        %1234 = vmatprep.subr.mxu0 0.0
        %1235 = vmatpush1.msra.mxu0 0.0
        %1236 = vmatprep.subr.mxu0 0.0
        %1237 = vmatpush1.msra.mxu0 0.0
        %1238 = vmatprep.subr.mxu0 0.0
        %1239 = vmatpush1.msra.mxu0 0.0
        %1240 = vmatprep.subr.mxu0 0.0
        %1241 = vmatpush1.msra.mxu0 0.0
        %1242 = vmatprep.subr.mxu0 0.0
        %1243 = vmatpush1.msra.mxu0 0.0
        %1244 = vmatprep.subr.mxu0 0.0
        %1245 = vmatpush1.msra.mxu0 0.0
        %1246 = vmatprep.subr.mxu0 0.0
        %1247 = vmatpush1.msra.mxu0 0.0
        %1248 = vmatprep.subr.mxu0 0.0
        %1249 = vmatpush1.msra.mxu0 0.0
        %1250 = vmatprep.subr.mxu0 0.0
        %1251 = vmatpush1.msra.mxu0 0.0
        %1252 = vmatprep.subr.mxu0 0.0
        %1253 = vmatpush1.msra.mxu0 0.0
        %1254 = vmatprep.subr.mxu0 0.0
        %1255 = vmatpush1.msra.mxu0 0.0
        %1256 = vmatprep.mubr.f32.mxu0 0.0
        %1257 = vmatmul.mubr.f32.gmra.mrb[0].mxu0 %v1190
        %v1258 = vpop.f32.mrb[0].mxu0
        %v1259 = vadd.f32 0.0, %v1258
        %v1260 = vpop.f32.mrb[0].mxu0
        %1261 = vdwg.mxu0
        %1262 = vrot.lane.b32.xlu0 %v752, 64
        %v1263 = vpop.permute.xlu0 %1262
        %v1266 = vsel %vm763, %v1108, 0
        %1268 = vmatprep.subr.mxu0 0.0
        %1269 = vmatpush1.msra.mxu0 %v1263
        %1270 = vmatprep.subr.mxu0 0.0
        %1271 = vmatpush1.msra.mxu0 0.0
        %1272 = vmatprep.subr.mxu0 0.0
        %1273 = vmatpush1.msra.mxu0 0.0
        %1274 = vmatprep.subr.mxu0 0.0
        %1275 = vmatpush1.msra.mxu0 0.0
        %1276 = vmatprep.subr.mxu0 0.0
        %1277 = vmatpush1.msra.mxu0 0.0
        %1278 = vmatprep.subr.mxu0 0.0
        %1279 = vmatpush1.msra.mxu0 0.0
        %1280 = vmatprep.subr.mxu0 0.0
        %1281 = vmatpush1.msra.mxu0 0.0
        %1282 = vmatprep.subr.mxu0 0.0
        %1283 = vmatpush1.msra.mxu0 0.0
        %1284 = vmatprep.subr.mxu0 0.0
        %1285 = vmatpush1.msra.mxu0 0.0
        %1286 = vmatprep.subr.mxu0 0.0
        %1287 = vmatpush1.msra.mxu0 0.0
        %1288 = vmatprep.subr.mxu0 0.0
        %1289 = vmatpush1.msra.mxu0 0.0
        %1290 = vmatprep.subr.mxu0 0.0
        %1291 = vmatpush1.msra.mxu0 0.0
        %1292 = vmatprep.subr.mxu0 0.0
        %1293 = vmatpush1.msra.mxu0 0.0
        %1294 = vmatprep.subr.mxu0 0.0
        %1295 = vmatpush1.msra.mxu0 0.0
        %1296 = vmatprep.subr.mxu0 0.0
        %1297 = vmatpush1.msra.mxu0 0.0
        %1298 = vmatprep.subr.mxu0 0.0
        %1299 = vmatpush1.msra.mxu0 0.0
        %1300 = vmatprep.subr.mxu0 0.0
        %1301 = vmatpush1.msra.mxu0 0.0
        %1302 = vmatprep.subr.mxu0 0.0
        %1303 = vmatpush1.msra.mxu0 0.0
        %1304 = vmatprep.subr.mxu0 0.0
        %1305 = vmatpush1.msra.mxu0 0.0
        %1306 = vmatprep.subr.mxu0 0.0
        %1307 = vmatpush1.msra.mxu0 0.0
        %1308 = vmatprep.subr.mxu0 0.0
        %1309 = vmatpush1.msra.mxu0 0.0
        %1310 = vmatprep.subr.mxu0 0.0
        %1311 = vmatpush1.msra.mxu0 0.0
        %1312 = vmatprep.subr.mxu0 0.0
        %1313 = vmatpush1.msra.mxu0 0.0
        %1314 = vmatprep.subr.mxu0 0.0
        %1315 = vmatpush1.msra.mxu0 0.0
        %1316 = vmatprep.subr.mxu0 0.0
        %1317 = vmatpush1.msra.mxu0 0.0
        %1318 = vmatprep.subr.mxu0 0.0
        %1319 = vmatpush1.msra.mxu0 0.0
        %1320 = vmatprep.subr.mxu0 0.0
        %1321 = vmatpush1.msra.mxu0 0.0
        %1322 = vmatprep.subr.mxu0 0.0
        %1323 = vmatpush1.msra.mxu0 0.0
        %1324 = vmatprep.subr.mxu0 0.0
        %1325 = vmatpush1.msra.mxu0 0.0
        %1326 = vmatprep.subr.mxu0 0.0
        %1327 = vmatpush1.msra.mxu0 0.0
        %1328 = vmatprep.subr.mxu0 0.0
        %1329 = vmatpush1.msra.mxu0 0.0
        %1330 = vmatprep.subr.mxu0 0.0
        %1331 = vmatpush1.msra.mxu0 0.0
        %1332 = vmatprep.mubr.f32.mxu0 0.0
        %1333 = vmatmul.mubr.f32.gmra.mrb[0].mxu0 %v1266
        %v1334 = vpop.f32.mrb[0].mxu0
        %v1335 = vadd.f32 0.0, %v1334
        %v1336 = vpop.f32.mrb[0].mxu0
        %1337 = vdwg.mxu0
        %1338 = vrot.lane.b32.xlu0 %v754, 64
        %v1339 = vpop.permute.xlu0 %1338
        %v1342 = vsel %vm763, %v1109, 0
        %1344 = vmatprep.subr.mxu0 0.0
        %1345 = vmatpush1.msra.mxu0 %v1339
        %1346 = vmatprep.subr.mxu0 0.0
        %1347 = vmatpush1.msra.mxu0 0.0
        %1348 = vmatprep.subr.mxu0 0.0
        %1349 = vmatpush1.msra.mxu0 0.0
        %1350 = vmatprep.subr.mxu0 0.0
        %1351 = vmatpush1.msra.mxu0 0.0
        %1352 = vmatprep.subr.mxu0 0.0
        %1353 = vmatpush1.msra.mxu0 0.0
        %1354 = vmatprep.subr.mxu0 0.0
        %1355 = vmatpush1.msra.mxu0 0.0
        %1356 = vmatprep.subr.mxu0 0.0
        %1357 = vmatpush1.msra.mxu0 0.0
        %1358 = vmatprep.subr.mxu0 0.0
        %1359 = vmatpush1.msra.mxu0 0.0
        %1360 = vmatprep.subr.mxu0 0.0
        %1361 = vmatpush1.msra.mxu0 0.0
        %1362 = vmatprep.subr.mxu0 0.0
        %1363 = vmatpush1.msra.mxu0 0.0
        %1364 = vmatprep.subr.mxu0 0.0
        %1365 = vmatpush1.msra.mxu0 0.0
        %1366 = vmatprep.subr.mxu0 0.0
        %1367 = vmatpush1.msra.mxu0 0.0
        %1368 = vmatprep.subr.mxu0 0.0
        %1369 = vmatpush1.msra.mxu0 0.0
        %1370 = vmatprep.subr.mxu0 0.0
        %1371 = vmatpush1.msra.mxu0 0.0
        %1372 = vmatprep.subr.mxu0 0.0
        %1373 = vmatpush1.msra.mxu0 0.0
        %1374 = vmatprep.subr.mxu0 0.0
        %1375 = vmatpush1.msra.mxu0 0.0
        %1376 = vmatprep.subr.mxu0 0.0
        %1377 = vmatpush1.msra.mxu0 0.0
        %1378 = vmatprep.subr.mxu0 0.0
        %1379 = vmatpush1.msra.mxu0 0.0
        %1380 = vmatprep.subr.mxu0 0.0
        %1381 = vmatpush1.msra.mxu0 0.0
        %1382 = vmatprep.subr.mxu0 0.0
        %1383 = vmatpush1.msra.mxu0 0.0
        %1384 = vmatprep.subr.mxu0 0.0
        %1385 = vmatpush1.msra.mxu0 0.0
        %1386 = vmatprep.subr.mxu0 0.0
        %1387 = vmatpush1.msra.mxu0 0.0
        %1388 = vmatprep.subr.mxu0 0.0
        %1389 = vmatpush1.msra.mxu0 0.0
        %1390 = vmatprep.subr.mxu0 0.0
        %1391 = vmatpush1.msra.mxu0 0.0
        %1392 = vmatprep.subr.mxu0 0.0
        %1393 = vmatpush1.msra.mxu0 0.0
        %1394 = vmatprep.subr.mxu0 0.0
        %1395 = vmatpush1.msra.mxu0 0.0
        %1396 = vmatprep.subr.mxu0 0.0
        %1397 = vmatpush1.msra.mxu0 0.0
        %1398 = vmatprep.subr.mxu0 0.0
        %1399 = vmatpush1.msra.mxu0 0.0
        %1400 = vmatprep.subr.mxu0 0.0
        %1401 = vmatpush1.msra.mxu0 0.0
        %1402 = vmatprep.subr.mxu0 0.0
        %1403 = vmatpush1.msra.mxu0 0.0
        %1404 = vmatprep.subr.mxu0 0.0
        %1405 = vmatpush1.msra.mxu0 0.0
        %1406 = vmatprep.subr.mxu0 0.0
        %1407 = vmatpush1.msra.mxu0 0.0
        %1408 = vmatprep.mubr.f32.mxu0 0.0
        %1409 = vmatmul.mubr.f32.gmra.mrb[0].mxu0 %v1342
        %v1410 = vpop.f32.mrb[0].mxu0
        %v1411 = vadd.f32 0.0, %v1410
        %v1412 = vpop.f32.mrb[0].mxu0
        %1413 = vdwg.mxu0
        %v1414 = vld [vmem:[%s11] sm:$0x1]
        %v1415 = vld [vmem:[%s10] sm:$0xff]
        %v1417 = vsel %vm763, %v1183, 0
        %1419 = vmatprep.subr.mxu0 0.0
        %1420 = vmatpush1.msra.mxu0 %v1415
        %1421 = vmatprep.subr.mxu0 0.0
        %1422 = vmatpush1.msra.mxu0 0.0
        %1423 = vmatprep.subr.mxu0 0.0
        %1424 = vmatpush1.msra.mxu0 0.0
        %1425 = vmatprep.subr.mxu0 0.0
        %1426 = vmatpush1.msra.mxu0 0.0
        %1427 = vmatprep.subr.mxu0 0.0
        %1428 = vmatpush1.msra.mxu0 0.0
        %1429 = vmatprep.subr.mxu0 0.0
        %1430 = vmatpush1.msra.mxu0 0.0
        %1431 = vmatprep.subr.mxu0 0.0
        %1432 = vmatpush1.msra.mxu0 0.0
        %1433 = vmatprep.subr.mxu0 0.0
        %1434 = vmatpush1.msra.mxu0 0.0
        %1435 = vmatprep.subr.mxu0 0.0
        %1436 = vmatpush1.msra.mxu0 0.0
        %1437 = vmatprep.subr.mxu0 0.0
        %1438 = vmatpush1.msra.mxu0 0.0
        %1439 = vmatprep.subr.mxu0 0.0
        %1440 = vmatpush1.msra.mxu0 0.0
        %1441 = vmatprep.subr.mxu0 0.0
        %1442 = vmatpush1.msra.mxu0 0.0
        %1443 = vmatprep.subr.mxu0 0.0
        %1444 = vmatpush1.msra.mxu0 0.0
        %1445 = vmatprep.subr.mxu0 0.0
        %1446 = vmatpush1.msra.mxu0 0.0
        %1447 = vmatprep.subr.mxu0 0.0
        %1448 = vmatpush1.msra.mxu0 0.0
        %1449 = vmatprep.subr.mxu0 0.0
        %1450 = vmatpush1.msra.mxu0 0.0
        %1451 = vmatprep.subr.mxu0 0.0
        %1452 = vmatpush1.msra.mxu0 0.0
        %1453 = vmatprep.subr.mxu0 0.0
        %1454 = vmatpush1.msra.mxu0 0.0
        %1455 = vmatprep.subr.mxu0 0.0
        %1456 = vmatpush1.msra.mxu0 0.0
        %1457 = vmatprep.subr.mxu0 0.0
        %1458 = vmatpush1.msra.mxu0 0.0
        %1459 = vmatprep.subr.mxu0 0.0
        %1460 = vmatpush1.msra.mxu0 0.0
        %1461 = vmatprep.subr.mxu0 0.0
        %1462 = vmatpush1.msra.mxu0 0.0
        %1463 = vmatprep.subr.mxu0 0.0
        %1464 = vmatpush1.msra.mxu0 0.0
        %1465 = vmatprep.subr.mxu0 0.0
        %1466 = vmatpush1.msra.mxu0 0.0
        %1467 = vmatprep.subr.mxu0 0.0
        %1468 = vmatpush1.msra.mxu0 0.0
        %1469 = vmatprep.subr.mxu0 0.0
        %1470 = vmatpush1.msra.mxu0 0.0
        %1471 = vmatprep.subr.mxu0 0.0
        %1472 = vmatpush1.msra.mxu0 0.0
        %1473 = vmatprep.subr.mxu0 0.0
        %1474 = vmatpush1.msra.mxu0 0.0
        %1475 = vmatprep.subr.mxu0 0.0
        %1476 = vmatpush1.msra.mxu0 0.0
        %1477 = vmatprep.subr.mxu0 0.0
        %1478 = vmatpush1.msra.mxu0 0.0
        %1479 = vmatprep.subr.mxu0 0.0
        %1480 = vmatpush1.msra.mxu0 0.0
        %1481 = vmatprep.subr.mxu0 0.0
        %1482 = vmatpush1.msra.mxu0 0.0
        %1483 = vmatprep.mubr.f32.mxu0 0.0
        %1484 = vmatmul.mubr.f32.gmra.mrb[0].mxu0 %v1417
        %v1485 = vpop.f32.mrb[0].mxu0
        %v1486 = vadd.f32 0.0, %v1485
        %v1487 = vpop.f32.mrb[0].mxu0
        %1488 = vdwg.mxu0
        %v1490 = vlaneseq
        %v1491 = vshrl.u32 %v1490, 7
        %v1492 = vsub.s32 0, %v1491
        %v1493 = vrot.slane %v1414, %v1492
        %v1495 = vadd.f32 %v1493, %v1486
        %s1496 = scalar_lea.vmem %s10, 8
        %v1497 = vld [vmem:[%s1496] sm:$0xff]
        %v1499 = vsel %vm763, %v1259, 0
        %1501 = vmatprep.subr.mxu0 0.0
        %1502 = vmatpush1.msra.mxu0 %v1497
        %1503 = vmatprep.subr.mxu0 0.0
        %1504 = vmatpush1.msra.mxu0 0.0
        %1505 = vmatprep.subr.mxu0 0.0
        %1506 = vmatpush1.msra.mxu0 0.0
        %1507 = vmatprep.subr.mxu0 0.0
        %1508 = vmatpush1.msra.mxu0 0.0
        %1509 = vmatprep.subr.mxu0 0.0
        %1510 = vmatpush1.msra.mxu0 0.0
        %1511 = vmatprep.subr.mxu0 0.0
        %1512 = vmatpush1.msra.mxu0 0.0
        %1513 = vmatprep.subr.mxu0 0.0
        %1514 = vmatpush1.msra.mxu0 0.0
        %1515 = vmatprep.subr.mxu0 0.0
        %1516 = vmatpush1.msra.mxu0 0.0
        %1517 = vmatprep.subr.mxu0 0.0
        %1518 = vmatpush1.msra.mxu0 0.0
        %1519 = vmatprep.subr.mxu0 0.0
        %1520 = vmatpush1.msra.mxu0 0.0
        %1521 = vmatprep.subr.mxu0 0.0
        %1522 = vmatpush1.msra.mxu0 0.0
        %1523 = vmatprep.subr.mxu0 0.0
        %1524 = vmatpush1.msra.mxu0 0.0
        %1525 = vmatprep.subr.mxu0 0.0
        %1526 = vmatpush1.msra.mxu0 0.0
        %1527 = vmatprep.subr.mxu0 0.0
        %1528 = vmatpush1.msra.mxu0 0.0
        %1529 = vmatprep.subr.mxu0 0.0
        %1530 = vmatpush1.msra.mxu0 0.0
        %1531 = vmatprep.subr.mxu0 0.0
        %1532 = vmatpush1.msra.mxu0 0.0
        %1533 = vmatprep.subr.mxu0 0.0
        %1534 = vmatpush1.msra.mxu0 0.0
        %1535 = vmatprep.subr.mxu0 0.0
        %1536 = vmatpush1.msra.mxu0 0.0
        %1537 = vmatprep.subr.mxu0 0.0
        %1538 = vmatpush1.msra.mxu0 0.0
        %1539 = vmatprep.subr.mxu0 0.0
        %1540 = vmatpush1.msra.mxu0 0.0
        %1541 = vmatprep.subr.mxu0 0.0
        %1542 = vmatpush1.msra.mxu0 0.0
        %1543 = vmatprep.subr.mxu0 0.0
        %1544 = vmatpush1.msra.mxu0 0.0
        %1545 = vmatprep.subr.mxu0 0.0
        %1546 = vmatpush1.msra.mxu0 0.0
        %1547 = vmatprep.subr.mxu0 0.0
        %1548 = vmatpush1.msra.mxu0 0.0
        %1549 = vmatprep.subr.mxu0 0.0
        %1550 = vmatpush1.msra.mxu0 0.0
        %1551 = vmatprep.subr.mxu0 0.0
        %1552 = vmatpush1.msra.mxu0 0.0
        %1553 = vmatprep.subr.mxu0 0.0
        %1554 = vmatpush1.msra.mxu0 0.0
        %1555 = vmatprep.subr.mxu0 0.0
        %1556 = vmatpush1.msra.mxu0 0.0
        %1557 = vmatprep.subr.mxu0 0.0
        %1558 = vmatpush1.msra.mxu0 0.0
        %1559 = vmatprep.subr.mxu0 0.0
        %1560 = vmatpush1.msra.mxu0 0.0
        %1561 = vmatprep.subr.mxu0 0.0
        %1562 = vmatpush1.msra.mxu0 0.0
        %1563 = vmatprep.subr.mxu0 0.0
        %1564 = vmatpush1.msra.mxu0 0.0
        %1565 = vmatprep.mubr.f32.mxu0 0.0
        %1566 = vmatmul.mubr.f32.gmra.mrb[0].mxu0 %v1499
        %v1567 = vpop.f32.mrb[0].mxu0
        %v1568 = vadd.f32 0.0, %v1567
        %v1569 = vpop.f32.mrb[0].mxu0
        %1570 = vdwg.mxu0
        %v1571 = vadd.f32 %v1495, %v1568
        %s1572 = scalar_lea.vmem %s10, 16
        %v1573 = vld [vmem:[%s1572] sm:$0xff]
        %v1575 = vsel %vm763, %v1335, 0
        %1577 = vmatprep.subr.mxu0 0.0
        %1578 = vmatpush1.msra.mxu0 %v1573
        %1579 = vmatprep.subr.mxu0 0.0
        %1580 = vmatpush1.msra.mxu0 0.0
        %1581 = vmatprep.subr.mxu0 0.0
        %1582 = vmatpush1.msra.mxu0 0.0
        %1583 = vmatprep.subr.mxu0 0.0
        %1584 = vmatpush1.msra.mxu0 0.0
        %1585 = vmatprep.subr.mxu0 0.0
        %1586 = vmatpush1.msra.mxu0 0.0
        %1587 = vmatprep.subr.mxu0 0.0
        %1588 = vmatpush1.msra.mxu0 0.0
        %1589 = vmatprep.subr.mxu0 0.0
        %1590 = vmatpush1.msra.mxu0 0.0
        %1591 = vmatprep.subr.mxu0 0.0
        %1592 = vmatpush1.msra.mxu0 0.0
        %1593 = vmatprep.subr.mxu0 0.0
        %1594 = vmatpush1.msra.mxu0 0.0
        %1595 = vmatprep.subr.mxu0 0.0
        %1596 = vmatpush1.msra.mxu0 0.0
        %1597 = vmatprep.subr.mxu0 0.0
        %1598 = vmatpush1.msra.mxu0 0.0
        %1599 = vmatprep.subr.mxu0 0.0
        %1600 = vmatpush1.msra.mxu0 0.0
        %1601 = vmatprep.subr.mxu0 0.0
        %1602 = vmatpush1.msra.mxu0 0.0
        %1603 = vmatprep.subr.mxu0 0.0
        %1604 = vmatpush1.msra.mxu0 0.0
        %1605 = vmatprep.subr.mxu0 0.0
        %1606 = vmatpush1.msra.mxu0 0.0
        %1607 = vmatprep.subr.mxu0 0.0
        %1608 = vmatpush1.msra.mxu0 0.0
        %1609 = vmatprep.subr.mxu0 0.0
        %1610 = vmatpush1.msra.mxu0 0.0
        %1611 = vmatprep.subr.mxu0 0.0
        %1612 = vmatpush1.msra.mxu0 0.0
        %1613 = vmatprep.subr.mxu0 0.0
        %1614 = vmatpush1.msra.mxu0 0.0
        %1615 = vmatprep.subr.mxu0 0.0
        %1616 = vmatpush1.msra.mxu0 0.0
        %1617 = vmatprep.subr.mxu0 0.0
        %1618 = vmatpush1.msra.mxu0 0.0
        %1619 = vmatprep.subr.mxu0 0.0
        %1620 = vmatpush1.msra.mxu0 0.0
        %1621 = vmatprep.subr.mxu0 0.0
        %1622 = vmatpush1.msra.mxu0 0.0
        %1623 = vmatprep.subr.mxu0 0.0
        %1624 = vmatpush1.msra.mxu0 0.0
        %1625 = vmatprep.subr.mxu0 0.0
        %1626 = vmatpush1.msra.mxu0 0.0
        %1627 = vmatprep.subr.mxu0 0.0
        %1628 = vmatpush1.msra.mxu0 0.0
        %1629 = vmatprep.subr.mxu0 0.0
        %1630 = vmatpush1.msra.mxu0 0.0
        %1631 = vmatprep.subr.mxu0 0.0
        %1632 = vmatpush1.msra.mxu0 0.0
        %1633 = vmatprep.subr.mxu0 0.0
        %1634 = vmatpush1.msra.mxu0 0.0
        %1635 = vmatprep.subr.mxu0 0.0
        %1636 = vmatpush1.msra.mxu0 0.0
        %1637 = vmatprep.subr.mxu0 0.0
        %1638 = vmatpush1.msra.mxu0 0.0
        %1639 = vmatprep.subr.mxu0 0.0
        %1640 = vmatpush1.msra.mxu0 0.0
        %1641 = vmatprep.mubr.f32.mxu0 0.0
        %1642 = vmatmul.mubr.f32.gmra.mrb[0].mxu0 %v1575
        %v1643 = vpop.f32.mrb[0].mxu0
        %v1644 = vadd.f32 0.0, %v1643
        %v1645 = vpop.f32.mrb[0].mxu0
        %1646 = vdwg.mxu0
        %v1647 = vadd.f32 %v1571, %v1644
        %s1648 = scalar_lea.vmem %s10, 24
        %v1649 = vld [vmem:[%s1648] sm:$0xff]
        %v1651 = vsel %vm763, %v1411, 0
        %1653 = vmatprep.subr.mxu0 0.0
        %1654 = vmatpush1.msra.mxu0 %v1649
        %1655 = vmatprep.subr.mxu0 0.0
        %1656 = vmatpush1.msra.mxu0 0.0
        %1657 = vmatprep.subr.mxu0 0.0
        %1658 = vmatpush1.msra.mxu0 0.0
        %1659 = vmatprep.subr.mxu0 0.0
        %1660 = vmatpush1.msra.mxu0 0.0
        %1661 = vmatprep.subr.mxu0 0.0
        %1662 = vmatpush1.msra.mxu0 0.0
        %1663 = vmatprep.subr.mxu0 0.0
        %1664 = vmatpush1.msra.mxu0 0.0
        %1665 = vmatprep.subr.mxu0 0.0
        %1666 = vmatpush1.msra.mxu0 0.0
        %1667 = vmatprep.subr.mxu0 0.0
        %1668 = vmatpush1.msra.mxu0 0.0
        %1669 = vmatprep.subr.mxu0 0.0
        %1670 = vmatpush1.msra.mxu0 0.0
        %1671 = vmatprep.subr.mxu0 0.0
        %1672 = vmatpush1.msra.mxu0 0.0
        %1673 = vmatprep.subr.mxu0 0.0
        %1674 = vmatpush1.msra.mxu0 0.0
        %1675 = vmatprep.subr.mxu0 0.0
        %1676 = vmatpush1.msra.mxu0 0.0
        %1677 = vmatprep.subr.mxu0 0.0
        %1678 = vmatpush1.msra.mxu0 0.0
        %1679 = vmatprep.subr.mxu0 0.0
        %1680 = vmatpush1.msra.mxu0 0.0
        %1681 = vmatprep.subr.mxu0 0.0
        %1682 = vmatpush1.msra.mxu0 0.0
        %1683 = vmatprep.subr.mxu0 0.0
        %1684 = vmatpush1.msra.mxu0 0.0
        %1685 = vmatprep.subr.mxu0 0.0
        %1686 = vmatpush1.msra.mxu0 0.0
        %1687 = vmatprep.subr.mxu0 0.0
        %1688 = vmatpush1.msra.mxu0 0.0
        %1689 = vmatprep.subr.mxu0 0.0
        %1690 = vmatpush1.msra.mxu0 0.0
        %1691 = vmatprep.subr.mxu0 0.0
        %1692 = vmatpush1.msra.mxu0 0.0
        %1693 = vmatprep.subr.mxu0 0.0
        %1694 = vmatpush1.msra.mxu0 0.0
        %1695 = vmatprep.subr.mxu0 0.0
        %1696 = vmatpush1.msra.mxu0 0.0
        %1697 = vmatprep.subr.mxu0 0.0
        %1698 = vmatpush1.msra.mxu0 0.0
        %1699 = vmatprep.subr.mxu0 0.0
        %1700 = vmatpush1.msra.mxu0 0.0
        %1701 = vmatprep.subr.mxu0 0.0
        %1702 = vmatpush1.msra.mxu0 0.0
        %1703 = vmatprep.subr.mxu0 0.0
        %1704 = vmatpush1.msra.mxu0 0.0
        %1705 = vmatprep.subr.mxu0 0.0
        %1706 = vmatpush1.msra.mxu0 0.0
        %1707 = vmatprep.subr.mxu0 0.0
        %1708 = vmatpush1.msra.mxu0 0.0
        %1709 = vmatprep.subr.mxu0 0.0
        %1710 = vmatpush1.msra.mxu0 0.0
        %1711 = vmatprep.subr.mxu0 0.0
        %1712 = vmatpush1.msra.mxu0 0.0
        %1713 = vmatprep.subr.mxu0 0.0
        %1714 = vmatpush1.msra.mxu0 0.0
        %1715 = vmatprep.subr.mxu0 0.0
        %1716 = vmatpush1.msra.mxu0 0.0
        %1717 = vmatprep.mubr.f32.mxu0 0.0
        %1718 = vmatmul.mubr.f32.gmra.mrb[0].mxu0 %v1651
        %v1719 = vpop.f32.mrb[0].mxu0
        %v1720 = vadd.f32 0.0, %v1719
        %v1721 = vpop.f32.mrb[0].mxu0
        %1722 = vdwg.mxu0
        %v1723 = vadd.f32 %v1647, %v1720
        %v1724 = vadd.f32 %v662, %v1723
        %v1725 = vld [vmem:[%s12] sm:$0x1]
        %v1726 = vld [vmem:[%s13] sm:$0x1]
        %v1727 = vsel %vm634, %v1724, 0.0
        %1728 = vadd.xlane.f32.xlu0 %v1727
        %v1729 = vpop.xlane.xlu0 %1728
        %v1730 = vmul.f32 %v1729, %v638
        %v1731 = vsub.f32 %v1724, %v1730
        %v1732 = vmul.f32 %v1731, %v1731
        %v1733 = vsel %vm634, %v1732, 0.0
        %1734 = vadd.xlane.f32.xlu0 %v1733
        %v1735 = vpop.xlane.xlu0 %1734
        %v1736 = vmul.f32 %v1735, %v638
        %v1737 = vadd.f32 %v1736, 1e-12
        %v1738 = vrsqrt.pop %v1737
        %v1739 = vmul.f32 %v1731, %v1738
        %v1741 = vlaneseq
        %v1742 = vshrl.u32 %v1741, 7
        %v1743 = vsub.s32 0, %v1742
        %v1744 = vrot.slane %v1725, %v1743
        %v1746 = vmul.f32 %v1739, %v1744
        %v1748 = vlaneseq
        %v1749 = vshrl.u32 %v1748, 7
        %v1750 = vsub.s32 0, %v1749
        %v1751 = vrot.slane %v1726, %v1750
        %v1753 = vadd.f32 %v1746, %v1751
        %v1754 = vld [vmem:[%s14] sm:$0xff]
        %v1755 = vld [vmem:[%s14 + $0x8] sm:$0xff]
        %v1756 = vld [vmem:[%s14 + $0x10] sm:$0xff]
        %v1757 = vld [vmem:[%s14 + $0x18] sm:$0xff]
        %v1758 = vld [vmem:[%s15] sm:$0x1]
        %v1760 = vlaneseq
        %v1761 = vshrl.u32 %v1760, 7
        %v1762 = vsub.s32 0, %v1761
        %v1763 = vrot.slane %v1758, %v1762
        %v1766 = vsel %vm634, %v1753, 0
        %1768 = vmatprep.subr.mxu0 0.0
        %1769 = vmatpush1.msra.mxu0 %v1754
        %1770 = vmatprep.subr.mxu0 0.0
        %1771 = vmatpush1.msra.mxu0 %v1755
        %1772 = vmatprep.subr.mxu0 0.0
        %1773 = vmatpush1.msra.mxu0 %v1756
        %1774 = vmatprep.subr.mxu0 0.0
        %1775 = vmatpush1.msra.mxu0 %v1757
        %1776 = vmatprep.subr.mxu0 0.0
        %1777 = vmatpush1.msra.mxu0 0.0
        %1778 = vmatprep.subr.mxu0 0.0
        %1779 = vmatpush1.msra.mxu0 0.0
        %1780 = vmatprep.subr.mxu0 0.0
        %1781 = vmatpush1.msra.mxu0 0.0
        %1782 = vmatprep.subr.mxu0 0.0
        %1783 = vmatpush1.msra.mxu0 0.0
        %1784 = vmatprep.subr.mxu0 0.0
        %1785 = vmatpush1.msra.mxu0 0.0
        %1786 = vmatprep.subr.mxu0 0.0
        %1787 = vmatpush1.msra.mxu0 0.0
        %1788 = vmatprep.subr.mxu0 0.0
        %1789 = vmatpush1.msra.mxu0 0.0
        %1790 = vmatprep.subr.mxu0 0.0
        %1791 = vmatpush1.msra.mxu0 0.0
        %1792 = vmatprep.subr.mxu0 0.0
        %1793 = vmatpush1.msra.mxu0 0.0
        %1794 = vmatprep.subr.mxu0 0.0
        %1795 = vmatpush1.msra.mxu0 0.0
        %1796 = vmatprep.subr.mxu0 0.0
        %1797 = vmatpush1.msra.mxu0 0.0
        %1798 = vmatprep.subr.mxu0 0.0
        %1799 = vmatpush1.msra.mxu0 0.0
        %1800 = vmatprep.subr.mxu0 0.0
        %1801 = vmatpush1.msra.mxu0 0.0
        %1802 = vmatprep.subr.mxu0 0.0
        %1803 = vmatpush1.msra.mxu0 0.0
        %1804 = vmatprep.subr.mxu0 0.0
        %1805 = vmatpush1.msra.mxu0 0.0
        %1806 = vmatprep.subr.mxu0 0.0
        %1807 = vmatpush1.msra.mxu0 0.0
        %1808 = vmatprep.subr.mxu0 0.0
        %1809 = vmatpush1.msra.mxu0 0.0
        %1810 = vmatprep.subr.mxu0 0.0
        %1811 = vmatpush1.msra.mxu0 0.0
        %1812 = vmatprep.subr.mxu0 0.0
        %1813 = vmatpush1.msra.mxu0 0.0
        %1814 = vmatprep.subr.mxu0 0.0
        %1815 = vmatpush1.msra.mxu0 0.0
        %1816 = vmatprep.subr.mxu0 0.0
        %1817 = vmatpush1.msra.mxu0 0.0
        %1818 = vmatprep.subr.mxu0 0.0
        %1819 = vmatpush1.msra.mxu0 0.0
        %1820 = vmatprep.subr.mxu0 0.0
        %1821 = vmatpush1.msra.mxu0 0.0
        %1822 = vmatprep.subr.mxu0 0.0
        %1823 = vmatpush1.msra.mxu0 0.0
        %1824 = vmatprep.subr.mxu0 0.0
        %1825 = vmatpush1.msra.mxu0 0.0
        %1826 = vmatprep.subr.mxu0 0.0
        %1827 = vmatpush1.msra.mxu0 0.0
        %1828 = vmatprep.subr.mxu0 0.0
        %1829 = vmatpush1.msra.mxu0 0.0
        %1830 = vmatprep.subr.mxu0 0.0
        %1831 = vmatpush1.msra.mxu0 0.0
        %1832 = vmatprep.mubr.f32.mxu0 0.0
        %1833 = vmatmul.mubr.f32.gmra.mrb[0].mxu0 %v1766
        %v1834 = vpop.f32.mrb[0].mxu0
        %v1835 = vadd.f32 %v1763, %v1834
        %v1836 = vpop.f32.mrb[0].mxu0
        %1837 = vdwg.mxu0
        %v1838 = vmul.f32 %v1835, %v1835
        %v1839 = vmul.f32 %v1835, %v1838
        %v1840 = vmul.f32 %v1839, 0.044715
        %v1841 = vadd.f32 %v1835, %v1840
        %v1842 = vmul.f32 %v1841, 0.7978846
        %v1843 = vtanh.pop %v1842
        %v1844 = vadd.f32 %v1843, 1.0
        %v1845 = vmul.f32 %v1844, 0.5
        %v1846 = vmul.f32 %v1835, %v1845
        %v1847 = vld [vmem:[%s16] sm:$0xff]
        %v1848 = vld [vmem:[%s16 + $0x8] sm:$0xff]
        %v1849 = vld [vmem:[%s16 + $0x10] sm:$0xff]
        %v1850 = vld [vmem:[%s16 + $0x18] sm:$0xff]
        %v1851 = vld [vmem:[%s16 + $0x20] sm:$0xff]
        %v1852 = vld [vmem:[%s16 + $0x28] sm:$0xff]
        %v1853 = vld [vmem:[%s16 + $0x30] sm:$0xff]
        %v1854 = vld [vmem:[%s16 + $0x38] sm:$0xff]
        %v1855 = vld [vmem:[%s16 + $0x40] sm:$0xff]
        %v1856 = vld [vmem:[%s16 + $0x48] sm:$0xff]
        %v1857 = vld [vmem:[%s16 + $0x50] sm:$0xff]
        %v1858 = vld [vmem:[%s16 + $0x58] sm:$0xff]
        %v1859 = vld [vmem:[%s16 + $0x60] sm:$0xff]
        %v1860 = vld [vmem:[%s16 + $0x68] sm:$0xff]
        %v1861 = vld [vmem:[%s16 + $0x70] sm:$0xff]
        %v1862 = vld [vmem:[%s16 + $0x78] sm:$0xff]
        %v1863 = vld [vmem:[%s17] sm:$0x1]
        %v1865 = vlaneseq
        %v1866 = vshrl.u32 %v1865, 7
        %v1867 = vsub.s32 0, %v1866
        %v1868 = vrot.slane %v1863, %v1867
        %1870 = vmatprep.subr.mxu0 0.0
        %1871 = vmatpush1.msra.mxu0 %v1847
        %1872 = vmatprep.subr.mxu0 0.0
        %1873 = vmatpush1.msra.mxu0 %v1848
        %1874 = vmatprep.subr.mxu0 0.0
        %1875 = vmatpush1.msra.mxu0 %v1849
        %1876 = vmatprep.subr.mxu0 0.0
        %1877 = vmatpush1.msra.mxu0 %v1850
        %1878 = vmatprep.subr.mxu0 0.0
        %1879 = vmatpush1.msra.mxu0 %v1851
        %1880 = vmatprep.subr.mxu0 0.0
        %1881 = vmatpush1.msra.mxu0 %v1852
        %1882 = vmatprep.subr.mxu0 0.0
        %1883 = vmatpush1.msra.mxu0 %v1853
        %1884 = vmatprep.subr.mxu0 0.0
        %1885 = vmatpush1.msra.mxu0 %v1854
        %1886 = vmatprep.subr.mxu0 0.0
        %1887 = vmatpush1.msra.mxu0 %v1855
        %1888 = vmatprep.subr.mxu0 0.0
        %1889 = vmatpush1.msra.mxu0 %v1856
        %1890 = vmatprep.subr.mxu0 0.0
        %1891 = vmatpush1.msra.mxu0 %v1857
        %1892 = vmatprep.subr.mxu0 0.0
        %1893 = vmatpush1.msra.mxu0 %v1858
        %1894 = vmatprep.subr.mxu0 0.0
        %1895 = vmatpush1.msra.mxu0 %v1859
        %1896 = vmatprep.subr.mxu0 0.0
        %1897 = vmatpush1.msra.mxu0 %v1860
        %1898 = vmatprep.subr.mxu0 0.0
        %1899 = vmatpush1.msra.mxu0 %v1861
        %1900 = vmatprep.subr.mxu0 0.0
        %1901 = vmatpush1.msra.mxu0 %v1862
        %1902 = vmatprep.subr.mxu0 0.0
        %1903 = vmatpush1.msra.mxu0 0.0
        %1904 = vmatprep.subr.mxu0 0.0
        %1905 = vmatpush1.msra.mxu0 0.0
        %1906 = vmatprep.subr.mxu0 0.0
        %1907 = vmatpush1.msra.mxu0 0.0
        %1908 = vmatprep.subr.mxu0 0.0
        %1909 = vmatpush1.msra.mxu0 0.0
        %1910 = vmatprep.subr.mxu0 0.0
        %1911 = vmatpush1.msra.mxu0 0.0
        %1912 = vmatprep.subr.mxu0 0.0
        %1913 = vmatpush1.msra.mxu0 0.0
        %1914 = vmatprep.subr.mxu0 0.0
        %1915 = vmatpush1.msra.mxu0 0.0
        %1916 = vmatprep.subr.mxu0 0.0
        %1917 = vmatpush1.msra.mxu0 0.0
        %1918 = vmatprep.subr.mxu0 0.0
        %1919 = vmatpush1.msra.mxu0 0.0
        %1920 = vmatprep.subr.mxu0 0.0
        %1921 = vmatpush1.msra.mxu0 0.0
        %1922 = vmatprep.subr.mxu0 0.0
        %1923 = vmatpush1.msra.mxu0 0.0
        %1924 = vmatprep.subr.mxu0 0.0
        %1925 = vmatpush1.msra.mxu0 0.0
        %1926 = vmatprep.subr.mxu0 0.0
        %1927 = vmatpush1.msra.mxu0 0.0
        %1928 = vmatprep.subr.mxu0 0.0
        %1929 = vmatpush1.msra.mxu0 0.0
        %1930 = vmatprep.subr.mxu0 0.0
        %1931 = vmatpush1.msra.mxu0 0.0
        %1932 = vmatprep.subr.mxu0 0.0
        %1933 = vmatpush1.msra.mxu0 0.0
        %1934 = vmatprep.mubr.f32.mxu0 0.0
        %1935 = vmatmul.mubr.f32.gmra.mrb[0].mxu0 %v1846
        %v1936 = vpop.f32.mrb[0].mxu0
        %v1937 = vadd.f32 %v1868, %v1936
        %v1938 = vpop.f32.mrb[0].mxu0
        %1939 = vdwg.mxu0
        %v1940 = vadd.f32 %v1753, %v1937
        %v1941 = vld [vmem:[%s18] sm:$0x1]
        %v1942 = vld [vmem:[%s19] sm:$0x1]
        %v1943 = vsel %vm634, %v1940, 0.0
        %1944 = vadd.xlane.f32.xlu0 %v1943
        %v1945 = vpop.xlane.xlu0 %1944
        %v1946 = vmul.f32 %v1945, %v638
        %v1947 = vsub.f32 %v1940, %v1946
        %v1948 = vmul.f32 %v1947, %v1947
        %v1949 = vsel %vm634, %v1948, 0.0
        %1950 = vadd.xlane.f32.xlu0 %v1949
        %v1951 = vpop.xlane.xlu0 %1950
        %v1952 = vmul.f32 %v1951, %v638
        %v1953 = vadd.f32 %v1952, 1e-12
        %v1954 = vrsqrt.pop %v1953
        %v1955 = vmul.f32 %v1947, %v1954
        %v1957 = vlaneseq
        %v1958 = vshrl.u32 %v1957, 7
        %v1959 = vsub.s32 0, %v1958
        %v1960 = vrot.slane %v1941, %v1959
        %v1962 = vmul.f32 %v1955, %v1960
        %v1964 = vlaneseq
        %v1965 = vshrl.u32 %v1964, 7
        %v1966 = vsub.s32 0, %v1965
        %v1967 = vrot.slane %v1942, %v1966
        %v1969 = vadd.f32 %v1962, %v1967
        %s1970 = scalar_lea.vmem %s8, 32
        %v1971 = vld [vmem:[%s1970] sm:$0xff]
        %v1972 = vld [vmem:[%s1970 + $0x8] sm:$0xff]
        %v1973 = vld [vmem:[%s1970 + $0x10] sm:$0xff]
        %v1974 = vld [vmem:[%s1970 + $0x18] sm:$0xff]
        %s1975 = scalar_lea.vmem %s9, 1
        %v1976 = vld [vmem:[%s1975] sm:$0x1]
        %v1978 = vlaneseq
        %v1979 = vshrl.u32 %v1978, 7
        %v1980 = vsub.s32 0, %v1979
        %v1981 = vrot.slane %v1976, %v1980
        %v1984 = vsel %vm634, %v1969, 0
        %1986 = vmatprep.subr.mxu0 0.0
        %1987 = vmatpush1.msra.mxu0 %v1971
        %1988 = vmatprep.subr.mxu0 0.0
        %1989 = vmatpush1.msra.mxu0 %v1972
        %1990 = vmatprep.subr.mxu0 0.0
        %1991 = vmatpush1.msra.mxu0 %v1973
        %1992 = vmatprep.subr.mxu0 0.0
        %1993 = vmatpush1.msra.mxu0 %v1974
        %1994 = vmatprep.subr.mxu0 0.0
        %1995 = vmatpush1.msra.mxu0 0.0
        %1996 = vmatprep.subr.mxu0 0.0
        %1997 = vmatpush1.msra.mxu0 0.0
        %1998 = vmatprep.subr.mxu0 0.0
        %1999 = vmatpush1.msra.mxu0 0.0
        %2000 = vmatprep.subr.mxu0 0.0
        %2001 = vmatpush1.msra.mxu0 0.0
        %2002 = vmatprep.subr.mxu0 0.0
        %2003 = vmatpush1.msra.mxu0 0.0
        %2004 = vmatprep.subr.mxu0 0.0
        %2005 = vmatpush1.msra.mxu0 0.0
        %2006 = vmatprep.subr.mxu0 0.0
        %2007 = vmatpush1.msra.mxu0 0.0
        %2008 = vmatprep.subr.mxu0 0.0
        %2009 = vmatpush1.msra.mxu0 0.0
        %2010 = vmatprep.subr.mxu0 0.0
        %2011 = vmatpush1.msra.mxu0 0.0
        %2012 = vmatprep.subr.mxu0 0.0
        %2013 = vmatpush1.msra.mxu0 0.0
        %2014 = vmatprep.subr.mxu0 0.0
        %2015 = vmatpush1.msra.mxu0 0.0
        %2016 = vmatprep.subr.mxu0 0.0
        %2017 = vmatpush1.msra.mxu0 0.0
        %2018 = vmatprep.subr.mxu0 0.0
        %2019 = vmatpush1.msra.mxu0 0.0
        %2020 = vmatprep.subr.mxu0 0.0
        %2021 = vmatpush1.msra.mxu0 0.0
        %2022 = vmatprep.subr.mxu0 0.0
        %2023 = vmatpush1.msra.mxu0 0.0
        %2024 = vmatprep.subr.mxu0 0.0
        %2025 = vmatpush1.msra.mxu0 0.0
        %2026 = vmatprep.subr.mxu0 0.0
        %2027 = vmatpush1.msra.mxu0 0.0
        %2028 = vmatprep.subr.mxu0 0.0
        %2029 = vmatpush1.msra.mxu0 0.0
        %2030 = vmatprep.subr.mxu0 0.0
        %2031 = vmatpush1.msra.mxu0 0.0
        %2032 = vmatprep.subr.mxu0 0.0
        %2033 = vmatpush1.msra.mxu0 0.0
        %2034 = vmatprep.subr.mxu0 0.0
        %2035 = vmatpush1.msra.mxu0 0.0
        %2036 = vmatprep.subr.mxu0 0.0
        %2037 = vmatpush1.msra.mxu0 0.0
        %2038 = vmatprep.subr.mxu0 0.0
        %2039 = vmatpush1.msra.mxu0 0.0
        %2040 = vmatprep.subr.mxu0 0.0
        %2041 = vmatpush1.msra.mxu0 0.0
        %2042 = vmatprep.subr.mxu0 0.0
        %2043 = vmatpush1.msra.mxu0 0.0
        %2044 = vmatprep.subr.mxu0 0.0
        %2045 = vmatpush1.msra.mxu0 0.0
        %2046 = vmatprep.subr.mxu0 0.0
        %2047 = vmatpush1.msra.mxu0 0.0
        %2048 = vmatprep.subr.mxu0 0.0
        %2049 = vmatpush1.msra.mxu0 0.0
        %2050 = vmatprep.mubr.f32.mxu0 0.0
        %2051 = vmatmul.mubr.f32.gmra.mrb[0].mxu0 %v1984
        %v2052 = vpop.f32.mrb[0].mxu0
        %v2053 = vadd.f32 %v1981, %v2052
        %v2054 = vpop.f32.mrb[0].mxu0
        %2055 = vdwg.mxu0
        %2057 = vrot.lane.b32.xlu0 %v2053, 120
        %v2058 = vpop.permute.xlu0 %2057
        %2059 = vrot.lane.b32.xlu0 %v2053, 112
        %v2060 = vpop.permute.xlu0 %2059
        %2061 = vrot.lane.b32.xlu0 %v2053, 104
        %v2062 = vpop.permute.xlu0 %2061
        %2063 = vrot.lane.b32.xlu0 %v2053, 96
        %v2064 = vpop.permute.xlu0 %2063
        %v2065 = vsel %vm763, %v2053, 0
        %v2067 = vsel %vm763, %v2064, 0
        %2069 = vmatprep.subr.mxu0 0.0
        %2070 = vmatpush1.xpose.msra.mxu0 %v2067
        %2071 = vmatprep.subr.mxu0 0.0
        %2072 = vmatpush1.xpose.msra.mxu0 0.0
        %2073 = vmatprep.subr.mxu0 0.0
        %2074 = vmatpush1.xpose.msra.mxu0 0.0
        %2075 = vmatprep.subr.mxu0 0.0
        %2076 = vmatpush1.xpose.msra.mxu0 0.0
        %2077 = vmatprep.subr.mxu0 0.0
        %2078 = vmatpush1.xpose.msra.mxu0 0.0
        %2079 = vmatprep.subr.mxu0 0.0
        %2080 = vmatpush1.xpose.msra.mxu0 0.0
        %2081 = vmatprep.subr.mxu0 0.0
        %2082 = vmatpush1.xpose.msra.mxu0 0.0
        %2083 = vmatprep.subr.mxu0 0.0
        %2084 = vmatpush1.xpose.msra.mxu0 0.0
        %2085 = vmatprep.subr.mxu0 0.0
        %2086 = vmatpush1.xpose.msra.mxu0 0.0
        %2087 = vmatprep.subr.mxu0 0.0
        %2088 = vmatpush1.xpose.msra.mxu0 0.0
        %2089 = vmatprep.subr.mxu0 0.0
        %2090 = vmatpush1.xpose.msra.mxu0 0.0
        %2091 = vmatprep.subr.mxu0 0.0
        %2092 = vmatpush1.xpose.msra.mxu0 0.0
        %2093 = vmatprep.subr.mxu0 0.0
        %2094 = vmatpush1.xpose.msra.mxu0 0.0
        %2095 = vmatprep.subr.mxu0 0.0
        %2096 = vmatpush1.xpose.msra.mxu0 0.0
        %2097 = vmatprep.subr.mxu0 0.0
        %2098 = vmatpush1.xpose.msra.mxu0 0.0
        %2099 = vmatprep.subr.mxu0 0.0
        %2100 = vmatpush1.xpose.msra.mxu0 0.0
        %2101 = vmatprep.subr.mxu0 0.0
        %2102 = vmatpush1.xpose.msra.mxu0 0.0
        %2103 = vmatprep.subr.mxu0 0.0
        %2104 = vmatpush1.xpose.msra.mxu0 0.0
        %2105 = vmatprep.subr.mxu0 0.0
        %2106 = vmatpush1.xpose.msra.mxu0 0.0
        %2107 = vmatprep.subr.mxu0 0.0
        %2108 = vmatpush1.xpose.msra.mxu0 0.0
        %2109 = vmatprep.subr.mxu0 0.0
        %2110 = vmatpush1.xpose.msra.mxu0 0.0
        %2111 = vmatprep.subr.mxu0 0.0
        %2112 = vmatpush1.xpose.msra.mxu0 0.0
        %2113 = vmatprep.subr.mxu0 0.0
        %2114 = vmatpush1.xpose.msra.mxu0 0.0
        %2115 = vmatprep.subr.mxu0 0.0
        %2116 = vmatpush1.xpose.msra.mxu0 0.0
        %2117 = vmatprep.subr.mxu0 0.0
        %2118 = vmatpush1.xpose.msra.mxu0 0.0
        %2119 = vmatprep.subr.mxu0 0.0
        %2120 = vmatpush1.xpose.msra.mxu0 0.0
        %2121 = vmatprep.subr.mxu0 0.0
        %2122 = vmatpush1.xpose.msra.mxu0 0.0
        %2123 = vmatprep.subr.mxu0 0.0
        %2124 = vmatpush1.xpose.msra.mxu0 0.0
        %2125 = vmatprep.subr.mxu0 0.0
        %2126 = vmatpush1.xpose.msra.mxu0 0.0
        %2127 = vmatprep.subr.mxu0 0.0
        %2128 = vmatpush1.xpose.msra.mxu0 0.0
        %2129 = vmatprep.subr.mxu0 0.0
        %2130 = vmatpush1.xpose.msra.mxu0 0.0
        %2131 = vmatprep.subr.mxu0 0.0
        %2132 = vmatpush1.xpose.msra.mxu0 0.0
        %2133 = vmatprep.mubr.f32.mxu0 0.0
        %2134 = vmatmul.mubr.f32.gmra.mrb[0].mxu0 %v2065
        %v2135 = vpop.f32.mrb[0].mxu0
        %v2136 = vadd.f32 %v759, %v2135
        %v2137 = vpop.f32.mrb[0].mxu0
        %2138 = vdwg.mxu0
        %2139 = vrot.lane.b32.xlu0 %v2058, 96
        %v2140 = vpop.permute.xlu0 %2139
        %v2141 = vsel %vm763, %v2058, 0
        %v2143 = vsel %vm763, %v2140, 0
        %2145 = vmatprep.subr.mxu0 0.0
        %2146 = vmatpush1.xpose.msra.mxu0 %v2143
        %2147 = vmatprep.subr.mxu0 0.0
        %2148 = vmatpush1.xpose.msra.mxu0 0.0
        %2149 = vmatprep.subr.mxu0 0.0
        %2150 = vmatpush1.xpose.msra.mxu0 0.0
        %2151 = vmatprep.subr.mxu0 0.0
        %2152 = vmatpush1.xpose.msra.mxu0 0.0
        %2153 = vmatprep.subr.mxu0 0.0
        %2154 = vmatpush1.xpose.msra.mxu0 0.0
        %2155 = vmatprep.subr.mxu0 0.0
        %2156 = vmatpush1.xpose.msra.mxu0 0.0
        %2157 = vmatprep.subr.mxu0 0.0
        %2158 = vmatpush1.xpose.msra.mxu0 0.0
        %2159 = vmatprep.subr.mxu0 0.0
        %2160 = vmatpush1.xpose.msra.mxu0 0.0
        %2161 = vmatprep.subr.mxu0 0.0
        %2162 = vmatpush1.xpose.msra.mxu0 0.0
        %2163 = vmatprep.subr.mxu0 0.0
        %2164 = vmatpush1.xpose.msra.mxu0 0.0
        %2165 = vmatprep.subr.mxu0 0.0
        %2166 = vmatpush1.xpose.msra.mxu0 0.0
        %2167 = vmatprep.subr.mxu0 0.0
        %2168 = vmatpush1.xpose.msra.mxu0 0.0
        %2169 = vmatprep.subr.mxu0 0.0
        %2170 = vmatpush1.xpose.msra.mxu0 0.0
        %2171 = vmatprep.subr.mxu0 0.0
        %2172 = vmatpush1.xpose.msra.mxu0 0.0
        %2173 = vmatprep.subr.mxu0 0.0
        %2174 = vmatpush1.xpose.msra.mxu0 0.0
        %2175 = vmatprep.subr.mxu0 0.0
        %2176 = vmatpush1.xpose.msra.mxu0 0.0
        %2177 = vmatprep.subr.mxu0 0.0
        %2178 = vmatpush1.xpose.msra.mxu0 0.0
        %2179 = vmatprep.subr.mxu0 0.0
        %2180 = vmatpush1.xpose.msra.mxu0 0.0
        %2181 = vmatprep.subr.mxu0 0.0
        %2182 = vmatpush1.xpose.msra.mxu0 0.0
        %2183 = vmatprep.subr.mxu0 0.0
        %2184 = vmatpush1.xpose.msra.mxu0 0.0
        %2185 = vmatprep.subr.mxu0 0.0
        %2186 = vmatpush1.xpose.msra.mxu0 0.0
        %2187 = vmatprep.subr.mxu0 0.0
        %2188 = vmatpush1.xpose.msra.mxu0 0.0
        %2189 = vmatprep.subr.mxu0 0.0
        %2190 = vmatpush1.xpose.msra.mxu0 0.0
        %2191 = vmatprep.subr.mxu0 0.0
        %2192 = vmatpush1.xpose.msra.mxu0 0.0
        %2193 = vmatprep.subr.mxu0 0.0
        %2194 = vmatpush1.xpose.msra.mxu0 0.0
        %2195 = vmatprep.subr.mxu0 0.0
        %2196 = vmatpush1.xpose.msra.mxu0 0.0
        %2197 = vmatprep.subr.mxu0 0.0
        %2198 = vmatpush1.xpose.msra.mxu0 0.0
        %2199 = vmatprep.subr.mxu0 0.0
        %2200 = vmatpush1.xpose.msra.mxu0 0.0
        %2201 = vmatprep.subr.mxu0 0.0
        %2202 = vmatpush1.xpose.msra.mxu0 0.0
        %2203 = vmatprep.subr.mxu0 0.0
        %2204 = vmatpush1.xpose.msra.mxu0 0.0
        %2205 = vmatprep.subr.mxu0 0.0
        %2206 = vmatpush1.xpose.msra.mxu0 0.0
        %2207 = vmatprep.subr.mxu0 0.0
        %2208 = vmatpush1.xpose.msra.mxu0 0.0
        %2209 = vmatprep.mubr.f32.mxu0 0.0
        %2210 = vmatmul.mubr.f32.gmra.mrb[0].mxu0 %v2141
        %v2211 = vpop.f32.mrb[0].mxu0
        %v2212 = vadd.f32 %v759, %v2211
        %v2213 = vpop.f32.mrb[0].mxu0
        %2214 = vdwg.mxu0
        %2215 = vrot.lane.b32.xlu0 %v2060, 96
        %v2216 = vpop.permute.xlu0 %2215
        %v2217 = vsel %vm763, %v2060, 0
        %v2219 = vsel %vm763, %v2216, 0
        %2221 = vmatprep.subr.mxu0 0.0
        %2222 = vmatpush1.xpose.msra.mxu0 %v2219
        %2223 = vmatprep.subr.mxu0 0.0
        %2224 = vmatpush1.xpose.msra.mxu0 0.0
        %2225 = vmatprep.subr.mxu0 0.0
        %2226 = vmatpush1.xpose.msra.mxu0 0.0
        %2227 = vmatprep.subr.mxu0 0.0
        %2228 = vmatpush1.xpose.msra.mxu0 0.0
        %2229 = vmatprep.subr.mxu0 0.0
        %2230 = vmatpush1.xpose.msra.mxu0 0.0
        %2231 = vmatprep.subr.mxu0 0.0
        %2232 = vmatpush1.xpose.msra.mxu0 0.0
        %2233 = vmatprep.subr.mxu0 0.0
        %2234 = vmatpush1.xpose.msra.mxu0 0.0
        %2235 = vmatprep.subr.mxu0 0.0
        %2236 = vmatpush1.xpose.msra.mxu0 0.0
        %2237 = vmatprep.subr.mxu0 0.0
        %2238 = vmatpush1.xpose.msra.mxu0 0.0
        %2239 = vmatprep.subr.mxu0 0.0
        %2240 = vmatpush1.xpose.msra.mxu0 0.0
        %2241 = vmatprep.subr.mxu0 0.0
        %2242 = vmatpush1.xpose.msra.mxu0 0.0
        %2243 = vmatprep.subr.mxu0 0.0
        %2244 = vmatpush1.xpose.msra.mxu0 0.0
        %2245 = vmatprep.subr.mxu0 0.0
        %2246 = vmatpush1.xpose.msra.mxu0 0.0
        %2247 = vmatprep.subr.mxu0 0.0
        %2248 = vmatpush1.xpose.msra.mxu0 0.0
        %2249 = vmatprep.subr.mxu0 0.0
        %2250 = vmatpush1.xpose.msra.mxu0 0.0
        %2251 = vmatprep.subr.mxu0 0.0
        %2252 = vmatpush1.xpose.msra.mxu0 0.0
        %2253 = vmatprep.subr.mxu0 0.0
        %2254 = vmatpush1.xpose.msra.mxu0 0.0
        %2255 = vmatprep.subr.mxu0 0.0
        %2256 = vmatpush1.xpose.msra.mxu0 0.0
        %2257 = vmatprep.subr.mxu0 0.0
        %2258 = vmatpush1.xpose.msra.mxu0 0.0
        %2259 = vmatprep.subr.mxu0 0.0
        %2260 = vmatpush1.xpose.msra.mxu0 0.0
        %2261 = vmatprep.subr.mxu0 0.0
        %2262 = vmatpush1.xpose.msra.mxu0 0.0
        %2263 = vmatprep.subr.mxu0 0.0
        %2264 = vmatpush1.xpose.msra.mxu0 0.0
        %2265 = vmatprep.subr.mxu0 0.0
        %2266 = vmatpush1.xpose.msra.mxu0 0.0
        %2267 = vmatprep.subr.mxu0 0.0
        %2268 = vmatpush1.xpose.msra.mxu0 0.0
        %2269 = vmatprep.subr.mxu0 0.0
        %2270 = vmatpush1.xpose.msra.mxu0 0.0
        %2271 = vmatprep.subr.mxu0 0.0
        %2272 = vmatpush1.xpose.msra.mxu0 0.0
        %2273 = vmatprep.subr.mxu0 0.0
        %2274 = vmatpush1.xpose.msra.mxu0 0.0
        %2275 = vmatprep.subr.mxu0 0.0
        %2276 = vmatpush1.xpose.msra.mxu0 0.0
        %2277 = vmatprep.subr.mxu0 0.0
        %2278 = vmatpush1.xpose.msra.mxu0 0.0
        %2279 = vmatprep.subr.mxu0 0.0
        %2280 = vmatpush1.xpose.msra.mxu0 0.0
        %2281 = vmatprep.subr.mxu0 0.0
        %2282 = vmatpush1.xpose.msra.mxu0 0.0
        %2283 = vmatprep.subr.mxu0 0.0
        %2284 = vmatpush1.xpose.msra.mxu0 0.0
        %2285 = vmatprep.mubr.f32.mxu0 0.0
        %2286 = vmatmul.mubr.f32.gmra.mrb[0].mxu0 %v2217
        %v2287 = vpop.f32.mrb[0].mxu0
        %v2288 = vadd.f32 %v759, %v2287
        %v2289 = vpop.f32.mrb[0].mxu0
        %2290 = vdwg.mxu0
        %2291 = vrot.lane.b32.xlu0 %v2062, 96
        %v2292 = vpop.permute.xlu0 %2291
        %v2293 = vsel %vm763, %v2062, 0
        %v2295 = vsel %vm763, %v2292, 0
        %2297 = vmatprep.subr.mxu0 0.0
        %2298 = vmatpush1.xpose.msra.mxu0 %v2295
        %2299 = vmatprep.subr.mxu0 0.0
        %2300 = vmatpush1.xpose.msra.mxu0 0.0
        %2301 = vmatprep.subr.mxu0 0.0
        %2302 = vmatpush1.xpose.msra.mxu0 0.0
        %2303 = vmatprep.subr.mxu0 0.0
        %2304 = vmatpush1.xpose.msra.mxu0 0.0
        %2305 = vmatprep.subr.mxu0 0.0
        %2306 = vmatpush1.xpose.msra.mxu0 0.0
        %2307 = vmatprep.subr.mxu0 0.0
        %2308 = vmatpush1.xpose.msra.mxu0 0.0
        %2309 = vmatprep.subr.mxu0 0.0
        %2310 = vmatpush1.xpose.msra.mxu0 0.0
        %2311 = vmatprep.subr.mxu0 0.0
        %2312 = vmatpush1.xpose.msra.mxu0 0.0
        %2313 = vmatprep.subr.mxu0 0.0
        %2314 = vmatpush1.xpose.msra.mxu0 0.0
        %2315 = vmatprep.subr.mxu0 0.0
        %2316 = vmatpush1.xpose.msra.mxu0 0.0
        %2317 = vmatprep.subr.mxu0 0.0
        %2318 = vmatpush1.xpose.msra.mxu0 0.0
        %2319 = vmatprep.subr.mxu0 0.0
        %2320 = vmatpush1.xpose.msra.mxu0 0.0
        %2321 = vmatprep.subr.mxu0 0.0
        %2322 = vmatpush1.xpose.msra.mxu0 0.0
        %2323 = vmatprep.subr.mxu0 0.0
        %2324 = vmatpush1.xpose.msra.mxu0 0.0
        %2325 = vmatprep.subr.mxu0 0.0
        %2326 = vmatpush1.xpose.msra.mxu0 0.0
        %2327 = vmatprep.subr.mxu0 0.0
        %2328 = vmatpush1.xpose.msra.mxu0 0.0
        %2329 = vmatprep.subr.mxu0 0.0
        %2330 = vmatpush1.xpose.msra.mxu0 0.0
        %2331 = vmatprep.subr.mxu0 0.0
        %2332 = vmatpush1.xpose.msra.mxu0 0.0
        %2333 = vmatprep.subr.mxu0 0.0
        %2334 = vmatpush1.xpose.msra.mxu0 0.0
        %2335 = vmatprep.subr.mxu0 0.0
        %2336 = vmatpush1.xpose.msra.mxu0 0.0
        %2337 = vmatprep.subr.mxu0 0.0
        %2338 = vmatpush1.xpose.msra.mxu0 0.0
        %2339 = vmatprep.subr.mxu0 0.0
        %2340 = vmatpush1.xpose.msra.mxu0 0.0
        %2341 = vmatprep.subr.mxu0 0.0
        %2342 = vmatpush1.xpose.msra.mxu0 0.0
        %2343 = vmatprep.subr.mxu0 0.0
        %2344 = vmatpush1.xpose.msra.mxu0 0.0
        %2345 = vmatprep.subr.mxu0 0.0
        %2346 = vmatpush1.xpose.msra.mxu0 0.0
        %2347 = vmatprep.subr.mxu0 0.0
        %2348 = vmatpush1.xpose.msra.mxu0 0.0
        %2349 = vmatprep.subr.mxu0 0.0
        %2350 = vmatpush1.xpose.msra.mxu0 0.0
        %2351 = vmatprep.subr.mxu0 0.0
        %2352 = vmatpush1.xpose.msra.mxu0 0.0
        %2353 = vmatprep.subr.mxu0 0.0
        %2354 = vmatpush1.xpose.msra.mxu0 0.0
        %2355 = vmatprep.subr.mxu0 0.0
        %2356 = vmatpush1.xpose.msra.mxu0 0.0
        %2357 = vmatprep.subr.mxu0 0.0
        %2358 = vmatpush1.xpose.msra.mxu0 0.0
        %2359 = vmatprep.subr.mxu0 0.0
        %2360 = vmatpush1.xpose.msra.mxu0 0.0
        %2361 = vmatprep.mubr.f32.mxu0 0.0
        %2362 = vmatmul.mubr.f32.gmra.mrb[0].mxu0 %v2293
        %v2363 = vpop.f32.mrb[0].mxu0
        %v2364 = vadd.f32 %v759, %v2363
        %v2365 = vpop.f32.mrb[0].mxu0
        %2366 = vdwg.mxu0
        %v2367 = vsel %vm763, %v2136, -inf
        %2368 = vmax.xlane.f32.xlu0 %v2367
        %v2369 = vpop.xlane.xlu0 %2368
        %v2370 = vsel %vm763, %v2212, -inf
        %2371 = vmax.xlane.f32.xlu0 %v2370
        %v2372 = vpop.xlane.xlu0 %2371
        %v2373 = vsel %vm763, %v2288, -inf
        %2374 = vmax.xlane.f32.xlu0 %v2373
        %v2375 = vpop.xlane.xlu0 %2374
        %v2376 = vsel %vm763, %v2364, -inf
        %2377 = vmax.xlane.f32.xlu0 %v2376
        %v2378 = vpop.xlane.xlu0 %2377
        %v2379 = vsub.f32 %v2136, %v2369
        %v2380 = vsub.f32 %v2212, %v2372
        %v2381 = vsub.f32 %v2288, %v2375
        %v2382 = vsub.f32 %v2364, %v2378
        %v2383 = vmul.f32 %v2379, 1.442695
        %v2384 = vpow.pop %v2383
        %v2385 = vmul.f32 %v2380, 1.442695
        %v2386 = vpow.pop %v2385
        %v2387 = vmul.f32 %v2381, 1.442695
        %v2388 = vpow.pop %v2387
        %v2389 = vmul.f32 %v2382, 1.442695
        %v2390 = vpow.pop %v2389
        %v2391 = vsel %vm763, %v2384, 0.0
        %2392 = vadd.xlane.f32.xlu0 %v2391
        %v2393 = vpop.xlane.xlu0 %2392
        %v2394 = vsel %vm763, %v2386, 0.0
        %2395 = vadd.xlane.f32.xlu0 %v2394
        %v2396 = vpop.xlane.xlu0 %2395
        %v2397 = vsel %vm763, %v2388, 0.0
        %2398 = vadd.xlane.f32.xlu0 %v2397
        %v2399 = vpop.xlane.xlu0 %2398
        %v2400 = vsel %vm763, %v2390, 0.0
        %2401 = vadd.xlane.f32.xlu0 %v2400
        %v2402 = vpop.xlane.xlu0 %2401
        %v2403 = vrcp.pop %v2393
        %v2404 = vrcp.pop %v2396
        %v2405 = vrcp.pop %v2399
        %v2406 = vrcp.pop %v2402
        %v2407 = vmul.f32 %v2384, %v2403
        %v2408 = vmul.f32 %v2386, %v2404
        %v2409 = vmul.f32 %v2388, %v2405
        %v2410 = vmul.f32 %v2390, %v2406
        %2411 = vrot.lane.b32.xlu0 %v2053, 64
        %v2412 = vpop.permute.xlu0 %2411
        %v2415 = vsel %vm763, %v2407, 0
        %2417 = vmatprep.subr.mxu0 0.0
        %2418 = vmatpush1.msra.mxu0 %v2412
        %2419 = vmatprep.subr.mxu0 0.0
        %2420 = vmatpush1.msra.mxu0 0.0
        %2421 = vmatprep.subr.mxu0 0.0
        %2422 = vmatpush1.msra.mxu0 0.0
        %2423 = vmatprep.subr.mxu0 0.0
        %2424 = vmatpush1.msra.mxu0 0.0
        %2425 = vmatprep.subr.mxu0 0.0
        %2426 = vmatpush1.msra.mxu0 0.0
        %2427 = vmatprep.subr.mxu0 0.0
        %2428 = vmatpush1.msra.mxu0 0.0
        %2429 = vmatprep.subr.mxu0 0.0
        %2430 = vmatpush1.msra.mxu0 0.0
        %2431 = vmatprep.subr.mxu0 0.0
        %2432 = vmatpush1.msra.mxu0 0.0
        %2433 = vmatprep.subr.mxu0 0.0
        %2434 = vmatpush1.msra.mxu0 0.0
        %2435 = vmatprep.subr.mxu0 0.0
        %2436 = vmatpush1.msra.mxu0 0.0
        %2437 = vmatprep.subr.mxu0 0.0
        %2438 = vmatpush1.msra.mxu0 0.0
        %2439 = vmatprep.subr.mxu0 0.0
        %2440 = vmatpush1.msra.mxu0 0.0
        %2441 = vmatprep.subr.mxu0 0.0
        %2442 = vmatpush1.msra.mxu0 0.0
        %2443 = vmatprep.subr.mxu0 0.0
        %2444 = vmatpush1.msra.mxu0 0.0
        %2445 = vmatprep.subr.mxu0 0.0
        %2446 = vmatpush1.msra.mxu0 0.0
        %2447 = vmatprep.subr.mxu0 0.0
        %2448 = vmatpush1.msra.mxu0 0.0
        %2449 = vmatprep.subr.mxu0 0.0
        %2450 = vmatpush1.msra.mxu0 0.0
        %2451 = vmatprep.subr.mxu0 0.0
        %2452 = vmatpush1.msra.mxu0 0.0
        %2453 = vmatprep.subr.mxu0 0.0
        %2454 = vmatpush1.msra.mxu0 0.0
        %2455 = vmatprep.subr.mxu0 0.0
        %2456 = vmatpush1.msra.mxu0 0.0
        %2457 = vmatprep.subr.mxu0 0.0
        %2458 = vmatpush1.msra.mxu0 0.0
        %2459 = vmatprep.subr.mxu0 0.0
        %2460 = vmatpush1.msra.mxu0 0.0
        %2461 = vmatprep.subr.mxu0 0.0
        %2462 = vmatpush1.msra.mxu0 0.0
        %2463 = vmatprep.subr.mxu0 0.0
        %2464 = vmatpush1.msra.mxu0 0.0
        %2465 = vmatprep.subr.mxu0 0.0
        %2466 = vmatpush1.msra.mxu0 0.0
        %2467 = vmatprep.subr.mxu0 0.0
        %2468 = vmatpush1.msra.mxu0 0.0
        %2469 = vmatprep.subr.mxu0 0.0
        %2470 = vmatpush1.msra.mxu0 0.0
        %2471 = vmatprep.subr.mxu0 0.0
        %2472 = vmatpush1.msra.mxu0 0.0
        %2473 = vmatprep.subr.mxu0 0.0
        %2474 = vmatpush1.msra.mxu0 0.0
        %2475 = vmatprep.subr.mxu0 0.0
        %2476 = vmatpush1.msra.mxu0 0.0
        %2477 = vmatprep.subr.mxu0 0.0
        %2478 = vmatpush1.msra.mxu0 0.0
        %2479 = vmatprep.subr.mxu0 0.0
        %2480 = vmatpush1.msra.mxu0 0.0
        %2481 = vmatprep.mubr.f32.mxu0 0.0
        %2482 = vmatmul.mubr.f32.gmra.mrb[0].mxu0 %v2415
        %v2483 = vpop.f32.mrb[0].mxu0
        %v2484 = vadd.f32 0.0, %v2483
        %v2485 = vpop.f32.mrb[0].mxu0
        %2486 = vdwg.mxu0
        %2487 = vrot.lane.b32.xlu0 %v2058, 64
        %v2488 = vpop.permute.xlu0 %2487
        %v2491 = vsel %vm763, %v2408, 0
        %2493 = vmatprep.subr.mxu0 0.0
        %2494 = vmatpush1.msra.mxu0 %v2488
        %2495 = vmatprep.subr.mxu0 0.0
        %2496 = vmatpush1.msra.mxu0 0.0
        %2497 = vmatprep.subr.mxu0 0.0
        %2498 = vmatpush1.msra.mxu0 0.0
        %2499 = vmatprep.subr.mxu0 0.0
        %2500 = vmatpush1.msra.mxu0 0.0
        %2501 = vmatprep.subr.mxu0 0.0
        %2502 = vmatpush1.msra.mxu0 0.0
        %2503 = vmatprep.subr.mxu0 0.0
        %2504 = vmatpush1.msra.mxu0 0.0
        %2505 = vmatprep.subr.mxu0 0.0
        %2506 = vmatpush1.msra.mxu0 0.0
        %2507 = vmatprep.subr.mxu0 0.0
        %2508 = vmatpush1.msra.mxu0 0.0
        %2509 = vmatprep.subr.mxu0 0.0
        %2510 = vmatpush1.msra.mxu0 0.0
        %2511 = vmatprep.subr.mxu0 0.0
        %2512 = vmatpush1.msra.mxu0 0.0
        %2513 = vmatprep.subr.mxu0 0.0
        %2514 = vmatpush1.msra.mxu0 0.0
        %2515 = vmatprep.subr.mxu0 0.0
        %2516 = vmatpush1.msra.mxu0 0.0
        %2517 = vmatprep.subr.mxu0 0.0
        %2518 = vmatpush1.msra.mxu0 0.0
        %2519 = vmatprep.subr.mxu0 0.0
        %2520 = vmatpush1.msra.mxu0 0.0
        %2521 = vmatprep.subr.mxu0 0.0
        %2522 = vmatpush1.msra.mxu0 0.0
        %2523 = vmatprep.subr.mxu0 0.0
        %2524 = vmatpush1.msra.mxu0 0.0
        %2525 = vmatprep.subr.mxu0 0.0
        %2526 = vmatpush1.msra.mxu0 0.0
        %2527 = vmatprep.subr.mxu0 0.0
        %2528 = vmatpush1.msra.mxu0 0.0
        %2529 = vmatprep.subr.mxu0 0.0
        %2530 = vmatpush1.msra.mxu0 0.0
        %2531 = vmatprep.subr.mxu0 0.0
        %2532 = vmatpush1.msra.mxu0 0.0
        %2533 = vmatprep.subr.mxu0 0.0
        %2534 = vmatpush1.msra.mxu0 0.0
        %2535 = vmatprep.subr.mxu0 0.0
        %2536 = vmatpush1.msra.mxu0 0.0
        %2537 = vmatprep.subr.mxu0 0.0
        %2538 = vmatpush1.msra.mxu0 0.0
        %2539 = vmatprep.subr.mxu0 0.0
        %2540 = vmatpush1.msra.mxu0 0.0
        %2541 = vmatprep.subr.mxu0 0.0
        %2542 = vmatpush1.msra.mxu0 0.0
        %2543 = vmatprep.subr.mxu0 0.0
        %2544 = vmatpush1.msra.mxu0 0.0
        %2545 = vmatprep.subr.mxu0 0.0
        %2546 = vmatpush1.msra.mxu0 0.0
        %2547 = vmatprep.subr.mxu0 0.0
        %2548 = vmatpush1.msra.mxu0 0.0
        %2549 = vmatprep.subr.mxu0 0.0
        %2550 = vmatpush1.msra.mxu0 0.0
        %2551 = vmatprep.subr.mxu0 0.0
        %2552 = vmatpush1.msra.mxu0 0.0
        %2553 = vmatprep.subr.mxu0 0.0
        %2554 = vmatpush1.msra.mxu0 0.0
        %2555 = vmatprep.subr.mxu0 0.0
        %2556 = vmatpush1.msra.mxu0 0.0
        %2557 = vmatprep.mubr.f32.mxu0 0.0
        %2558 = vmatmul.mubr.f32.gmra.mrb[0].mxu0 %v2491
        %v2559 = vpop.f32.mrb[0].mxu0
        %v2560 = vadd.f32 0.0, %v2559
        %v2561 = vpop.f32.mrb[0].mxu0
        %2562 = vdwg.mxu0
        %2563 = vrot.lane.b32.xlu0 %v2060, 64
        %v2564 = vpop.permute.xlu0 %2563
        %v2567 = vsel %vm763, %v2409, 0
        %2569 = vmatprep.subr.mxu0 0.0
        %2570 = vmatpush1.msra.mxu0 %v2564
        %2571 = vmatprep.subr.mxu0 0.0
        %2572 = vmatpush1.msra.mxu0 0.0
        %2573 = vmatprep.subr.mxu0 0.0
        %2574 = vmatpush1.msra.mxu0 0.0
        %2575 = vmatprep.subr.mxu0 0.0
        %2576 = vmatpush1.msra.mxu0 0.0
        %2577 = vmatprep.subr.mxu0 0.0
        %2578 = vmatpush1.msra.mxu0 0.0
        %2579 = vmatprep.subr.mxu0 0.0
        %2580 = vmatpush1.msra.mxu0 0.0
        %2581 = vmatprep.subr.mxu0 0.0
        %2582 = vmatpush1.msra.mxu0 0.0
        %2583 = vmatprep.subr.mxu0 0.0
        %2584 = vmatpush1.msra.mxu0 0.0
        %2585 = vmatprep.subr.mxu0 0.0
        %2586 = vmatpush1.msra.mxu0 0.0
        %2587 = vmatprep.subr.mxu0 0.0
        %2588 = vmatpush1.msra.mxu0 0.0
        %2589 = vmatprep.subr.mxu0 0.0
        %2590 = vmatpush1.msra.mxu0 0.0
        %2591 = vmatprep.subr.mxu0 0.0
        %2592 = vmatpush1.msra.mxu0 0.0
        %2593 = vmatprep.subr.mxu0 0.0
        %2594 = vmatpush1.msra.mxu0 0.0
        %2595 = vmatprep.subr.mxu0 0.0
        %2596 = vmatpush1.msra.mxu0 0.0
        %2597 = vmatprep.subr.mxu0 0.0
        %2598 = vmatpush1.msra.mxu0 0.0
        %2599 = vmatprep.subr.mxu0 0.0
        %2600 = vmatpush1.msra.mxu0 0.0
        %2601 = vmatprep.subr.mxu0 0.0
        %2602 = vmatpush1.msra.mxu0 0.0
        %2603 = vmatprep.subr.mxu0 0.0
        %2604 = vmatpush1.msra.mxu0 0.0
        %2605 = vmatprep.subr.mxu0 0.0
        %2606 = vmatpush1.msra.mxu0 0.0
        %2607 = vmatprep.subr.mxu0 0.0
        %2608 = vmatpush1.msra.mxu0 0.0
        %2609 = vmatprep.subr.mxu0 0.0
        %2610 = vmatpush1.msra.mxu0 0.0
        %2611 = vmatprep.subr.mxu0 0.0
        %2612 = vmatpush1.msra.mxu0 0.0
        %2613 = vmatprep.subr.mxu0 0.0
        %2614 = vmatpush1.msra.mxu0 0.0
        %2615 = vmatprep.subr.mxu0 0.0
        %2616 = vmatpush1.msra.mxu0 0.0
        %2617 = vmatprep.subr.mxu0 0.0
        %2618 = vmatpush1.msra.mxu0 0.0
        %2619 = vmatprep.subr.mxu0 0.0
        %2620 = vmatpush1.msra.mxu0 0.0
        %2621 = vmatprep.subr.mxu0 0.0
        %2622 = vmatpush1.msra.mxu0 0.0
        %2623 = vmatprep.subr.mxu0 0.0
        %2624 = vmatpush1.msra.mxu0 0.0
        %2625 = vmatprep.subr.mxu0 0.0
        %2626 = vmatpush1.msra.mxu0 0.0
        %2627 = vmatprep.subr.mxu0 0.0
        %2628 = vmatpush1.msra.mxu0 0.0
        %2629 = vmatprep.subr.mxu0 0.0
        %2630 = vmatpush1.msra.mxu0 0.0
        %2631 = vmatprep.subr.mxu0 0.0
        %2632 = vmatpush1.msra.mxu0 0.0
        %2633 = vmatprep.mubr.f32.mxu0 0.0
        %2634 = vmatmul.mubr.f32.gmra.mrb[0].mxu0 %v2567
        %v2635 = vpop.f32.mrb[0].mxu0
        %v2636 = vadd.f32 0.0, %v2635
        %v2637 = vpop.f32.mrb[0].mxu0
        %2638 = vdwg.mxu0
        %2639 = vrot.lane.b32.xlu0 %v2062, 64
        %v2640 = vpop.permute.xlu0 %2639
        %v2643 = vsel %vm763, %v2410, 0
        %2645 = vmatprep.subr.mxu0 0.0
        %2646 = vmatpush1.msra.mxu0 %v2640
        %2647 = vmatprep.subr.mxu0 0.0
        %2648 = vmatpush1.msra.mxu0 0.0
        %2649 = vmatprep.subr.mxu0 0.0
        %2650 = vmatpush1.msra.mxu0 0.0
        %2651 = vmatprep.subr.mxu0 0.0
        %2652 = vmatpush1.msra.mxu0 0.0
        %2653 = vmatprep.subr.mxu0 0.0
        %2654 = vmatpush1.msra.mxu0 0.0
        %2655 = vmatprep.subr.mxu0 0.0
        %2656 = vmatpush1.msra.mxu0 0.0
        %2657 = vmatprep.subr.mxu0 0.0
        %2658 = vmatpush1.msra.mxu0 0.0
        %2659 = vmatprep.subr.mxu0 0.0
        %2660 = vmatpush1.msra.mxu0 0.0
        %2661 = vmatprep.subr.mxu0 0.0
        %2662 = vmatpush1.msra.mxu0 0.0
        %2663 = vmatprep.subr.mxu0 0.0
        %2664 = vmatpush1.msra.mxu0 0.0
        %2665 = vmatprep.subr.mxu0 0.0
        %2666 = vmatpush1.msra.mxu0 0.0
        %2667 = vmatprep.subr.mxu0 0.0
        %2668 = vmatpush1.msra.mxu0 0.0
        %2669 = vmatprep.subr.mxu0 0.0
        %2670 = vmatpush1.msra.mxu0 0.0
        %2671 = vmatprep.subr.mxu0 0.0
        %2672 = vmatpush1.msra.mxu0 0.0
        %2673 = vmatprep.subr.mxu0 0.0
        %2674 = vmatpush1.msra.mxu0 0.0
        %2675 = vmatprep.subr.mxu0 0.0
        %2676 = vmatpush1.msra.mxu0 0.0
        %2677 = vmatprep.subr.mxu0 0.0
        %2678 = vmatpush1.msra.mxu0 0.0
        %2679 = vmatprep.subr.mxu0 0.0
        %2680 = vmatpush1.msra.mxu0 0.0
        %2681 = vmatprep.subr.mxu0 0.0
        %2682 = vmatpush1.msra.mxu0 0.0
        %2683 = vmatprep.subr.mxu0 0.0
        %2684 = vmatpush1.msra.mxu0 0.0
        %2685 = vmatprep.subr.mxu0 0.0
        %2686 = vmatpush1.msra.mxu0 0.0
        %2687 = vmatprep.subr.mxu0 0.0
        %2688 = vmatpush1.msra.mxu0 0.0
        %2689 = vmatprep.subr.mxu0 0.0
        %2690 = vmatpush1.msra.mxu0 0.0
        %2691 = vmatprep.subr.mxu0 0.0
        %2692 = vmatpush1.msra.mxu0 0.0
        %2693 = vmatprep.subr.mxu0 0.0
        %2694 = vmatpush1.msra.mxu0 0.0
        %2695 = vmatprep.subr.mxu0 0.0
        %2696 = vmatpush1.msra.mxu0 0.0
        %2697 = vmatprep.subr.mxu0 0.0
        %2698 = vmatpush1.msra.mxu0 0.0
        %2699 = vmatprep.subr.mxu0 0.0
        %2700 = vmatpush1.msra.mxu0 0.0
        %2701 = vmatprep.subr.mxu0 0.0
        %2702 = vmatpush1.msra.mxu0 0.0
        %2703 = vmatprep.subr.mxu0 0.0
        %2704 = vmatpush1.msra.mxu0 0.0
        %2705 = vmatprep.subr.mxu0 0.0
        %2706 = vmatpush1.msra.mxu0 0.0
        %2707 = vmatprep.subr.mxu0 0.0
        %2708 = vmatpush1.msra.mxu0 0.0
        %2709 = vmatprep.mubr.f32.mxu0 0.0
        %2710 = vmatmul.mubr.f32.gmra.mrb[0].mxu0 %v2643
        %v2711 = vpop.f32.mrb[0].mxu0
        %v2712 = vadd.f32 0.0, %v2711
        %v2713 = vpop.f32.mrb[0].mxu0
        %2714 = vdwg.mxu0
        %s2715 = scalar_lea.vmem %s11, 1
        %v2716 = vld [vmem:[%s2715] sm:$0x1]
        %s2717 = scalar_lea.vmem %s10, 32
        %v2718 = vld [vmem:[%s2717] sm:$0xff]
        %v2720 = vsel %vm763, %v2484, 0
        %2722 = vmatprep.subr.mxu0 0.0
        %2723 = vmatpush1.msra.mxu0 %v2718
        %2724 = vmatprep.subr.mxu0 0.0
        %2725 = vmatpush1.msra.mxu0 0.0
        %2726 = vmatprep.subr.mxu0 0.0
        %2727 = vmatpush1.msra.mxu0 0.0
        %2728 = vmatprep.subr.mxu0 0.0
        %2729 = vmatpush1.msra.mxu0 0.0
        %2730 = vmatprep.subr.mxu0 0.0
        %2731 = vmatpush1.msra.mxu0 0.0
        %2732 = vmatprep.subr.mxu0 0.0
        %2733 = vmatpush1.msra.mxu0 0.0
        %2734 = vmatprep.subr.mxu0 0.0
        %2735 = vmatpush1.msra.mxu0 0.0
        %2736 = vmatprep.subr.mxu0 0.0
        %2737 = vmatpush1.msra.mxu0 0.0
        %2738 = vmatprep.subr.mxu0 0.0
        %2739 = vmatpush1.msra.mxu0 0.0
        %2740 = vmatprep.subr.mxu0 0.0
        %2741 = vmatpush1.msra.mxu0 0.0
        %2742 = vmatprep.subr.mxu0 0.0
        %2743 = vmatpush1.msra.mxu0 0.0
        %2744 = vmatprep.subr.mxu0 0.0
        %2745 = vmatpush1.msra.mxu0 0.0
        %2746 = vmatprep.subr.mxu0 0.0
        %2747 = vmatpush1.msra.mxu0 0.0
        %2748 = vmatprep.subr.mxu0 0.0
        %2749 = vmatpush1.msra.mxu0 0.0
        %2750 = vmatprep.subr.mxu0 0.0
        %2751 = vmatpush1.msra.mxu0 0.0
        %2752 = vmatprep.subr.mxu0 0.0
        %2753 = vmatpush1.msra.mxu0 0.0
        %2754 = vmatprep.subr.mxu0 0.0
        %2755 = vmatpush1.msra.mxu0 0.0
        %2756 = vmatprep.subr.mxu0 0.0
        %2757 = vmatpush1.msra.mxu0 0.0
        %2758 = vmatprep.subr.mxu0 0.0
        %2759 = vmatpush1.msra.mxu0 0.0
        %2760 = vmatprep.subr.mxu0 0.0
        %2761 = vmatpush1.msra.mxu0 0.0
        %2762 = vmatprep.subr.mxu0 0.0
        %2763 = vmatpush1.msra.mxu0 0.0
        %2764 = vmatprep.subr.mxu0 0.0
        %2765 = vmatpush1.msra.mxu0 0.0
        %2766 = vmatprep.subr.mxu0 0.0
        %2767 = vmatpush1.msra.mxu0 0.0
        %2768 = vmatprep.subr.mxu0 0.0
        %2769 = vmatpush1.msra.mxu0 0.0
        %2770 = vmatprep.subr.mxu0 0.0
        %2771 = vmatpush1.msra.mxu0 0.0
        %2772 = vmatprep.subr.mxu0 0.0
        %2773 = vmatpush1.msra.mxu0 0.0
        %2774 = vmatprep.subr.mxu0 0.0
        %2775 = vmatpush1.msra.mxu0 0.0
        %2776 = vmatprep.subr.mxu0 0.0
        %2777 = vmatpush1.msra.mxu0 0.0
        %2778 = vmatprep.subr.mxu0 0.0
        %2779 = vmatpush1.msra.mxu0 0.0
        %2780 = vmatprep.subr.mxu0 0.0
        %2781 = vmatpush1.msra.mxu0 0.0
        %2782 = vmatprep.subr.mxu0 0.0
        %2783 = vmatpush1.msra.mxu0 0.0
        %2784 = vmatprep.subr.mxu0 0.0
        %2785 = vmatpush1.msra.mxu0 0.0
        %2786 = vmatprep.mubr.f32.mxu0 0.0
        %2787 = vmatmul.mubr.f32.gmra.mrb[0].mxu0 %v2720
        %v2788 = vpop.f32.mrb[0].mxu0
        %v2789 = vadd.f32 0.0, %v2788
        %v2790 = vpop.f32.mrb[0].mxu0
        %2791 = vdwg.mxu0
        %v2793 = vlaneseq
        %v2794 = vshrl.u32 %v2793, 7
        %v2795 = vsub.s32 0, %v2794
        %v2796 = vrot.slane %v2716, %v2795
        %v2798 = vadd.f32 %v2796, %v2789
        %s2799 = scalar_lea.vmem %s10, 40
        %v2800 = vld [vmem:[%s2799] sm:$0xff]
        %v2802 = vsel %vm763, %v2560, 0
        %2804 = vmatprep.subr.mxu0 0.0
        %2805 = vmatpush1.msra.mxu0 %v2800
        %2806 = vmatprep.subr.mxu0 0.0
        %2807 = vmatpush1.msra.mxu0 0.0
        %2808 = vmatprep.subr.mxu0 0.0
        %2809 = vmatpush1.msra.mxu0 0.0
        %2810 = vmatprep.subr.mxu0 0.0
        %2811 = vmatpush1.msra.mxu0 0.0
        %2812 = vmatprep.subr.mxu0 0.0
        %2813 = vmatpush1.msra.mxu0 0.0
        %2814 = vmatprep.subr.mxu0 0.0
        %2815 = vmatpush1.msra.mxu0 0.0
        %2816 = vmatprep.subr.mxu0 0.0
        %2817 = vmatpush1.msra.mxu0 0.0
        %2818 = vmatprep.subr.mxu0 0.0
        %2819 = vmatpush1.msra.mxu0 0.0
        %2820 = vmatprep.subr.mxu0 0.0
        %2821 = vmatpush1.msra.mxu0 0.0
        %2822 = vmatprep.subr.mxu0 0.0
        %2823 = vmatpush1.msra.mxu0 0.0
        %2824 = vmatprep.subr.mxu0 0.0
        %2825 = vmatpush1.msra.mxu0 0.0
        %2826 = vmatprep.subr.mxu0 0.0
        %2827 = vmatpush1.msra.mxu0 0.0
        %2828 = vmatprep.subr.mxu0 0.0
        %2829 = vmatpush1.msra.mxu0 0.0
        %2830 = vmatprep.subr.mxu0 0.0
        %2831 = vmatpush1.msra.mxu0 0.0
        %2832 = vmatprep.subr.mxu0 0.0
        %2833 = vmatpush1.msra.mxu0 0.0
        %2834 = vmatprep.subr.mxu0 0.0
        %2835 = vmatpush1.msra.mxu0 0.0
        %2836 = vmatprep.subr.mxu0 0.0
        %2837 = vmatpush1.msra.mxu0 0.0
        %2838 = vmatprep.subr.mxu0 0.0
        %2839 = vmatpush1.msra.mxu0 0.0
        %2840 = vmatprep.subr.mxu0 0.0
        %2841 = vmatpush1.msra.mxu0 0.0
        %2842 = vmatprep.subr.mxu0 0.0
        %2843 = vmatpush1.msra.mxu0 0.0
        %2844 = vmatprep.subr.mxu0 0.0
        %2845 = vmatpush1.msra.mxu0 0.0
        %2846 = vmatprep.subr.mxu0 0.0
        %2847 = vmatpush1.msra.mxu0 0.0
        %2848 = vmatprep.subr.mxu0 0.0
        %2849 = vmatpush1.msra.mxu0 0.0
        %2850 = vmatprep.subr.mxu0 0.0
        %2851 = vmatpush1.msra.mxu0 0.0
        %2852 = vmatprep.subr.mxu0 0.0
        %2853 = vmatpush1.msra.mxu0 0.0
        %2854 = vmatprep.subr.mxu0 0.0
        %2855 = vmatpush1.msra.mxu0 0.0
        %2856 = vmatprep.subr.mxu0 0.0
        %2857 = vmatpush1.msra.mxu0 0.0
        %2858 = vmatprep.subr.mxu0 0.0
        %2859 = vmatpush1.msra.mxu0 0.0
        %2860 = vmatprep.subr.mxu0 0.0
        %2861 = vmatpush1.msra.mxu0 0.0
        %2862 = vmatprep.subr.mxu0 0.0
        %2863 = vmatpush1.msra.mxu0 0.0
        %2864 = vmatprep.subr.mxu0 0.0
        %2865 = vmatpush1.msra.mxu0 0.0
        %2866 = vmatprep.subr.mxu0 0.0
        %2867 = vmatpush1.msra.mxu0 0.0
        %2868 = vmatprep.mubr.f32.mxu0 0.0
        %2869 = vmatmul.mubr.f32.gmra.mrb[0].mxu0 %v2802
        %v2870 = vpop.f32.mrb[0].mxu0
        %v2871 = vadd.f32 0.0, %v2870
        %v2872 = vpop.f32.mrb[0].mxu0
        %2873 = vdwg.mxu0
        %v2874 = vadd.f32 %v2798, %v2871
        %s2875 = scalar_lea.vmem %s10, 48
        %v2876 = vld [vmem:[%s2875] sm:$0xff]
        %v2878 = vsel %vm763, %v2636, 0
        %2880 = vmatprep.subr.mxu0 0.0
        %2881 = vmatpush1.msra.mxu0 %v2876
        %2882 = vmatprep.subr.mxu0 0.0
        %2883 = vmatpush1.msra.mxu0 0.0
        %2884 = vmatprep.subr.mxu0 0.0
        %2885 = vmatpush1.msra.mxu0 0.0
        %2886 = vmatprep.subr.mxu0 0.0
        %2887 = vmatpush1.msra.mxu0 0.0
        %2888 = vmatprep.subr.mxu0 0.0
        %2889 = vmatpush1.msra.mxu0 0.0
        %2890 = vmatprep.subr.mxu0 0.0
        %2891 = vmatpush1.msra.mxu0 0.0
        %2892 = vmatprep.subr.mxu0 0.0
        %2893 = vmatpush1.msra.mxu0 0.0
        %2894 = vmatprep.subr.mxu0 0.0
        %2895 = vmatpush1.msra.mxu0 0.0
        %2896 = vmatprep.subr.mxu0 0.0
        %2897 = vmatpush1.msra.mxu0 0.0
        %2898 = vmatprep.subr.mxu0 0.0
        %2899 = vmatpush1.msra.mxu0 0.0
        %2900 = vmatprep.subr.mxu0 0.0
        %2901 = vmatpush1.msra.mxu0 0.0
        %2902 = vmatprep.subr.mxu0 0.0
        %2903 = vmatpush1.msra.mxu0 0.0
        %2904 = vmatprep.subr.mxu0 0.0
        %2905 = vmatpush1.msra.mxu0 0.0
        %2906 = vmatprep.subr.mxu0 0.0
        %2907 = vmatpush1.msra.mxu0 0.0
        %2908 = vmatprep.subr.mxu0 0.0
        %2909 = vmatpush1.msra.mxu0 0.0
        %2910 = vmatprep.subr.mxu0 0.0
        %2911 = vmatpush1.msra.mxu0 0.0
        %2912 = vmatprep.subr.mxu0 0.0
        %2913 = vmatpush1.msra.mxu0 0.0
        %2914 = vmatprep.subr.mxu0 0.0
        %2915 = vmatpush1.msra.mxu0 0.0
        %2916 = vmatprep.subr.mxu0 0.0
        %2917 = vmatpush1.msra.mxu0 0.0
        %2918 = vmatprep.subr.mxu0 0.0
        %2919 = vmatpush1.msra.mxu0 0.0
        %2920 = vmatprep.subr.mxu0 0.0
        %2921 = vmatpush1.msra.mxu0 0.0
        %2922 = vmatprep.subr.mxu0 0.0
        %2923 = vmatpush1.msra.mxu0 0.0
        %2924 = vmatprep.subr.mxu0 0.0
        %2925 = vmatpush1.msra.mxu0 0.0
        %2926 = vmatprep.subr.mxu0 0.0
        %2927 = vmatpush1.msra.mxu0 0.0
        %2928 = vmatprep.subr.mxu0 0.0
        %2929 = vmatpush1.msra.mxu0 0.0
        %2930 = vmatprep.subr.mxu0 0.0
        %2931 = vmatpush1.msra.mxu0 0.0
        %2932 = vmatprep.subr.mxu0 0.0
        %2933 = vmatpush1.msra.mxu0 0.0
        %2934 = vmatprep.subr.mxu0 0.0
        %2935 = vmatpush1.msra.mxu0 0.0
        %2936 = vmatprep.subr.mxu0 0.0
        %2937 = vmatpush1.msra.mxu0 0.0
        %2938 = vmatprep.subr.mxu0 0.0
        %2939 = vmatpush1.msra.mxu0 0.0
        %2940 = vmatprep.subr.mxu0 0.0
        %2941 = vmatpush1.msra.mxu0 0.0
        %2942 = vmatprep.subr.mxu0 0.0
        %2943 = vmatpush1.msra.mxu0 0.0
        %2944 = vmatprep.mubr.f32.mxu0 0.0
        %2945 = vmatmul.mubr.f32.gmra.mrb[0].mxu0 %v2878
        %v2946 = vpop.f32.mrb[0].mxu0
        %v2947 = vadd.f32 0.0, %v2946
        %v2948 = vpop.f32.mrb[0].mxu0
        %2949 = vdwg.mxu0
        %v2950 = vadd.f32 %v2874, %v2947
        %s2951 = scalar_lea.vmem %s10, 56
        %v2952 = vld [vmem:[%s2951] sm:$0xff]
        %v2954 = vsel %vm763, %v2712, 0
        %2956 = vmatprep.subr.mxu0 0.0
        %2957 = vmatpush1.msra.mxu0 %v2952
        %2958 = vmatprep.subr.mxu0 0.0
        %2959 = vmatpush1.msra.mxu0 0.0
        %2960 = vmatprep.subr.mxu0 0.0
        %2961 = vmatpush1.msra.mxu0 0.0
        %2962 = vmatprep.subr.mxu0 0.0
        %2963 = vmatpush1.msra.mxu0 0.0
        %2964 = vmatprep.subr.mxu0 0.0
        %2965 = vmatpush1.msra.mxu0 0.0
        %2966 = vmatprep.subr.mxu0 0.0
        %2967 = vmatpush1.msra.mxu0 0.0
        %2968 = vmatprep.subr.mxu0 0.0
        %2969 = vmatpush1.msra.mxu0 0.0
        %2970 = vmatprep.subr.mxu0 0.0
        %2971 = vmatpush1.msra.mxu0 0.0
        %2972 = vmatprep.subr.mxu0 0.0
        %2973 = vmatpush1.msra.mxu0 0.0
        %2974 = vmatprep.subr.mxu0 0.0
        %2975 = vmatpush1.msra.mxu0 0.0
        %2976 = vmatprep.subr.mxu0 0.0
        %2977 = vmatpush1.msra.mxu0 0.0
        %2978 = vmatprep.subr.mxu0 0.0
        %2979 = vmatpush1.msra.mxu0 0.0
        %2980 = vmatprep.subr.mxu0 0.0
        %2981 = vmatpush1.msra.mxu0 0.0
        %2982 = vmatprep.subr.mxu0 0.0
        %2983 = vmatpush1.msra.mxu0 0.0
        %2984 = vmatprep.subr.mxu0 0.0
        %2985 = vmatpush1.msra.mxu0 0.0
        %2986 = vmatprep.subr.mxu0 0.0
        %2987 = vmatpush1.msra.mxu0 0.0
        %2988 = vmatprep.subr.mxu0 0.0
        %2989 = vmatpush1.msra.mxu0 0.0
        %2990 = vmatprep.subr.mxu0 0.0
        %2991 = vmatpush1.msra.mxu0 0.0
        %2992 = vmatprep.subr.mxu0 0.0
        %2993 = vmatpush1.msra.mxu0 0.0
        %2994 = vmatprep.subr.mxu0 0.0
        %2995 = vmatpush1.msra.mxu0 0.0
        %2996 = vmatprep.subr.mxu0 0.0
        %2997 = vmatpush1.msra.mxu0 0.0
        %2998 = vmatprep.subr.mxu0 0.0
        %2999 = vmatpush1.msra.mxu0 0.0
        %3000 = vmatprep.subr.mxu0 0.0
        %3001 = vmatpush1.msra.mxu0 0.0
        %3002 = vmatprep.subr.mxu0 0.0
        %3003 = vmatpush1.msra.mxu0 0.0
        %3004 = vmatprep.subr.mxu0 0.0
        %3005 = vmatpush1.msra.mxu0 0.0
        %3006 = vmatprep.subr.mxu0 0.0
        %3007 = vmatpush1.msra.mxu0 0.0
        %3008 = vmatprep.subr.mxu0 0.0
        %3009 = vmatpush1.msra.mxu0 0.0
        %3010 = vmatprep.subr.mxu0 0.0
        %3011 = vmatpush1.msra.mxu0 0.0
        %3012 = vmatprep.subr.mxu0 0.0
        %3013 = vmatpush1.msra.mxu0 0.0
        %3014 = vmatprep.subr.mxu0 0.0
        %3015 = vmatpush1.msra.mxu0 0.0
        %3016 = vmatprep.subr.mxu0 0.0
        %3017 = vmatpush1.msra.mxu0 0.0
        %3018 = vmatprep.subr.mxu0 0.0
        %3019 = vmatpush1.msra.mxu0 0.0
        %3020 = vmatprep.mubr.f32.mxu0 0.0
        %3021 = vmatmul.mubr.f32.gmra.mrb[0].mxu0 %v2954
        %v3022 = vpop.f32.mrb[0].mxu0
        %v3023 = vadd.f32 0.0, %v3022
        %v3024 = vpop.f32.mrb[0].mxu0
        %3025 = vdwg.mxu0
        %v3026 = vadd.f32 %v2950, %v3023
        %v3027 = vadd.f32 %v1969, %v3026
        %s3028 = scalar_lea.vmem %s12, 1
        %v3029 = vld [vmem:[%s3028] sm:$0x1]
        %s3030 = scalar_lea.vmem %s13, 1
        %v3031 = vld [vmem:[%s3030] sm:$0x1]
        %v3032 = vsel %vm634, %v3027, 0.0
        %3033 = vadd.xlane.f32.xlu0 %v3032
        %v3034 = vpop.xlane.xlu0 %3033
        %v3035 = vmul.f32 %v3034, %v638
        %v3036 = vsub.f32 %v3027, %v3035
        %v3037 = vmul.f32 %v3036, %v3036
        %v3038 = vsel %vm634, %v3037, 0.0
        %3039 = vadd.xlane.f32.xlu0 %v3038
        %v3040 = vpop.xlane.xlu0 %3039
        %v3041 = vmul.f32 %v3040, %v638
        %v3042 = vadd.f32 %v3041, 1e-12
        %v3043 = vrsqrt.pop %v3042
        %v3044 = vmul.f32 %v3036, %v3043
        %v3046 = vlaneseq
        %v3047 = vshrl.u32 %v3046, 7
        %v3048 = vsub.s32 0, %v3047
        %v3049 = vrot.slane %v3029, %v3048
        %v3051 = vmul.f32 %v3044, %v3049
        %v3053 = vlaneseq
        %v3054 = vshrl.u32 %v3053, 7
        %v3055 = vsub.s32 0, %v3054
        %v3056 = vrot.slane %v3031, %v3055
        %v3058 = vadd.f32 %v3051, %v3056
        %s3059 = scalar_lea.vmem %s14, 32
        %v3060 = vld [vmem:[%s3059] sm:$0xff]
        %v3061 = vld [vmem:[%s3059 + $0x8] sm:$0xff]
        %v3062 = vld [vmem:[%s3059 + $0x10] sm:$0xff]
        %v3063 = vld [vmem:[%s3059 + $0x18] sm:$0xff]
        %s3064 = scalar_lea.vmem %s15, 1
        %v3065 = vld [vmem:[%s3064] sm:$0x1]
        %v3067 = vlaneseq
        %v3068 = vshrl.u32 %v3067, 7
        %v3069 = vsub.s32 0, %v3068
        %v3070 = vrot.slane %v3065, %v3069
        %v3073 = vsel %vm634, %v3058, 0
        %3075 = vmatprep.subr.mxu0 0.0
        %3076 = vmatpush1.msra.mxu0 %v3060
        %3077 = vmatprep.subr.mxu0 0.0
        %3078 = vmatpush1.msra.mxu0 %v3061
        %3079 = vmatprep.subr.mxu0 0.0
        %3080 = vmatpush1.msra.mxu0 %v3062
        %3081 = vmatprep.subr.mxu0 0.0
        %3082 = vmatpush1.msra.mxu0 %v3063
        %3083 = vmatprep.subr.mxu0 0.0
        %3084 = vmatpush1.msra.mxu0 0.0
        %3085 = vmatprep.subr.mxu0 0.0
        %3086 = vmatpush1.msra.mxu0 0.0
        %3087 = vmatprep.subr.mxu0 0.0
        %3088 = vmatpush1.msra.mxu0 0.0
        %3089 = vmatprep.subr.mxu0 0.0
        %3090 = vmatpush1.msra.mxu0 0.0
        %3091 = vmatprep.subr.mxu0 0.0
        %3092 = vmatpush1.msra.mxu0 0.0
        %3093 = vmatprep.subr.mxu0 0.0
        %3094 = vmatpush1.msra.mxu0 0.0
        %3095 = vmatprep.subr.mxu0 0.0
        %3096 = vmatpush1.msra.mxu0 0.0
        %3097 = vmatprep.subr.mxu0 0.0
        %3098 = vmatpush1.msra.mxu0 0.0
        %3099 = vmatprep.subr.mxu0 0.0
        %3100 = vmatpush1.msra.mxu0 0.0
        %3101 = vmatprep.subr.mxu0 0.0
        %3102 = vmatpush1.msra.mxu0 0.0
        %3103 = vmatprep.subr.mxu0 0.0
        %3104 = vmatpush1.msra.mxu0 0.0
        %3105 = vmatprep.subr.mxu0 0.0
        %3106 = vmatpush1.msra.mxu0 0.0
        %3107 = vmatprep.subr.mxu0 0.0
        %3108 = vmatpush1.msra.mxu0 0.0
        %3109 = vmatprep.subr.mxu0 0.0
        %3110 = vmatpush1.msra.mxu0 0.0
        %3111 = vmatprep.subr.mxu0 0.0
        %3112 = vmatpush1.msra.mxu0 0.0
        %3113 = vmatprep.subr.mxu0 0.0
        %3114 = vmatpush1.msra.mxu0 0.0
        %3115 = vmatprep.subr.mxu0 0.0
        %3116 = vmatpush1.msra.mxu0 0.0
        %3117 = vmatprep.subr.mxu0 0.0
        %3118 = vmatpush1.msra.mxu0 0.0
        %3119 = vmatprep.subr.mxu0 0.0
        %3120 = vmatpush1.msra.mxu0 0.0
        %3121 = vmatprep.subr.mxu0 0.0
        %3122 = vmatpush1.msra.mxu0 0.0
        %3123 = vmatprep.subr.mxu0 0.0
        %3124 = vmatpush1.msra.mxu0 0.0
        %3125 = vmatprep.subr.mxu0 0.0
        %3126 = vmatpush1.msra.mxu0 0.0
        %3127 = vmatprep.subr.mxu0 0.0
        %3128 = vmatpush1.msra.mxu0 0.0
        %3129 = vmatprep.subr.mxu0 0.0
        %3130 = vmatpush1.msra.mxu0 0.0
        %3131 = vmatprep.subr.mxu0 0.0
        %3132 = vmatpush1.msra.mxu0 0.0
        %3133 = vmatprep.subr.mxu0 0.0
        %3134 = vmatpush1.msra.mxu0 0.0
        %3135 = vmatprep.subr.mxu0 0.0
        %3136 = vmatpush1.msra.mxu0 0.0
        %3137 = vmatprep.subr.mxu0 0.0
        %3138 = vmatpush1.msra.mxu0 0.0
        %3139 = vmatprep.mubr.f32.mxu0 0.0
        %3140 = vmatmul.mubr.f32.gmra.mrb[0].mxu0 %v3073
        %v3141 = vpop.f32.mrb[0].mxu0
        %v3142 = vadd.f32 %v3070, %v3141
        %v3143 = vpop.f32.mrb[0].mxu0
        %3144 = vdwg.mxu0
        %v3145 = vmul.f32 %v3142, %v3142
        %v3146 = vmul.f32 %v3142, %v3145
        %v3147 = vmul.f32 %v3146, 0.044715
        %v3148 = vadd.f32 %v3142, %v3147
        %v3149 = vmul.f32 %v3148, 0.7978846
        %v3150 = vtanh.pop %v3149
        %v3151 = vadd.f32 %v3150, 1.0
        %v3152 = vmul.f32 %v3151, 0.5
        %v3153 = vmul.f32 %v3142, %v3152
        %s3154 = scalar_lea.vmem %s16, 128
        %v3155 = vld [vmem:[%s3154] sm:$0xff]
        %v3156 = vld [vmem:[%s3154 + $0x8] sm:$0xff]
        %v3157 = vld [vmem:[%s3154 + $0x10] sm:$0xff]
        %v3158 = vld [vmem:[%s3154 + $0x18] sm:$0xff]
        %v3159 = vld [vmem:[%s3154 + $0x20] sm:$0xff]
        %v3160 = vld [vmem:[%s3154 + $0x28] sm:$0xff]
        %v3161 = vld [vmem:[%s3154 + $0x30] sm:$0xff]
        %v3162 = vld [vmem:[%s3154 + $0x38] sm:$0xff]
        %v3163 = vld [vmem:[%s3154 + $0x40] sm:$0xff]
        %v3164 = vld [vmem:[%s3154 + $0x48] sm:$0xff]
        %v3165 = vld [vmem:[%s3154 + $0x50] sm:$0xff]
        %v3166 = vld [vmem:[%s3154 + $0x58] sm:$0xff]
        %v3167 = vld [vmem:[%s3154 + $0x60] sm:$0xff]
        %v3168 = vld [vmem:[%s3154 + $0x68] sm:$0xff]
        %v3169 = vld [vmem:[%s3154 + $0x70] sm:$0xff]
        %v3170 = vld [vmem:[%s3154 + $0x78] sm:$0xff]
        %s3171 = scalar_lea.vmem %s17, 1
        %v3172 = vld [vmem:[%s3171] sm:$0x1]
        %v3174 = vlaneseq
        %v3175 = vshrl.u32 %v3174, 7
        %v3176 = vsub.s32 0, %v3175
        %v3177 = vrot.slane %v3172, %v3176
        %3179 = vmatprep.subr.mxu0 0.0
        %3180 = vmatpush1.msra.mxu0 %v3155
        %3181 = vmatprep.subr.mxu0 0.0
        %3182 = vmatpush1.msra.mxu0 %v3156
        %3183 = vmatprep.subr.mxu0 0.0
        %3184 = vmatpush1.msra.mxu0 %v3157
        %3185 = vmatprep.subr.mxu0 0.0
        %3186 = vmatpush1.msra.mxu0 %v3158
        %3187 = vmatprep.subr.mxu0 0.0
        %3188 = vmatpush1.msra.mxu0 %v3159
        %3189 = vmatprep.subr.mxu0 0.0
        %3190 = vmatpush1.msra.mxu0 %v3160
        %3191 = vmatprep.subr.mxu0 0.0
        %3192 = vmatpush1.msra.mxu0 %v3161
        %3193 = vmatprep.subr.mxu0 0.0
        %3194 = vmatpush1.msra.mxu0 %v3162
        %3195 = vmatprep.subr.mxu0 0.0
        %3196 = vmatpush1.msra.mxu0 %v3163
        %3197 = vmatprep.subr.mxu0 0.0
        %3198 = vmatpush1.msra.mxu0 %v3164
        %3199 = vmatprep.subr.mxu0 0.0
        %3200 = vmatpush1.msra.mxu0 %v3165
        %3201 = vmatprep.subr.mxu0 0.0
        %3202 = vmatpush1.msra.mxu0 %v3166
        %3203 = vmatprep.subr.mxu0 0.0
        %3204 = vmatpush1.msra.mxu0 %v3167
        %3205 = vmatprep.subr.mxu0 0.0
        %3206 = vmatpush1.msra.mxu0 %v3168
        %3207 = vmatprep.subr.mxu0 0.0
        %3208 = vmatpush1.msra.mxu0 %v3169
        %3209 = vmatprep.subr.mxu0 0.0
        %3210 = vmatpush1.msra.mxu0 %v3170
        %3211 = vmatprep.subr.mxu0 0.0
        %3212 = vmatpush1.msra.mxu0 0.0
        %3213 = vmatprep.subr.mxu0 0.0
        %3214 = vmatpush1.msra.mxu0 0.0
        %3215 = vmatprep.subr.mxu0 0.0
        %3216 = vmatpush1.msra.mxu0 0.0
        %3217 = vmatprep.subr.mxu0 0.0
        %3218 = vmatpush1.msra.mxu0 0.0
        %3219 = vmatprep.subr.mxu0 0.0
        %3220 = vmatpush1.msra.mxu0 0.0
        %3221 = vmatprep.subr.mxu0 0.0
        %3222 = vmatpush1.msra.mxu0 0.0
        %3223 = vmatprep.subr.mxu0 0.0
        %3224 = vmatpush1.msra.mxu0 0.0
        %3225 = vmatprep.subr.mxu0 0.0
        %3226 = vmatpush1.msra.mxu0 0.0
        %3227 = vmatprep.subr.mxu0 0.0
        %3228 = vmatpush1.msra.mxu0 0.0
        %3229 = vmatprep.subr.mxu0 0.0
        %3230 = vmatpush1.msra.mxu0 0.0
        %3231 = vmatprep.subr.mxu0 0.0
        %3232 = vmatpush1.msra.mxu0 0.0
        %3233 = vmatprep.subr.mxu0 0.0
        %3234 = vmatpush1.msra.mxu0 0.0
        %3235 = vmatprep.subr.mxu0 0.0
        %3236 = vmatpush1.msra.mxu0 0.0
        %3237 = vmatprep.subr.mxu0 0.0
        %3238 = vmatpush1.msra.mxu0 0.0
        %3239 = vmatprep.subr.mxu0 0.0
        %3240 = vmatpush1.msra.mxu0 0.0
        %3241 = vmatprep.subr.mxu0 0.0
        %3242 = vmatpush1.msra.mxu0 0.0
        %3243 = vmatprep.mubr.f32.mxu0 0.0
        %3244 = vmatmul.mubr.f32.gmra.mrb[0].mxu0 %v3153
        %v3245 = vpop.f32.mrb[0].mxu0
        %v3246 = vadd.f32 %v3177, %v3245
        %v3247 = vpop.f32.mrb[0].mxu0
        %3248 = vdwg.mxu0
        %v3249 = vadd.f32 %v3058, %v3246
        %s3250 = scalar_lea.vmem %s18, 1
        %v3251 = vld [vmem:[%s3250] sm:$0x1]
        %s3252 = scalar_lea.vmem %s19, 1
        %v3253 = vld [vmem:[%s3252] sm:$0x1]
        %v3254 = vsel %vm634, %v3249, 0.0
        %3255 = vadd.xlane.f32.xlu0 %v3254
        %v3256 = vpop.xlane.xlu0 %3255
        %v3257 = vmul.f32 %v3256, %v638
        %v3258 = vsub.f32 %v3249, %v3257
        %v3259 = vmul.f32 %v3258, %v3258
        %v3260 = vsel %vm634, %v3259, 0.0
        %3261 = vadd.xlane.f32.xlu0 %v3260
        %v3262 = vpop.xlane.xlu0 %3261
        %v3263 = vmul.f32 %v3262, %v638
        %v3264 = vadd.f32 %v3263, 1e-12
        %v3265 = vrsqrt.pop %v3264
        %v3266 = vmul.f32 %v3258, %v3265
        %v3268 = vlaneseq
        %v3269 = vshrl.u32 %v3268, 7
        %v3270 = vsub.s32 0, %v3269
        %v3271 = vrot.slane %v3251, %v3270
        %v3273 = vmul.f32 %v3266, %v3271
        %v3275 = vlaneseq
        %v3276 = vshrl.u32 %v3275, 7
        %v3277 = vsub.s32 0, %v3276
        %v3278 = vrot.slane %v3253, %v3277
        %v3280 = vadd.f32 %v3273, %v3278
        %3281 = vst.msk [vmem:[%s576] sm:$0xff] %vm634, %v3280
        %s3282 = sand.u32 %s435, 1
        %s3283 = scalar_lea.sflag [#allocation7], %s3282
        %s3284 = sand.u32 %s435, 1
        %s3285 = smul.addr %s3284, 8
        %s3286 = scalar_lea.vmem [#allocation6], %s3285
        // Predicated region
        $region93: #{tpu_custom_call.1} parent=91 // pred_check
          %p3287 = pneg %p445
        $region94: #{tpu_custom_call.1} parent=91 // pred_check_branch
          %3289 = sbr.rel (%p3287) target = $region96
        $region95: #{tpu_custom_call.1} parent=91 // pred_region
          %s3291 = ssub.s32 128, 128
          %3292 = vsyncadd %s3283, %s3291
          %s3293 = smul.addr %s44, 128
          %s3294 = scalar_lea.hbm %s20, %s3293
          %s3296 = sshll.u32 %s3286, 4
          %s3297 = int_to_ptr.vmem [resolvable:$true] %s3296
          %3299 = dma.vmem_to_hbm [thread:$0]  %s3297, 128, %s3294, %s3283
        $region96: #{tpu_custom_call.1} parent=91 // pred_fallthru
          _
      $region92: #{tpu_custom_call.1} parent=5 // pred_fallthru
        _
      %p3300 = scmp.le.s32.totalorder 2, %s39
      // Predicated region
      $region97: #{tpu_custom_call.1} parent=5 // pred_check
        %p3301 = pneg %p3300
      $region98: #{tpu_custom_call.1} parent=5 // pred_check_branch
        %3303 = sbr.rel (%p3301) target = $region100
      $region99: #{tpu_custom_call.1} parent=5 // pred_region
        %s3304 = ssub.s32 %s39, 2
        // Predicated region
        $region101: #{tpu_custom_call.1} parent=99 // pred_check
          %p3305 = pneg %p451
        $region102: #{tpu_custom_call.1} parent=99 // pred_check_branch
          %3307 = sbr.rel (%p3305) target = $region104
        $region103: #{tpu_custom_call.1} parent=99 // pred_region
          %s3308 = sand.u32 %s436, 1
          %s3309 = scalar_lea.sflag [#allocation7], %s3308
          %s3310 = sand.u32 %s436, 1
          %s3311 = smul.addr %s3310, 8
          %s3312 = scalar_lea.vmem [#allocation6], %s3311
          %3313 = dma.done %s3309, 128
        $region104: #{tpu_custom_call.1} parent=99 // pred_fallthru
          _
      $region100: #{tpu_custom_call.1} parent=5 // pred_fallthru
        _
    $region6: #{tpu_custom_call.1} parent=1 // loop_footer
      %s43 = sadd.s32 1, %s39
    $region7: #{tpu_custom_call.1} parent=1 // loop_footer_branch
      %38 = sbr.rel target = $region3
    $region8: #{tpu_custom_call.1} parent=1 // loop_exit
      _
    %3314 = vsyncpa [#allocation7], 1
    %s3315 = scalar_lea.sflag [#allocation7], 1
    %3316 = vsyncpa %s3315, 1

</llo_original>
